<compile_context>
chip_gen: v7x
topology: tpu7x:2x2x1
jax: 0.10.0
libtpu: 0.0.40
codegen_flags: <defaults>
</compile_context>

<pallas_src>
import math

import jax
import jax.numpy as jnp
from jax import lax
from jax.experimental import pallas as pl
from jax.experimental.pallas import tpu as pltpu

# ----------------------------- hparams ------------------------------------
B = 2              # batch
NUM_FRAMES = 8     # num_frames
NUM_ANIMALS = 1    # forward() unsqueezes a singleton animal axis
D_IN = 16          # input_size
N_EMBD = 32        # n_embd
N_HEAD = 4         # n_head
N_LAYERS = 2       # n_hid_layers
N_HID = 24         # n_hid_units
LN_EPS = 1e-5
BN_EPS = 1e-5
SEQ = NUM_FRAMES * NUM_ANIMALS

# ----- packed-parameter static offsets -----
# per-layer weight slab wA: (L, N_EMBD, 8*N_EMBD) = [wq|wk|wv | wo | w1]
WA_QKV = 0
WA_O = 3 * N_EMBD
WA_1 = 4 * N_EMBD
WA_TOT = 8 * N_EMBD
# per-layer vector slab pvec: (L, 13*N_EMBD)
P_BQKV = 0
P_BO = 3 * N_EMBD
P_B1 = 4 * N_EMBD
P_B2 = 8 * N_EMBD
P_LN1G = 9 * N_EMBD
P_LN1B = 10 * N_EMBD
P_LN2G = 11 * N_EMBD
P_LN2B = 12 * N_EMBD
P_TOT = 13 * N_EMBD
# global vector slab gvec: (1, 2*D_IN + 3*N_EMBD + N_HID)
G_BN_S = 0
G_BN_B = D_IN
G_BE = 2 * D_IN
G_LNF_G = G_BE + N_EMBD
G_LNF_B = G_LNF_G + N_EMBD
G_BP = G_LNF_B + N_EMBD
G_TOT = G_BP + N_HID


# --------------------------- in-kernel helpers ------------------------------
def _layernorm(x, g, b):
    mu = jnp.mean(x, axis=-1, keepdims=True)
    d = x - mu
    var = jnp.mean(d * d, axis=-1, keepdims=True)
    return d * lax.rsqrt(var + LN_EPS) * g + b


def _gelu_tanh(x):
    # tanh-approximate GELU (transcendental runs on the EUP slot)
    c = 0.7978845608028654  # sqrt(2/pi)
    return 0.5 * x * (1.0 + jnp.tanh(c * (x + 0.044715 * x * x * x)))


# ------------------------------- kernel -------------------------------------
def animal_st_kernel(x_ref, amask_ref, we_ref, wp_ref, wA_ref, w2_ref,
                     pvec_ref, gvec_ref, out_ref):
    hd = N_EMBD // N_HEAD
    scale = 1.0 / math.sqrt(hd)

    x = x_ref[...]                                  # (N, D_in), N = B*S
    amask = amask_ref[...]                          # (N, N) additive mask

    # BatchNorm2d (eval) folded to per-feature affine, then token embedding.
    h = x * gvec_ref[:, G_BN_S:G_BN_S + D_IN] + gvec_ref[:, G_BN_B:G_BN_B + D_IN]
    h = jnp.dot(h, we_ref[...], preferred_element_type=jnp.float32) \
        + gvec_ref[:, G_BE:G_BE + N_EMBD]

    for l in range(N_LAYERS):
        # ---- causal self-attention (pre-LN) ----
        y = _layernorm(h,
                       pvec_ref[l:l + 1, P_LN1G:P_LN1G + N_EMBD],
                       pvec_ref[l:l + 1, P_LN1B:P_LN1B + N_EMBD])
        # fused Q|K|V projection: one (N_EMBD, 3*N_EMBD) matmul
        qkv = jnp.dot(y, wA_ref[l, :, WA_QKV:WA_QKV + 3 * N_EMBD],
                      preferred_element_type=jnp.float32) \
            + pvec_ref[l:l + 1, P_BQKV:P_BQKV + 3 * N_EMBD]

        heads = []
        for i in range(N_HEAD):
            lo = i * hd
            qi = qkv[:, lo:lo + hd]
            ki = qkv[:, N_EMBD + lo:N_EMBD + lo + hd]
            vi = qkv[:, 2 * N_EMBD + lo:2 * N_EMBD + lo + hd]
            # q @ k^T without materializing a transpose
            att = lax.dot_general(qi, ki, (((1,), (1,)), ((), ())),
                                  preferred_element_type=jnp.float32) * scale
            att = att + amask
            att = att - jnp.max(att, axis=-1, keepdims=True)
            p = jnp.exp(att)
            p = p * pl.reciprocal(jnp.sum(p, axis=-1, keepdims=True), approx=True)
            heads.append(jnp.dot(p, vi, preferred_element_type=jnp.float32))
        ycat = jnp.concatenate(heads, axis=-1)      # (N, N_EMBD)
        # single output projection over the concatenated heads
        h = h + jnp.dot(ycat, wA_ref[l, :, WA_O:WA_O + N_EMBD],
                        preferred_element_type=jnp.float32) \
              + pvec_ref[l:l + 1, P_BO:P_BO + N_EMBD]

        # ---- MLP ----
        y = _layernorm(h,
                       pvec_ref[l:l + 1, P_LN2G:P_LN2G + N_EMBD],
                       pvec_ref[l:l + 1, P_LN2B:P_LN2B + N_EMBD])
        z = jnp.dot(y, wA_ref[l, :, WA_1:WA_1 + 4 * N_EMBD],
                    preferred_element_type=jnp.float32) \
            + pvec_ref[l:l + 1, P_B1:P_B1 + 4 * N_EMBD]
        z = _gelu_tanh(z)
        h = h + jnp.dot(z, w2_ref[l], preferred_element_type=jnp.float32) \
              + pvec_ref[l:l + 1, P_B2:P_B2 + N_EMBD]

    y = _layernorm(h,
                   gvec_ref[:, G_LNF_G:G_LNF_G + N_EMBD],
                   gvec_ref[:, G_LNF_B:G_LNF_B + N_EMBD])
    # TODO(synk): output last dim is 24 (<128 lanes) -> masked partial store;
    # padding to 128 is possible but the payoff is negligible at this size.
    out_ref[...] = jnp.dot(y, wp_ref[...], preferred_element_type=jnp.float32) \
        + gvec_ref[:, G_BP:G_BP + N_HID]


# ------------------------------- wrapper -------------------------------------
def pack_params(p):
    """Pack the 24 parameter arrays into 6 slabs (done once, outside the call)."""
    wA = jnp.concatenate(
        [jnp.concatenate([p["wq"], p["wk"], p["wv"]], axis=-1),   # (L, 32, 96)
         p["wo"],                                                 # (L, 32, 32)
         p["w1"]],                                                # (L, 32, 128)
        axis=-1)                                                  # (L, 32, 256)
    w2 = p["w2"]                                                  # (L, 128, 32)
    pvec = jnp.concatenate(
        [p["bq"], p["bk"], p["bv"], p["bo"], p["b1"], p["b2"],
         p["ln1_g"], p["ln1_b"], p["ln2_g"], p["ln2_b"]], axis=-1)  # (L, 416)
    gvec = jnp.concatenate(
        [p["bn_scale"][0], p["bn_shift"][0], p["be"][0],
         p["lnf_g"][0], p["lnf_b"][0], p["bp"][0]])[None, :]        # (1, 152)
    return wA, w2, pvec, gvec, p["we"], p["wp"]


def animal_st_forward(x, packed):
    """x: (B, T, D_in) float32 -> (B, T*num_animals, n_hid_units)."""
    wA, w2, pvec, gvec, we, wp = packed
    Bx, T, D = x.shape
    S = T * NUM_ANIMALS
    N = Bx * S

    # key-padding mask from NaNs (semantics of ~isnan(tokens).sum(-1).bool()).
    key_valid = (~jnp.any(jnp.isnan(x), axis=-1)).astype(jnp.float32).reshape(N)

    # Precomputed combined additive mask over the flattened (B*S) token axis:
    # block-diagonal over batch  *  block-causal over frames  *  key padding.
    pos = jnp.arange(N, dtype=jnp.int32)
    batch_id = pos // S
    frame_id = (pos % S) // NUM_ANIMALS
    allowed = (batch_id[:, None] == batch_id[None, :]) & \
              (frame_id[:, None] >= frame_id[None, :]) & \
              (key_valid[None, :] > 0.5)
    amask = jnp.where(allowed, 0.0, -1e30).astype(jnp.float32)      # (N, N)

    x2 = x.reshape(N, D)

    def vmem_spec():
        return pl.BlockSpec(memory_space=pltpu.MemorySpace.VMEM)

    out = pl.pallas_call(
        animal_st_kernel,
        out_shape=jax.ShapeDtypeStruct((N, N_HID), jnp.float32),
        in_specs=[vmem_spec() for _ in range(8)],
        out_specs=vmem_spec(),
    )(x2, amask, we, wp, wA, w2, pvec, gvec)
    return out.reshape(Bx, S, N_HID)


# --------------------------- parameter init ----------------------------------
def init_params(key):
    keys = jax.random.split(key, 8 * N_LAYERS + 4)
    kit = iter(keys)

    def lin(fan_in, fan_out):
        w = jax.random.normal(next(kit), (fan_in, fan_out), jnp.float32) * 0.02
        b = jnp.zeros((fan_out,), jnp.float32)
        return w, b

    p = {}
    # BatchNorm2d(input_size) in eval mode: gamma=1, beta=0, mean=0, var=1
    gamma = jnp.ones((D_IN,), jnp.float32)
    beta = jnp.zeros((D_IN,), jnp.float32)
    rmean = jnp.zeros((D_IN,), jnp.float32)
    rvar = jnp.ones((D_IN,), jnp.float32)
    scale = gamma / jnp.sqrt(rvar + BN_EPS)
    p["bn_scale"] = scale.reshape(1, D_IN)
    p["bn_shift"] = (beta - rmean * scale).reshape(1, D_IN)

    we, be = lin(D_IN, N_EMBD)
    p["we"], p["be"] = we, be.reshape(1, N_EMBD)

    ln1_g, ln1_b, ln2_g, ln2_b = [], [], [], []
    wq, bq, wk, bk, wv, bv, wo, bo = [], [], [], [], [], [], [], []
    w1, b1, w2, b2 = [], [], [], []
    for _ in range(N_LAYERS):
        ln1_g.append(jnp.ones((N_EMBD,), jnp.float32))
        ln1_b.append(jnp.zeros((N_EMBD,), jnp.float32))
        ln2_g.append(jnp.ones((N_EMBD,), jnp.float32))
        ln2_b.append(jnp.zeros((N_EMBD,), jnp.float32))
        for wl, bl in ((wq, bq), (wk, bk), (wv, bv), (wo, bo)):
            w, b = lin(N_EMBD, N_EMBD)
            wl.append(w)
            bl.append(b)
        w, b = lin(N_EMBD, 4 * N_EMBD)
        w1.append(w); b1.append(b)
        w, b = lin(4 * N_EMBD, N_EMBD)
        w2.append(w); b2.append(b)

    for name, lst in (("ln1_g", ln1_g), ("ln1_b", ln1_b), ("ln2_g", ln2_g),
                      ("ln2_b", ln2_b), ("wq", wq), ("bq", bq), ("wk", wk),
                      ("bk", bk), ("wv", wv), ("bv", bv), ("wo", wo),
                      ("bo", bo), ("w1", w1), ("b1", b1), ("w2", w2),
                      ("b2", b2)):
        p[name] = jnp.stack(lst, axis=0)

    p["lnf_g"] = jnp.ones((1, N_EMBD), jnp.float32)
    p["lnf_b"] = jnp.zeros((1, N_EMBD), jnp.float32)
    wp, bp = lin(N_EMBD, N_HID)
    p["wp"], p["bp"] = wp, bp.reshape(1, N_HID)
    return p


# --------------------------- pure-JAX reference -------------------------------
def reference_forward(x, p):
    Bx, T, D = x.shape
    S = T * NUM_ANIMALS
    hd = N_EMBD // N_HEAD
    mask = (~jnp.any(jnp.isnan(x), axis=-1)).astype(jnp.float32)        # (B,S)
    h = x * p["bn_scale"][0] + p["bn_shift"][0]
    h = h @ p["we"] + p["be"][0]
    causal = jnp.tril(jnp.ones((S, S), jnp.float32))
    combined = causal[None] * mask[:, None, :]                          # (B,S,S)
    for l in range(N_LAYERS):
        y = _layernorm(h, p["ln1_g"][l], p["ln1_b"][l])
        q = (y @ p["wq"][l] + p["bq"][l]).reshape(Bx, S, N_HEAD, hd).transpose(0, 2, 1, 3)
        k = (y @ p["wk"][l] + p["bk"][l]).reshape(Bx, S, N_HEAD, hd).transpose(0, 2, 1, 3)
        v = (y @ p["wv"][l] + p["bv"][l]).reshape(Bx, S, N_HEAD, hd).transpose(0, 2, 1, 3)
        att = (q @ k.transpose(0, 1, 3, 2)) / math.sqrt(hd)
        att = jnp.where(combined[:, None] != 0.0, att, -jnp.inf)
        att = jax.nn.softmax(att, axis=-1)
        yat = (att @ v).transpose(0, 2, 1, 3).reshape(Bx, S, N_EMBD)
        h = h + yat @ p["wo"][l] + p["bo"][l]
        y = _layernorm(h, p["ln2_g"][l], p["ln2_b"][l])
        z = jax.nn.gelu(y @ p["w1"][l] + p["b1"][l], approximate=False)
        h = h + z @ p["w2"][l] + p["b2"][l]
    y = _layernorm(h, p["lnf_g"][0], p["lnf_b"][0])
    return y @ p["wp"] + p["bp"][0]


# --------------------------------- main ---------------------------------------
if __name__ == "__main__":
    key = jax.random.PRNGKey(0)
    pkey, xkey = jax.random.split(key)
    params = init_params(pkey)
    packed = pack_params(params)                 # pack once, outside the call
    # x corresponds to the module's forward() input (b, num_frames, input_size)
    x = jax.random.normal(xkey, (B, NUM_FRAMES, D_IN), jnp.float32)

    out = animal_st_forward(x, packed)
    out = jax.block_until_ready(out)
    assert out.shape == (B, NUM_FRAMES * NUM_ANIMALS, N_HID)

    ref = reference_forward(x, params)
    # tolerance accounts for tanh-GELU and approx-reciprocal softmax in-kernel
    if not bool(jnp.allclose(out, ref, atol=5e-4, rtol=1e-3)):
        raise AssertionError(
            f"mismatch vs reference, max abs diff = {float(jnp.max(jnp.abs(out - ref)))}")
    print("KERNEL_OK")
</pallas_src>

<mosaic_0001>
module attributes {stable_mosaic.version = 11 : i64} {
  func.func @animal_st_kernel(%arg0: memref<16x16xf32, #tpu.memory_space<vmem>>, %arg1: memref<16x16xf32, #tpu.memory_space<vmem>>, %arg2: memref<16x32xf32, #tpu.memory_space<vmem>>, %arg3: memref<32x24xf32, #tpu.memory_space<vmem>>, %arg4: memref<2x32x256xf32, #tpu.memory_space<vmem>>, %arg5: memref<2x128x32xf32, #tpu.memory_space<vmem>>, %arg6: memref<2x416xf32, #tpu.memory_space<vmem>>, %arg7: memref<1x152xf32, #tpu.memory_space<vmem>>, %arg8: memref<16x24xf32, #tpu.memory_space<vmem>>) attributes {dimension_semantics = [], scalar_prefetch = 0 : i64, scratch_operands = 0 : i64, tpu.core_type = #tpu.core_type<tc>} {
    %c0 = arith.constant 0 : index
    %c0_0 = arith.constant 0 : index
    %0 = vector.load %arg0[%c0, %c0_0] : memref<16x16xf32, #tpu.memory_space<vmem>>, vector<16x16xf32>
    %c0_1 = arith.constant 0 : index
    %c0_2 = arith.constant 0 : index
    %1 = vector.load %arg1[%c0_1, %c0_2] : memref<16x16xf32, #tpu.memory_space<vmem>>, vector<16x16xf32>
    %c0_3 = arith.constant 0 : index
    %c0_4 = arith.constant 0 : index
    %2 = vector.load %arg7[%c0_3, %c0_4] : memref<1x152xf32, #tpu.memory_space<vmem>>, vector<1x16xf32>
    %3 = vector.broadcast %2 : vector<1x16xf32> to vector<16x16xf32>
    %4 = arith.mulf %0, %3 : vector<16x16xf32>
    %c0_5 = arith.constant 0 : index
    %c16 = arith.constant 16 : index
    %5 = vector.load %arg7[%c0_5, %c16] : memref<1x152xf32, #tpu.memory_space<vmem>>, vector<1x16xf32>
    %6 = vector.broadcast %5 : vector<1x16xf32> to vector<16x16xf32>
    %7 = arith.addf %4, %6 : vector<16x16xf32>
    %c0_6 = arith.constant 0 : index
    %c0_7 = arith.constant 0 : index
    %8 = vector.load %arg2[%c0_6, %c0_7] : memref<16x32xf32, #tpu.memory_space<vmem>>, vector<16x32xf32>
    %cst = arith.constant dense<0.000000e+00> : vector<16x32xf32>
    %9 = tpu.matmul %7, %8, %cst {dimension_numbers = #tpu.dot_dimension_numbers<[1], [0], [0], [1], [0, 0, 1, 1], [], []>} : vector<16x16xf32>, vector<16x32xf32>, vector<16x32xf32> -> vector<16x32xf32>
    %c0_8 = arith.constant 0 : index
    %c32 = arith.constant 32 : index
    %10 = vector.load %arg7[%c0_8, %c32] : memref<1x152xf32, #tpu.memory_space<vmem>>, vector<1x32xf32>
    %11 = vector.broadcast %10 : vector<1x32xf32> to vector<16x32xf32>
    %12 = arith.addf %9, %11 : vector<16x32xf32>
    %c0_9 = arith.constant 0 : index
    %c288 = arith.constant 288 : index
    %13 = vector.load %arg6[%c0_9, %c288] : memref<2x416xf32, #tpu.memory_space<vmem>>, vector<1x32xf32>
    %c0_10 = arith.constant 0 : index
    %c320 = arith.constant 320 : index
    %14 = vector.load %arg6[%c0_10, %c320] : memref<2x416xf32, #tpu.memory_space<vmem>>, vector<1x32xf32>
    %cst_11 = arith.constant dense<0.000000e+00> : vector<16xf32>
    %15 = vector.multi_reduction <add>, %12, %cst_11 [1] : vector<16x32xf32> to vector<16xf32>
    %16 = vector.shape_cast %15 : vector<16xf32> to vector<16x1xf32>
    %cst_12 = arith.constant 3.200000e+01 : f32
    %17 = vector.broadcast %cst_12 : f32 to vector<16x1xf32>
    %18 = arith.divf %16, %17 : vector<16x1xf32>
    %19 = vector.broadcast %18 : vector<16x1xf32> to vector<16x32xf32>
    %20 = arith.subf %12, %19 : vector<16x32xf32>
    %21 = arith.mulf %20, %20 : vector<16x32xf32>
    %cst_13 = arith.constant dense<0.000000e+00> : vector<16xf32>
    %22 = vector.multi_reduction <add>, %21, %cst_13 [1] : vector<16x32xf32> to vector<16xf32>
    %23 = vector.shape_cast %22 : vector<16xf32> to vector<16x1xf32>
    %cst_14 = arith.constant 3.200000e+01 : f32
    %24 = vector.broadcast %cst_14 : f32 to vector<16x1xf32>
    %25 = arith.divf %23, %24 : vector<16x1xf32>
    %cst_15 = arith.constant 9.99999974E-6 : f32
    %26 = vector.broadcast %cst_15 : f32 to vector<16x1xf32>
    %27 = arith.addf %25, %26 : vector<16x1xf32>
    %28 = math.rsqrt %27 : vector<16x1xf32>
    %29 = vector.broadcast %28 : vector<16x1xf32> to vector<16x32xf32>
    %30 = arith.mulf %20, %29 : vector<16x32xf32>
    %31 = vector.broadcast %13 : vector<1x32xf32> to vector<16x32xf32>
    %32 = arith.mulf %30, %31 : vector<16x32xf32>
    %33 = vector.broadcast %14 : vector<1x32xf32> to vector<16x32xf32>
    %34 = arith.addf %32, %33 : vector<16x32xf32>
    %c0_16 = arith.constant 0 : index
    %c0_17 = arith.constant 0 : index
    %c0_18 = arith.constant 0 : index
    %35 = vector.load %arg4[%c0_16, %c0_17, %c0_18] : memref<2x32x256xf32, #tpu.memory_space<vmem>>, vector<1x32x96xf32>
    %36 = vector.shape_cast %35 : vector<1x32x96xf32> to vector<32x96xf32>
    %cst_19 = arith.constant dense<0.000000e+00> : vector<16x96xf32>
    %37 = tpu.matmul %34, %36, %cst_19 {dimension_numbers = #tpu.dot_dimension_numbers<[1], [0], [0], [1], [0, 0, 1, 1], [], []>} : vector<16x32xf32>, vector<32x96xf32>, vector<16x96xf32> -> vector<16x96xf32>
    %c0_20 = arith.constant 0 : index
    %c0_21 = arith.constant 0 : index
    %38 = vector.load %arg6[%c0_20, %c0_21] : memref<2x416xf32, #tpu.memory_space<vmem>>, vector<1x96xf32>
    %39 = vector.broadcast %38 : vector<1x96xf32> to vector<16x96xf32>
    %40 = arith.addf %37, %39 : vector<16x96xf32>
    %41 = vector.extract_strided_slice %40 {offsets = [0, 0], sizes = [16, 8], strides = [1, 1]} : vector<16x96xf32> to vector<16x8xf32>
    %42 = vector.extract_strided_slice %40 {offsets = [0, 32], sizes = [16, 8], strides = [1, 1]} : vector<16x96xf32> to vector<16x8xf32>
    %43 = vector.extract_strided_slice %40 {offsets = [0, 64], sizes = [16, 8], strides = [1, 1]} : vector<16x96xf32> to vector<16x8xf32>
    %cst_22 = arith.constant dense<0.000000e+00> : vector<16x16xf32>
    %44 = tpu.matmul %41, %42, %cst_22 {dimension_numbers = #tpu.dot_dimension_numbers<[1], [1], [0], [0], [0, 0, 1, 0], [], []>} : vector<16x8xf32>, vector<16x8xf32>, vector<16x16xf32> -> vector<16x16xf32>
    %cst_23 = arith.constant 0.353553385 : f32
    %45 = vector.broadcast %cst_23 : f32 to vector<16x16xf32>
    %46 = arith.mulf %44, %45 : vector<16x16xf32>
    %47 = arith.addf %46, %1 : vector<16x16xf32>
    %cst_24 = arith.constant dense<0xFF800000> : vector<16xf32>
    %48 = vector.multi_reduction <maximumf>, %47, %cst_24 [1] : vector<16x16xf32> to vector<16xf32>
    %49 = vector.shape_cast %48 : vector<16xf32> to vector<16x1xf32>
    %50 = vector.broadcast %49 : vector<16x1xf32> to vector<16x16xf32>
    %51 = arith.subf %47, %50 : vector<16x16xf32>
    %52 = math.exp %51 : vector<16x16xf32>
    %cst_25 = arith.constant dense<0.000000e+00> : vector<16xf32>
    %53 = vector.multi_reduction <add>, %52, %cst_25 [1] : vector<16x16xf32> to vector<16xf32>
    %54 = vector.shape_cast %53 : vector<16xf32> to vector<16x1xf32>
    %55 = tpu.reciprocal %54 {approx = true} : vector<16x1xf32> -> vector<16x1xf32>
    %56 = vector.broadcast %55 : vector<16x1xf32> to vector<16x16xf32>
    %57 = arith.mulf %52, %56 : vector<16x16xf32>
    %cst_26 = arith.constant dense<0.000000e+00> : vector<16x8xf32>
    %58 = tpu.matmul %57, %43, %cst_26 {dimension_numbers = #tpu.dot_dimension_numbers<[1], [0], [0], [1], [0, 0, 1, 1], [], []>} : vector<16x16xf32>, vector<16x8xf32>, vector<16x8xf32> -> vector<16x8xf32>
    %59 = vector.extract_strided_slice %40 {offsets = [0, 8], sizes = [16, 8], strides = [1, 1]} : vector<16x96xf32> to vector<16x8xf32>
    %60 = vector.extract_strided_slice %40 {offsets = [0, 40], sizes = [16, 8], strides = [1, 1]} : vector<16x96xf32> to vector<16x8xf32>
    %61 = vector.extract_strided_slice %40 {offsets = [0, 72], sizes = [16, 8], strides = [1, 1]} : vector<16x96xf32> to vector<16x8xf32>
    %cst_27 = arith.constant dense<0.000000e+00> : vector<16x16xf32>
    %62 = tpu.matmul %59, %60, %cst_27 {dimension_numbers = #tpu.dot_dimension_numbers<[1], [1], [0], [0], [0, 0, 1, 0], [], []>} : vector<16x8xf32>, vector<16x8xf32>, vector<16x16xf32> -> vector<16x16xf32>
    %cst_28 = arith.constant 0.353553385 : f32
    %63 = vector.broadcast %cst_28 : f32 to vector<16x16xf32>
    %64 = arith.mulf %62, %63 : vector<16x16xf32>
    %65 = arith.addf %64, %1 : vector<16x16xf32>
    %cst_29 = arith.constant dense<0xFF800000> : vector<16xf32>
    %66 = vector.multi_reduction <maximumf>, %65, %cst_29 [1] : vector<16x16xf32> to vector<16xf32>
    %67 = vector.shape_cast %66 : vector<16xf32> to vector<16x1xf32>
    %68 = vector.broadcast %67 : vector<16x1xf32> to vector<16x16xf32>
    %69 = arith.subf %65, %68 : vector<16x16xf32>
    %70 = math.exp %69 : vector<16x16xf32>
    %cst_30 = arith.constant dense<0.000000e+00> : vector<16xf32>
    %71 = vector.multi_reduction <add>, %70, %cst_30 [1] : vector<16x16xf32> to vector<16xf32>
    %72 = vector.shape_cast %71 : vector<16xf32> to vector<16x1xf32>
    %73 = tpu.reciprocal %72 {approx = true} : vector<16x1xf32> -> vector<16x1xf32>
    %74 = vector.broadcast %73 : vector<16x1xf32> to vector<16x16xf32>
    %75 = arith.mulf %70, %74 : vector<16x16xf32>
    %cst_31 = arith.constant dense<0.000000e+00> : vector<16x8xf32>
    %76 = tpu.matmul %75, %61, %cst_31 {dimension_numbers = #tpu.dot_dimension_numbers<[1], [0], [0], [1], [0, 0, 1, 1], [], []>} : vector<16x16xf32>, vector<16x8xf32>, vector<16x8xf32> -> vector<16x8xf32>
    %77 = vector.extract_strided_slice %40 {offsets = [0, 16], sizes = [16, 8], strides = [1, 1]} : vector<16x96xf32> to vector<16x8xf32>
    %78 = vector.extract_strided_slice %40 {offsets = [0, 48], sizes = [16, 8], strides = [1, 1]} : vector<16x96xf32> to vector<16x8xf32>
    %79 = vector.extract_strided_slice %40 {offsets = [0, 80], sizes = [16, 8], strides = [1, 1]} : vector<16x96xf32> to vector<16x8xf32>
    %cst_32 = arith.constant dense<0.000000e+00> : vector<16x16xf32>
    %80 = tpu.matmul %77, %78, %cst_32 {dimension_numbers = #tpu.dot_dimension_numbers<[1], [1], [0], [0], [0, 0, 1, 0], [], []>} : vector<16x8xf32>, vector<16x8xf32>, vector<16x16xf32> -> vector<16x16xf32>
    %cst_33 = arith.constant 0.353553385 : f32
    %81 = vector.broadcast %cst_33 : f32 to vector<16x16xf32>
    %82 = arith.mulf %80, %81 : vector<16x16xf32>
    %83 = arith.addf %82, %1 : vector<16x16xf32>
    %cst_34 = arith.constant dense<0xFF800000> : vector<16xf32>
    %84 = vector.multi_reduction <maximumf>, %83, %cst_34 [1] : vector<16x16xf32> to vector<16xf32>
    %85 = vector.shape_cast %84 : vector<16xf32> to vector<16x1xf32>
    %86 = vector.broadcast %85 : vector<16x1xf32> to vector<16x16xf32>
    %87 = arith.subf %83, %86 : vector<16x16xf32>
    %88 = math.exp %87 : vector<16x16xf32>
    %cst_35 = arith.constant dense<0.000000e+00> : vector<16xf32>
    %89 = vector.multi_reduction <add>, %88, %cst_35 [1] : vector<16x16xf32> to vector<16xf32>
    %90 = vector.shape_cast %89 : vector<16xf32> to vector<16x1xf32>
    %91 = tpu.reciprocal %90 {approx = true} : vector<16x1xf32> -> vector<16x1xf32>
    %92 = vector.broadcast %91 : vector<16x1xf32> to vector<16x16xf32>
    %93 = arith.mulf %88, %92 : vector<16x16xf32>
    %cst_36 = arith.constant dense<0.000000e+00> : vector<16x8xf32>
    %94 = tpu.matmul %93, %79, %cst_36 {dimension_numbers = #tpu.dot_dimension_numbers<[1], [0], [0], [1], [0, 0, 1, 1], [], []>} : vector<16x16xf32>, vector<16x8xf32>, vector<16x8xf32> -> vector<16x8xf32>
    %95 = vector.extract_strided_slice %40 {offsets = [0, 24], sizes = [16, 8], strides = [1, 1]} : vector<16x96xf32> to vector<16x8xf32>
    %96 = vector.extract_strided_slice %40 {offsets = [0, 56], sizes = [16, 8], strides = [1, 1]} : vector<16x96xf32> to vector<16x8xf32>
    %97 = vector.extract_strided_slice %40 {offsets = [0, 88], sizes = [16, 8], strides = [1, 1]} : vector<16x96xf32> to vector<16x8xf32>
    %cst_37 = arith.constant dense<0.000000e+00> : vector<16x16xf32>
    %98 = tpu.matmul %95, %96, %cst_37 {dimension_numbers = #tpu.dot_dimension_numbers<[1], [1], [0], [0], [0, 0, 1, 0], [], []>} : vector<16x8xf32>, vector<16x8xf32>, vector<16x16xf32> -> vector<16x16xf32>
    %cst_38 = arith.constant 0.353553385 : f32
    %99 = vector.broadcast %cst_38 : f32 to vector<16x16xf32>
    %100 = arith.mulf %98, %99 : vector<16x16xf32>
    %101 = arith.addf %100, %1 : vector<16x16xf32>
    %cst_39 = arith.constant dense<0xFF800000> : vector<16xf32>
    %102 = vector.multi_reduction <maximumf>, %101, %cst_39 [1] : vector<16x16xf32> to vector<16xf32>
    %103 = vector.shape_cast %102 : vector<16xf32> to vector<16x1xf32>
    %104 = vector.broadcast %103 : vector<16x1xf32> to vector<16x16xf32>
    %105 = arith.subf %101, %104 : vector<16x16xf32>
    %106 = math.exp %105 : vector<16x16xf32>
    %cst_40 = arith.constant dense<0.000000e+00> : vector<16xf32>
    %107 = vector.multi_reduction <add>, %106, %cst_40 [1] : vector<16x16xf32> to vector<16xf32>
    %108 = vector.shape_cast %107 : vector<16xf32> to vector<16x1xf32>
    %109 = tpu.reciprocal %108 {approx = true} : vector<16x1xf32> -> vector<16x1xf32>
    %110 = vector.broadcast %109 : vector<16x1xf32> to vector<16x16xf32>
    %111 = arith.mulf %106, %110 : vector<16x16xf32>
    %cst_41 = arith.constant dense<0.000000e+00> : vector<16x8xf32>
    %112 = tpu.matmul %111, %97, %cst_41 {dimension_numbers = #tpu.dot_dimension_numbers<[1], [0], [0], [1], [0, 0, 1, 1], [], []>} : vector<16x16xf32>, vector<16x8xf32>, vector<16x8xf32> -> vector<16x8xf32>
    %113 = tpu.concatenate %58, %76, %94, %112 in 1 : vector<16x8xf32>, vector<16x8xf32>, vector<16x8xf32>, vector<16x8xf32> -> vector<16x32xf32>
    %c0_42 = arith.constant 0 : index
    %c0_43 = arith.constant 0 : index
    %c96 = arith.constant 96 : index
    %114 = vector.load %arg4[%c0_42, %c0_43, %c96] : memref<2x32x256xf32, #tpu.memory_space<vmem>>, vector<1x32x32xf32>
    %115 = vector.shape_cast %114 : vector<1x32x32xf32> to vector<32x32xf32>
    %cst_44 = arith.constant dense<0.000000e+00> : vector<16x32xf32>
    %116 = tpu.matmul %113, %115, %cst_44 {dimension_numbers = #tpu.dot_dimension_numbers<[1], [0], [0], [1], [0, 0, 1, 1], [], []>} : vector<16x32xf32>, vector<32x32xf32>, vector<16x32xf32> -> vector<16x32xf32>
    %117 = arith.addf %12, %116 : vector<16x32xf32>
    %c0_45 = arith.constant 0 : index
    %c96_46 = arith.constant 96 : index
    %118 = vector.load %arg6[%c0_45, %c96_46] : memref<2x416xf32, #tpu.memory_space<vmem>>, vector<1x32xf32>
    %119 = vector.broadcast %118 : vector<1x32xf32> to vector<16x32xf32>
    %120 = arith.addf %117, %119 : vector<16x32xf32>
    %c0_47 = arith.constant 0 : index
    %c352 = arith.constant 352 : index
    %121 = vector.load %arg6[%c0_47, %c352] : memref<2x416xf32, #tpu.memory_space<vmem>>, vector<1x32xf32>
    %c0_48 = arith.constant 0 : index
    %c384 = arith.constant 384 : index
    %122 = vector.load %arg6[%c0_48, %c384] : memref<2x416xf32, #tpu.memory_space<vmem>>, vector<1x32xf32>
    %cst_49 = arith.constant dense<0.000000e+00> : vector<16xf32>
    %123 = vector.multi_reduction <add>, %120, %cst_49 [1] : vector<16x32xf32> to vector<16xf32>
    %124 = vector.shape_cast %123 : vector<16xf32> to vector<16x1xf32>
    %cst_50 = arith.constant 3.200000e+01 : f32
    %125 = vector.broadcast %cst_50 : f32 to vector<16x1xf32>
    %126 = arith.divf %124, %125 : vector<16x1xf32>
    %127 = vector.broadcast %126 : vector<16x1xf32> to vector<16x32xf32>
    %128 = arith.subf %120, %127 : vector<16x32xf32>
    %129 = arith.mulf %128, %128 : vector<16x32xf32>
    %cst_51 = arith.constant dense<0.000000e+00> : vector<16xf32>
    %130 = vector.multi_reduction <add>, %129, %cst_51 [1] : vector<16x32xf32> to vector<16xf32>
    %131 = vector.shape_cast %130 : vector<16xf32> to vector<16x1xf32>
    %cst_52 = arith.constant 3.200000e+01 : f32
    %132 = vector.broadcast %cst_52 : f32 to vector<16x1xf32>
    %133 = arith.divf %131, %132 : vector<16x1xf32>
    %cst_53 = arith.constant 9.99999974E-6 : f32
    %134 = vector.broadcast %cst_53 : f32 to vector<16x1xf32>
    %135 = arith.addf %133, %134 : vector<16x1xf32>
    %136 = math.rsqrt %135 : vector<16x1xf32>
    %137 = vector.broadcast %136 : vector<16x1xf32> to vector<16x32xf32>
    %138 = arith.mulf %128, %137 : vector<16x32xf32>
    %139 = vector.broadcast %121 : vector<1x32xf32> to vector<16x32xf32>
    %140 = arith.mulf %138, %139 : vector<16x32xf32>
    %141 = vector.broadcast %122 : vector<1x32xf32> to vector<16x32xf32>
    %142 = arith.addf %140, %141 : vector<16x32xf32>
    %c0_54 = arith.constant 0 : index
    %c0_55 = arith.constant 0 : index
    %c128 = arith.constant 128 : index
    %143 = vector.load %arg4[%c0_54, %c0_55, %c128] : memref<2x32x256xf32, #tpu.memory_space<vmem>>, vector<1x32x128xf32>
    %144 = vector.shape_cast %143 : vector<1x32x128xf32> to vector<32x128xf32>
    %cst_56 = arith.constant dense<0.000000e+00> : vector<16x128xf32>
    %145 = tpu.matmul %142, %144, %cst_56 {dimension_numbers = #tpu.dot_dimension_numbers<[1], [0], [0], [1], [0, 0, 1, 1], [], []>} : vector<16x32xf32>, vector<32x128xf32>, vector<16x128xf32> -> vector<16x128xf32>
    %c0_57 = arith.constant 0 : index
    %c128_58 = arith.constant 128 : index
    %146 = vector.load %arg6[%c0_57, %c128_58] : memref<2x416xf32, #tpu.memory_space<vmem>>, vector<1x128xf32>
    %147 = vector.broadcast %146 : vector<1x128xf32> to vector<16x128xf32>
    %148 = arith.addf %145, %147 : vector<16x128xf32>
    %cst_59 = arith.constant 5.000000e-01 : f32
    %149 = vector.broadcast %cst_59 : f32 to vector<16x128xf32>
    %150 = arith.mulf %149, %148 : vector<16x128xf32>
    %cst_60 = arith.constant 4.471500e-02 : f32
    %151 = vector.broadcast %cst_60 : f32 to vector<16x128xf32>
    %152 = arith.mulf %151, %148 : vector<16x128xf32>
    %153 = arith.mulf %152, %148 : vector<16x128xf32>
    %154 = arith.mulf %153, %148 : vector<16x128xf32>
    %155 = arith.addf %148, %154 : vector<16x128xf32>
    %cst_61 = arith.constant 0.797884583 : f32
    %156 = vector.broadcast %cst_61 : f32 to vector<16x128xf32>
    %157 = arith.mulf %156, %155 : vector<16x128xf32>
    %158 = math.tanh %157 : vector<16x128xf32>
    %cst_62 = arith.constant 1.000000e+00 : f32
    %159 = vector.broadcast %cst_62 : f32 to vector<16x128xf32>
    %160 = arith.addf %159, %158 : vector<16x128xf32>
    %161 = arith.mulf %150, %160 : vector<16x128xf32>
    %c0_63 = arith.constant 0 : index
    %c0_64 = arith.constant 0 : index
    %c0_65 = arith.constant 0 : index
    %162 = vector.load %arg5[%c0_63, %c0_64, %c0_65] : memref<2x128x32xf32, #tpu.memory_space<vmem>>, vector<1x128x32xf32>
    %163 = vector.shape_cast %162 : vector<1x128x32xf32> to vector<128x32xf32>
    %cst_66 = arith.constant dense<0.000000e+00> : vector<16x32xf32>
    %164 = tpu.matmul %161, %163, %cst_66 {dimension_numbers = #tpu.dot_dimension_numbers<[1], [0], [0], [1], [0, 0, 1, 1], [], []>} : vector<16x128xf32>, vector<128x32xf32>, vector<16x32xf32> -> vector<16x32xf32>
    %165 = arith.addf %120, %164 : vector<16x32xf32>
    %c0_67 = arith.constant 0 : index
    %c256 = arith.constant 256 : index
    %166 = vector.load %arg6[%c0_67, %c256] : memref<2x416xf32, #tpu.memory_space<vmem>>, vector<1x32xf32>
    %167 = vector.broadcast %166 : vector<1x32xf32> to vector<16x32xf32>
    %168 = arith.addf %165, %167 : vector<16x32xf32>
    %c1 = arith.constant 1 : index
    %c288_68 = arith.constant 288 : index
    %169 = vector.load %arg6[%c1, %c288_68] : memref<2x416xf32, #tpu.memory_space<vmem>>, vector<1x32xf32>
    %c1_69 = arith.constant 1 : index
    %c320_70 = arith.constant 320 : index
    %170 = vector.load %arg6[%c1_69, %c320_70] : memref<2x416xf32, #tpu.memory_space<vmem>>, vector<1x32xf32>
    %cst_71 = arith.constant dense<0.000000e+00> : vector<16xf32>
    %171 = vector.multi_reduction <add>, %168, %cst_71 [1] : vector<16x32xf32> to vector<16xf32>
    %172 = vector.shape_cast %171 : vector<16xf32> to vector<16x1xf32>
    %cst_72 = arith.constant 3.200000e+01 : f32
    %173 = vector.broadcast %cst_72 : f32 to vector<16x1xf32>
    %174 = arith.divf %172, %173 : vector<16x1xf32>
    %175 = vector.broadcast %174 : vector<16x1xf32> to vector<16x32xf32>
    %176 = arith.subf %168, %175 : vector<16x32xf32>
    %177 = arith.mulf %176, %176 : vector<16x32xf32>
    %cst_73 = arith.constant dense<0.000000e+00> : vector<16xf32>
    %178 = vector.multi_reduction <add>, %177, %cst_73 [1] : vector<16x32xf32> to vector<16xf32>
    %179 = vector.shape_cast %178 : vector<16xf32> to vector<16x1xf32>
    %cst_74 = arith.constant 3.200000e+01 : f32
    %180 = vector.broadcast %cst_74 : f32 to vector<16x1xf32>
    %181 = arith.divf %179, %180 : vector<16x1xf32>
    %cst_75 = arith.constant 9.99999974E-6 : f32
    %182 = vector.broadcast %cst_75 : f32 to vector<16x1xf32>
    %183 = arith.addf %181, %182 : vector<16x1xf32>
    %184 = math.rsqrt %183 : vector<16x1xf32>
    %185 = vector.broadcast %184 : vector<16x1xf32> to vector<16x32xf32>
    %186 = arith.mulf %176, %185 : vector<16x32xf32>
    %187 = vector.broadcast %169 : vector<1x32xf32> to vector<16x32xf32>
    %188 = arith.mulf %186, %187 : vector<16x32xf32>
    %189 = vector.broadcast %170 : vector<1x32xf32> to vector<16x32xf32>
    %190 = arith.addf %188, %189 : vector<16x32xf32>
    %c1_76 = arith.constant 1 : index
    %c0_77 = arith.constant 0 : index
    %c0_78 = arith.constant 0 : index
    %191 = vector.load %arg4[%c1_76, %c0_77, %c0_78] : memref<2x32x256xf32, #tpu.memory_space<vmem>>, vector<1x32x96xf32>
    %192 = vector.shape_cast %191 : vector<1x32x96xf32> to vector<32x96xf32>
    %cst_79 = arith.constant dense<0.000000e+00> : vector<16x96xf32>
    %193 = tpu.matmul %190, %192, %cst_79 {dimension_numbers = #tpu.dot_dimension_numbers<[1], [0], [0], [1], [0, 0, 1, 1], [], []>} : vector<16x32xf32>, vector<32x96xf32>, vector<16x96xf32> -> vector<16x96xf32>
    %c1_80 = arith.constant 1 : index
    %c0_81 = arith.constant 0 : index
    %194 = vector.load %arg6[%c1_80, %c0_81] : memref<2x416xf32, #tpu.memory_space<vmem>>, vector<1x96xf32>
    %195 = vector.broadcast %194 : vector<1x96xf32> to vector<16x96xf32>
    %196 = arith.addf %193, %195 : vector<16x96xf32>
    %197 = vector.extract_strided_slice %196 {offsets = [0, 0], sizes = [16, 8], strides = [1, 1]} : vector<16x96xf32> to vector<16x8xf32>
    %198 = vector.extract_strided_slice %196 {offsets = [0, 32], sizes = [16, 8], strides = [1, 1]} : vector<16x96xf32> to vector<16x8xf32>
    %199 = vector.extract_strided_slice %196 {offsets = [0, 64], sizes = [16, 8], strides = [1, 1]} : vector<16x96xf32> to vector<16x8xf32>
    %cst_82 = arith.constant dense<0.000000e+00> : vector<16x16xf32>
    %200 = tpu.matmul %197, %198, %cst_82 {dimension_numbers = #tpu.dot_dimension_numbers<[1], [1], [0], [0], [0, 0, 1, 0], [], []>} : vector<16x8xf32>, vector<16x8xf32>, vector<16x16xf32> -> vector<16x16xf32>
    %cst_83 = arith.constant 0.353553385 : f32
    %201 = vector.broadcast %cst_83 : f32 to vector<16x16xf32>
    %202 = arith.mulf %200, %201 : vector<16x16xf32>
    %203 = arith.addf %202, %1 : vector<16x16xf32>
    %cst_84 = arith.constant dense<0xFF800000> : vector<16xf32>
    %204 = vector.multi_reduction <maximumf>, %203, %cst_84 [1] : vector<16x16xf32> to vector<16xf32>
    %205 = vector.shape_cast %204 : vector<16xf32> to vector<16x1xf32>
    %206 = vector.broadcast %205 : vector<16x1xf32> to vector<16x16xf32>
    %207 = arith.subf %203, %206 : vector<16x16xf32>
    %208 = math.exp %207 : vector<16x16xf32>
    %cst_85 = arith.constant dense<0.000000e+00> : vector<16xf32>
    %209 = vector.multi_reduction <add>, %208, %cst_85 [1] : vector<16x16xf32> to vector<16xf32>
    %210 = vector.shape_cast %209 : vector<16xf32> to vector<16x1xf32>
    %211 = tpu.reciprocal %210 {approx = true} : vector<16x1xf32> -> vector<16x1xf32>
    %212 = vector.broadcast %211 : vector<16x1xf32> to vector<16x16xf32>
    %213 = arith.mulf %208, %212 : vector<16x16xf32>
    %cst_86 = arith.constant dense<0.000000e+00> : vector<16x8xf32>
    %214 = tpu.matmul %213, %199, %cst_86 {dimension_numbers = #tpu.dot_dimension_numbers<[1], [0], [0], [1], [0, 0, 1, 1], [], []>} : vector<16x16xf32>, vector<16x8xf32>, vector<16x8xf32> -> vector<16x8xf32>
    %215 = vector.extract_strided_slice %196 {offsets = [0, 8], sizes = [16, 8], strides = [1, 1]} : vector<16x96xf32> to vector<16x8xf32>
    %216 = vector.extract_strided_slice %196 {offsets = [0, 40], sizes = [16, 8], strides = [1, 1]} : vector<16x96xf32> to vector<16x8xf32>
    %217 = vector.extract_strided_slice %196 {offsets = [0, 72], sizes = [16, 8], strides = [1, 1]} : vector<16x96xf32> to vector<16x8xf32>
    %cst_87 = arith.constant dense<0.000000e+00> : vector<16x16xf32>
    %218 = tpu.matmul %215, %216, %cst_87 {dimension_numbers = #tpu.dot_dimension_numbers<[1], [1], [0], [0], [0, 0, 1, 0], [], []>} : vector<16x8xf32>, vector<16x8xf32>, vector<16x16xf32> -> vector<16x16xf32>
    %cst_88 = arith.constant 0.353553385 : f32
    %219 = vector.broadcast %cst_88 : f32 to vector<16x16xf32>
    %220 = arith.mulf %218, %219 : vector<16x16xf32>
    %221 = arith.addf %220, %1 : vector<16x16xf32>
    %cst_89 = arith.constant dense<0xFF800000> : vector<16xf32>
    %222 = vector.multi_reduction <maximumf>, %221, %cst_89 [1] : vector<16x16xf32> to vector<16xf32>
    %223 = vector.shape_cast %222 : vector<16xf32> to vector<16x1xf32>
    %224 = vector.broadcast %223 : vector<16x1xf32> to vector<16x16xf32>
    %225 = arith.subf %221, %224 : vector<16x16xf32>
    %226 = math.exp %225 : vector<16x16xf32>
    %cst_90 = arith.constant dense<0.000000e+00> : vector<16xf32>
    %227 = vector.multi_reduction <add>, %226, %cst_90 [1] : vector<16x16xf32> to vector<16xf32>
    %228 = vector.shape_cast %227 : vector<16xf32> to vector<16x1xf32>
    %229 = tpu.reciprocal %228 {approx = true} : vector<16x1xf32> -> vector<16x1xf32>
    %230 = vector.broadcast %229 : vector<16x1xf32> to vector<16x16xf32>
    %231 = arith.mulf %226, %230 : vector<16x16xf32>
    %cst_91 = arith.constant dense<0.000000e+00> : vector<16x8xf32>
    %232 = tpu.matmul %231, %217, %cst_91 {dimension_numbers = #tpu.dot_dimension_numbers<[1], [0], [0], [1], [0, 0, 1, 1], [], []>} : vector<16x16xf32>, vector<16x8xf32>, vector<16x8xf32> -> vector<16x8xf32>
    %233 = vector.extract_strided_slice %196 {offsets = [0, 16], sizes = [16, 8], strides = [1, 1]} : vector<16x96xf32> to vector<16x8xf32>
    %234 = vector.extract_strided_slice %196 {offsets = [0, 48], sizes = [16, 8], strides = [1, 1]} : vector<16x96xf32> to vector<16x8xf32>
    %235 = vector.extract_strided_slice %196 {offsets = [0, 80], sizes = [16, 8], strides = [1, 1]} : vector<16x96xf32> to vector<16x8xf32>
    %cst_92 = arith.constant dense<0.000000e+00> : vector<16x16xf32>
    %236 = tpu.matmul %233, %234, %cst_92 {dimension_numbers = #tpu.dot_dimension_numbers<[1], [1], [0], [0], [0, 0, 1, 0], [], []>} : vector<16x8xf32>, vector<16x8xf32>, vector<16x16xf32> -> vector<16x16xf32>
    %cst_93 = arith.constant 0.353553385 : f32
    %237 = vector.broadcast %cst_93 : f32 to vector<16x16xf32>
    %238 = arith.mulf %236, %237 : vector<16x16xf32>
    %239 = arith.addf %238, %1 : vector<16x16xf32>
    %cst_94 = arith.constant dense<0xFF800000> : vector<16xf32>
    %240 = vector.multi_reduction <maximumf>, %239, %cst_94 [1] : vector<16x16xf32> to vector<16xf32>
    %241 = vector.shape_cast %240 : vector<16xf32> to vector<16x1xf32>
    %242 = vector.broadcast %241 : vector<16x1xf32> to vector<16x16xf32>
    %243 = arith.subf %239, %242 : vector<16x16xf32>
    %244 = math.exp %243 : vector<16x16xf32>
    %cst_95 = arith.constant dense<0.000000e+00> : vector<16xf32>
    %245 = vector.multi_reduction <add>, %244, %cst_95 [1] : vector<16x16xf32> to vector<16xf32>
    %246 = vector.shape_cast %245 : vector<16xf32> to vector<16x1xf32>
    %247 = tpu.reciprocal %246 {approx = true} : vector<16x1xf32> -> vector<16x1xf32>
    %248 = vector.broadcast %247 : vector<16x1xf32> to vector<16x16xf32>
    %249 = arith.mulf %244, %248 : vector<16x16xf32>
    %cst_96 = arith.constant dense<0.000000e+00> : vector<16x8xf32>
    %250 = tpu.matmul %249, %235, %cst_96 {dimension_numbers = #tpu.dot_dimension_numbers<[1], [0], [0], [1], [0, 0, 1, 1], [], []>} : vector<16x16xf32>, vector<16x8xf32>, vector<16x8xf32> -> vector<16x8xf32>
    %251 = vector.extract_strided_slice %196 {offsets = [0, 24], sizes = [16, 8], strides = [1, 1]} : vector<16x96xf32> to vector<16x8xf32>
    %252 = vector.extract_strided_slice %196 {offsets = [0, 56], sizes = [16, 8], strides = [1, 1]} : vector<16x96xf32> to vector<16x8xf32>
    %253 = vector.extract_strided_slice %196 {offsets = [0, 88], sizes = [16, 8], strides = [1, 1]} : vector<16x96xf32> to vector<16x8xf32>
    %cst_97 = arith.constant dense<0.000000e+00> : vector<16x16xf32>
    %254 = tpu.matmul %251, %252, %cst_97 {dimension_numbers = #tpu.dot_dimension_numbers<[1], [1], [0], [0], [0, 0, 1, 0], [], []>} : vector<16x8xf32>, vector<16x8xf32>, vector<16x16xf32> -> vector<16x16xf32>
    %cst_98 = arith.constant 0.353553385 : f32
    %255 = vector.broadcast %cst_98 : f32 to vector<16x16xf32>
    %256 = arith.mulf %254, %255 : vector<16x16xf32>
    %257 = arith.addf %256, %1 : vector<16x16xf32>
    %cst_99 = arith.constant dense<0xFF800000> : vector<16xf32>
    %258 = vector.multi_reduction <maximumf>, %257, %cst_99 [1] : vector<16x16xf32> to vector<16xf32>
    %259 = vector.shape_cast %258 : vector<16xf32> to vector<16x1xf32>
    %260 = vector.broadcast %259 : vector<16x1xf32> to vector<16x16xf32>
    %261 = arith.subf %257, %260 : vector<16x16xf32>
    %262 = math.exp %261 : vector<16x16xf32>
    %cst_100 = arith.constant dense<0.000000e+00> : vector<16xf32>
    %263 = vector.multi_reduction <add>, %262, %cst_100 [1] : vector<16x16xf32> to vector<16xf32>
    %264 = vector.shape_cast %263 : vector<16xf32> to vector<16x1xf32>
    %265 = tpu.reciprocal %264 {approx = true} : vector<16x1xf32> -> vector<16x1xf32>
    %266 = vector.broadcast %265 : vector<16x1xf32> to vector<16x16xf32>
    %267 = arith.mulf %262, %266 : vector<16x16xf32>
    %cst_101 = arith.constant dense<0.000000e+00> : vector<16x8xf32>
    %268 = tpu.matmul %267, %253, %cst_101 {dimension_numbers = #tpu.dot_dimension_numbers<[1], [0], [0], [1], [0, 0, 1, 1], [], []>} : vector<16x16xf32>, vector<16x8xf32>, vector<16x8xf32> -> vector<16x8xf32>
    %269 = tpu.concatenate %214, %232, %250, %268 in 1 : vector<16x8xf32>, vector<16x8xf32>, vector<16x8xf32>, vector<16x8xf32> -> vector<16x32xf32>
    %c1_102 = arith.constant 1 : index
    %c0_103 = arith.constant 0 : index
    %c96_104 = arith.constant 96 : index
    %270 = vector.load %arg4[%c1_102, %c0_103, %c96_104] : memref<2x32x256xf32, #tpu.memory_space<vmem>>, vector<1x32x32xf32>
    %271 = vector.shape_cast %270 : vector<1x32x32xf32> to vector<32x32xf32>
    %cst_105 = arith.constant dense<0.000000e+00> : vector<16x32xf32>
    %272 = tpu.matmul %269, %271, %cst_105 {dimension_numbers = #tpu.dot_dimension_numbers<[1], [0], [0], [1], [0, 0, 1, 1], [], []>} : vector<16x32xf32>, vector<32x32xf32>, vector<16x32xf32> -> vector<16x32xf32>
    %273 = arith.addf %168, %272 : vector<16x32xf32>
    %c1_106 = arith.constant 1 : index
    %c96_107 = arith.constant 96 : index
    %274 = vector.load %arg6[%c1_106, %c96_107] : memref<2x416xf32, #tpu.memory_space<vmem>>, vector<1x32xf32>
    %275 = vector.broadcast %274 : vector<1x32xf32> to vector<16x32xf32>
    %276 = arith.addf %273, %275 : vector<16x32xf32>
    %c1_108 = arith.constant 1 : index
    %c352_109 = arith.constant 352 : index
    %277 = vector.load %arg6[%c1_108, %c352_109] : memref<2x416xf32, #tpu.memory_space<vmem>>, vector<1x32xf32>
    %c1_110 = arith.constant 1 : index
    %c384_111 = arith.constant 384 : index
    %278 = vector.load %arg6[%c1_110, %c384_111] : memref<2x416xf32, #tpu.memory_space<vmem>>, vector<1x32xf32>
    %cst_112 = arith.constant dense<0.000000e+00> : vector<16xf32>
    %279 = vector.multi_reduction <add>, %276, %cst_112 [1] : vector<16x32xf32> to vector<16xf32>
    %280 = vector.shape_cast %279 : vector<16xf32> to vector<16x1xf32>
    %cst_113 = arith.constant 3.200000e+01 : f32
    %281 = vector.broadcast %cst_113 : f32 to vector<16x1xf32>
    %282 = arith.divf %280, %281 : vector<16x1xf32>
    %283 = vector.broadcast %282 : vector<16x1xf32> to vector<16x32xf32>
    %284 = arith.subf %276, %283 : vector<16x32xf32>
    %285 = arith.mulf %284, %284 : vector<16x32xf32>
    %cst_114 = arith.constant dense<0.000000e+00> : vector<16xf32>
    %286 = vector.multi_reduction <add>, %285, %cst_114 [1] : vector<16x32xf32> to vector<16xf32>
    %287 = vector.shape_cast %286 : vector<16xf32> to vector<16x1xf32>
    %cst_115 = arith.constant 3.200000e+01 : f32
    %288 = vector.broadcast %cst_115 : f32 to vector<16x1xf32>
    %289 = arith.divf %287, %288 : vector<16x1xf32>
    %cst_116 = arith.constant 9.99999974E-6 : f32
    %290 = vector.broadcast %cst_116 : f32 to vector<16x1xf32>
    %291 = arith.addf %289, %290 : vector<16x1xf32>
    %292 = math.rsqrt %291 : vector<16x1xf32>
    %293 = vector.broadcast %292 : vector<16x1xf32> to vector<16x32xf32>
    %294 = arith.mulf %284, %293 : vector<16x32xf32>
    %295 = vector.broadcast %277 : vector<1x32xf32> to vector<16x32xf32>
    %296 = arith.mulf %294, %295 : vector<16x32xf32>
    %297 = vector.broadcast %278 : vector<1x32xf32> to vector<16x32xf32>
    %298 = arith.addf %296, %297 : vector<16x32xf32>
    %c1_117 = arith.constant 1 : index
    %c0_118 = arith.constant 0 : index
    %c128_119 = arith.constant 128 : index
    %299 = vector.load %arg4[%c1_117, %c0_118, %c128_119] : memref<2x32x256xf32, #tpu.memory_space<vmem>>, vector<1x32x128xf32>
    %300 = vector.shape_cast %299 : vector<1x32x128xf32> to vector<32x128xf32>
    %cst_120 = arith.constant dense<0.000000e+00> : vector<16x128xf32>
    %301 = tpu.matmul %298, %300, %cst_120 {dimension_numbers = #tpu.dot_dimension_numbers<[1], [0], [0], [1], [0, 0, 1, 1], [], []>} : vector<16x32xf32>, vector<32x128xf32>, vector<16x128xf32> -> vector<16x128xf32>
    %c1_121 = arith.constant 1 : index
    %c128_122 = arith.constant 128 : index
    %302 = vector.load %arg6[%c1_121, %c128_122] : memref<2x416xf32, #tpu.memory_space<vmem>>, vector<1x128xf32>
    %303 = vector.broadcast %302 : vector<1x128xf32> to vector<16x128xf32>
    %304 = arith.addf %301, %303 : vector<16x128xf32>
    %cst_123 = arith.constant 5.000000e-01 : f32
    %305 = vector.broadcast %cst_123 : f32 to vector<16x128xf32>
    %306 = arith.mulf %305, %304 : vector<16x128xf32>
    %cst_124 = arith.constant 4.471500e-02 : f32
    %307 = vector.broadcast %cst_124 : f32 to vector<16x128xf32>
    %308 = arith.mulf %307, %304 : vector<16x128xf32>
    %309 = arith.mulf %308, %304 : vector<16x128xf32>
    %310 = arith.mulf %309, %304 : vector<16x128xf32>
    %311 = arith.addf %304, %310 : vector<16x128xf32>
    %cst_125 = arith.constant 0.797884583 : f32
    %312 = vector.broadcast %cst_125 : f32 to vector<16x128xf32>
    %313 = arith.mulf %312, %311 : vector<16x128xf32>
    %314 = math.tanh %313 : vector<16x128xf32>
    %cst_126 = arith.constant 1.000000e+00 : f32
    %315 = vector.broadcast %cst_126 : f32 to vector<16x128xf32>
    %316 = arith.addf %315, %314 : vector<16x128xf32>
    %317 = arith.mulf %306, %316 : vector<16x128xf32>
    %c1_127 = arith.constant 1 : index
    %c0_128 = arith.constant 0 : index
    %c0_129 = arith.constant 0 : index
    %318 = vector.load %arg5[%c1_127, %c0_128, %c0_129] : memref<2x128x32xf32, #tpu.memory_space<vmem>>, vector<1x128x32xf32>
    %319 = vector.shape_cast %318 : vector<1x128x32xf32> to vector<128x32xf32>
    %cst_130 = arith.constant dense<0.000000e+00> : vector<16x32xf32>
    %320 = tpu.matmul %317, %319, %cst_130 {dimension_numbers = #tpu.dot_dimension_numbers<[1], [0], [0], [1], [0, 0, 1, 1], [], []>} : vector<16x128xf32>, vector<128x32xf32>, vector<16x32xf32> -> vector<16x32xf32>
    %321 = arith.addf %276, %320 : vector<16x32xf32>
    %c1_131 = arith.constant 1 : index
    %c256_132 = arith.constant 256 : index
    %322 = vector.load %arg6[%c1_131, %c256_132] : memref<2x416xf32, #tpu.memory_space<vmem>>, vector<1x32xf32>
    %323 = vector.broadcast %322 : vector<1x32xf32> to vector<16x32xf32>
    %324 = arith.addf %321, %323 : vector<16x32xf32>
    %c0_133 = arith.constant 0 : index
    %c64 = arith.constant 64 : index
    %325 = vector.load %arg7[%c0_133, %c64] : memref<1x152xf32, #tpu.memory_space<vmem>>, vector<1x32xf32>
    %c0_134 = arith.constant 0 : index
    %c96_135 = arith.constant 96 : index
    %326 = vector.load %arg7[%c0_134, %c96_135] : memref<1x152xf32, #tpu.memory_space<vmem>>, vector<1x32xf32>
    %cst_136 = arith.constant dense<0.000000e+00> : vector<16xf32>
    %327 = vector.multi_reduction <add>, %324, %cst_136 [1] : vector<16x32xf32> to vector<16xf32>
    %328 = vector.shape_cast %327 : vector<16xf32> to vector<16x1xf32>
    %cst_137 = arith.constant 3.200000e+01 : f32
    %329 = vector.broadcast %cst_137 : f32 to vector<16x1xf32>
    %330 = arith.divf %328, %329 : vector<16x1xf32>
    %331 = vector.broadcast %330 : vector<16x1xf32> to vector<16x32xf32>
    %332 = arith.subf %324, %331 : vector<16x32xf32>
    %333 = arith.mulf %332, %332 : vector<16x32xf32>
    %cst_138 = arith.constant dense<0.000000e+00> : vector<16xf32>
    %334 = vector.multi_reduction <add>, %333, %cst_138 [1] : vector<16x32xf32> to vector<16xf32>
    %335 = vector.shape_cast %334 : vector<16xf32> to vector<16x1xf32>
    %cst_139 = arith.constant 3.200000e+01 : f32
    %336 = vector.broadcast %cst_139 : f32 to vector<16x1xf32>
    %337 = arith.divf %335, %336 : vector<16x1xf32>
    %cst_140 = arith.constant 9.99999974E-6 : f32
    %338 = vector.broadcast %cst_140 : f32 to vector<16x1xf32>
    %339 = arith.addf %337, %338 : vector<16x1xf32>
    %340 = math.rsqrt %339 : vector<16x1xf32>
    %341 = vector.broadcast %340 : vector<16x1xf32> to vector<16x32xf32>
    %342 = arith.mulf %332, %341 : vector<16x32xf32>
    %343 = vector.broadcast %325 : vector<1x32xf32> to vector<16x32xf32>
    %344 = arith.mulf %342, %343 : vector<16x32xf32>
    %345 = vector.broadcast %326 : vector<1x32xf32> to vector<16x32xf32>
    %346 = arith.addf %344, %345 : vector<16x32xf32>
    %c0_141 = arith.constant 0 : index
    %c0_142 = arith.constant 0 : index
    %347 = vector.load %arg3[%c0_141, %c0_142] : memref<32x24xf32, #tpu.memory_space<vmem>>, vector<32x24xf32>
    %cst_143 = arith.constant dense<0.000000e+00> : vector<16x24xf32>
    %348 = tpu.matmul %346, %347, %cst_143 {dimension_numbers = #tpu.dot_dimension_numbers<[1], [0], [0], [1], [0, 0, 1, 1], [], []>} : vector<16x32xf32>, vector<32x24xf32>, vector<16x24xf32> -> vector<16x24xf32>
    %c0_144 = arith.constant 0 : index
    %c128_145 = arith.constant 128 : index
    %349 = vector.load %arg7[%c0_144, %c128_145] : memref<1x152xf32, #tpu.memory_space<vmem>>, vector<1x24xf32>
    %350 = vector.broadcast %349 : vector<1x24xf32> to vector<16x24xf32>
    %351 = arith.addf %348, %350 : vector<16x24xf32>
    %c0_146 = arith.constant 0 : index
    %c0_147 = arith.constant 0 : index
    %352 = vector.load %arg8[%c0_146, %c0_147] : memref<16x24xf32, #tpu.memory_space<vmem>>, vector<16x24xf32>
    tpu.vector_store %arg8[%c0_146, %c0_147], %351 {strides = array<i32>} : memref<16x24xf32, #tpu.memory_space<vmem>>, vector<16x24xf32>,
    return
  }
}

</mosaic_0001>

<llo_original>
// kernel: tpu_custom_call.1
$region0: #{tpu_custom_call.1}
  #allocation0 [shape = 'u32[]', space=smem, size = 0x4, offset = 0x4, fixed_abs, tag = 'smem constant byte address 0x4 - core index']
  #allocation1 [shape = 'u32[144,128]{1,0:T(1,128)}', space=vmem, size = 0x12000, scoped, tag = 'internal scratch']
  %s0 = inlined_call_operand.vmem [shape: f32[16,16], index: 0, kind: input, shape index: {}]
  %s1 = inlined_call_operand.vmem [shape: f32[16,16], index: 1, kind: input, shape index: {}]
  %s2 = inlined_call_operand.vmem [shape: f32[16,32], index: 2, kind: input, shape index: {}]
  %s3 = inlined_call_operand.vmem [shape: f32[32,24], index: 3, kind: input, shape index: {}]
  %s4 = inlined_call_operand.vmem [shape: f32[2,32,256], index: 4, kind: input, shape index: {}]
  %s5 = inlined_call_operand.vmem [shape: f32[2,128,32], index: 5, kind: input, shape index: {}]
  %s6 = inlined_call_operand.vmem [shape: f32[2,416], index: 6, kind: input, shape index: {}]
  %s7 = inlined_call_operand.vmem [shape: f32[1,152], index: 7, kind: input, shape index: {}]
  %s8 = inlined_call_operand.hbm [shape: f32[16,24], index: 8, kind: output, shape index: {}]
  %s9 = sld [smem:[#allocation0]]
  $region42: #{tpu_custom_call.1} parent=0
    _
  %s11 = ssub.s32 1, %s9
  %s12 = scalar_select 0, %s11, %s9
  $region1: #{tpu_custom_call.1} parent=0
    #allocation2 [shape = 'u8[8192]{0}', space=vmem, size = 0x2000, scoped, tag = 'output window, operand 0, single buffered']
    #allocation3 [shape = 's32[1]{0}', space=sflag, size = 0x4, scoped, tag = 'scoped memory for tpu_custom_call.1']
    %13 = vsyncpa [#allocation3], 0
    // Predicated region
    $region2: #{tpu_custom_call.1} parent=1 // pred_check
      _
    $region3: #{tpu_custom_call.1} parent=1 // pred_check_branch
      %15 = sbr.rel (0) target = $region5
    $region4: #{tpu_custom_call.1} parent=1 // pred_region
      _
    $region5: #{tpu_custom_call.1} parent=1 // pred_fallthru
      _
    // Predicated region
    $region6: #{tpu_custom_call.1} parent=1 // pred_check
      _
    $region7: #{tpu_custom_call.1} parent=1 // pred_check_branch
      %17 = sbr.rel (0) target = $region9
    $region8: #{tpu_custom_call.1} parent=1 // pred_region
      _
    $region9: #{tpu_custom_call.1} parent=1 // pred_fallthru
      _
    // Predicated region
    $region10: #{tpu_custom_call.1} parent=1 // pred_check
      _
    $region11: #{tpu_custom_call.1} parent=1 // pred_check_branch
      %19 = sbr.rel (0) target = $region13
    $region12: #{tpu_custom_call.1} parent=1 // pred_region
      _
    $region13: #{tpu_custom_call.1} parent=1 // pred_fallthru
      _
    // Predicated region
    $region14: #{tpu_custom_call.1} parent=1 // pred_check
      _
    $region15: #{tpu_custom_call.1} parent=1 // pred_check_branch
      %21 = sbr.rel (0) target = $region17
    $region16: #{tpu_custom_call.1} parent=1 // pred_region
      _
    $region17: #{tpu_custom_call.1} parent=1 // pred_fallthru
      _
    // Predicated region
    $region18: #{tpu_custom_call.1} parent=1 // pred_check
      _
    $region19: #{tpu_custom_call.1} parent=1 // pred_check_branch
      %23 = sbr.rel (0) target = $region21
    $region20: #{tpu_custom_call.1} parent=1 // pred_region
      _
    $region21: #{tpu_custom_call.1} parent=1 // pred_fallthru
      _
    // Predicated region
    $region22: #{tpu_custom_call.1} parent=1 // pred_check
      _
    $region23: #{tpu_custom_call.1} parent=1 // pred_check_branch
      %25 = sbr.rel (0) target = $region25
    $region24: #{tpu_custom_call.1} parent=1 // pred_region
      _
    $region25: #{tpu_custom_call.1} parent=1 // pred_fallthru
      _
    // Predicated region
    $region26: #{tpu_custom_call.1} parent=1 // pred_check
      _
    $region27: #{tpu_custom_call.1} parent=1 // pred_check_branch
      %27 = sbr.rel (0) target = $region29
    $region28: #{tpu_custom_call.1} parent=1 // pred_region
      _
    $region29: #{tpu_custom_call.1} parent=1 // pred_fallthru
      _
    // Predicated region
    $region30: #{tpu_custom_call.1} parent=1 // pred_check
      _
    $region31: #{tpu_custom_call.1} parent=1 // pred_check_branch
      %29 = sbr.rel (0) target = $region33
    $region32: #{tpu_custom_call.1} parent=1 // pred_region
      _
    $region33: #{tpu_custom_call.1} parent=1 // pred_fallthru
      _
    %v30 = vld [vmem:[%s0] sm:$0xff]
    %v31 = vld [vmem:[%s0 + $0x8] sm:$0xff]
    %v32 = vld [vmem:[%s1] sm:$0xff]
    %v33 = vld [vmem:[%s1 + $0x8] sm:$0xff]
    %v34 = vld [vmem:[%s7] sm:$0x1]
    %v36 = vlaneseq
    %v37 = vshrl.u32 %v36, 7
    %v38 = vsub.s32 0, %v37
    %v39 = vrot.slane %v34, %v38
    %v41 = vmul.f32 %v30, %v39
    %v42 = vmul.f32 %v31, %v39
    %43 = vrot.lane.b32.xlu0 %v39, 112
    %v44 = vpop.permute.xlu0 %43
    %v46 = vadd.f32 %v41, %v44
    %v47 = vadd.f32 %v42, %v44
    %v48 = vld [vmem:[%s2] sm:$0xff]
    %v49 = vld [vmem:[%s2 + $0x8] sm:$0xff]
    %50 = vrot.lane.b32.xlu0 %v39, 96
    %v51 = vpop.permute.xlu0 %50
    %vm53 = vcmask 130048
    %v55 = vsel %vm53, %v46, 0
    %v58 = vsel %vm53, %v47, 0
    %60 = vmatprep.subr.mxu0 0.0
    %61 = vmatpush1.msra.mxu0 %v48
    %62 = vmatprep.subr.mxu0 0.0
    %63 = vmatpush1.msra.mxu0 %v49
    %64 = vmatprep.subr.mxu0 0.0
    %65 = vmatpush1.msra.mxu0 0.0
    %66 = vmatprep.subr.mxu0 0.0
    %67 = vmatpush1.msra.mxu0 0.0
    %68 = vmatprep.subr.mxu0 0.0
    %69 = vmatpush1.msra.mxu0 0.0
    %70 = vmatprep.subr.mxu0 0.0
    %71 = vmatpush1.msra.mxu0 0.0
    %72 = vmatprep.subr.mxu0 0.0
    %73 = vmatpush1.msra.mxu0 0.0
    %74 = vmatprep.subr.mxu0 0.0
    %75 = vmatpush1.msra.mxu0 0.0
    %76 = vmatprep.subr.mxu0 0.0
    %77 = vmatpush1.msra.mxu0 0.0
    %78 = vmatprep.subr.mxu0 0.0
    %79 = vmatpush1.msra.mxu0 0.0
    %80 = vmatprep.subr.mxu0 0.0
    %81 = vmatpush1.msra.mxu0 0.0
    %82 = vmatprep.subr.mxu0 0.0
    %83 = vmatpush1.msra.mxu0 0.0
    %84 = vmatprep.subr.mxu0 0.0
    %85 = vmatpush1.msra.mxu0 0.0
    %86 = vmatprep.subr.mxu0 0.0
    %87 = vmatpush1.msra.mxu0 0.0
    %88 = vmatprep.subr.mxu0 0.0
    %89 = vmatpush1.msra.mxu0 0.0
    %90 = vmatprep.subr.mxu0 0.0
    %91 = vmatpush1.msra.mxu0 0.0
    %92 = vmatprep.subr.mxu0 0.0
    %93 = vmatpush1.msra.mxu0 0.0
    %94 = vmatprep.subr.mxu0 0.0
    %95 = vmatpush1.msra.mxu0 0.0
    %96 = vmatprep.subr.mxu0 0.0
    %97 = vmatpush1.msra.mxu0 0.0
    %98 = vmatprep.subr.mxu0 0.0
    %99 = vmatpush1.msra.mxu0 0.0
    %100 = vmatprep.subr.mxu0 0.0
    %101 = vmatpush1.msra.mxu0 0.0
    %102 = vmatprep.subr.mxu0 0.0
    %103 = vmatpush1.msra.mxu0 0.0
    %104 = vmatprep.subr.mxu0 0.0
    %105 = vmatpush1.msra.mxu0 0.0
    %106 = vmatprep.subr.mxu0 0.0
    %107 = vmatpush1.msra.mxu0 0.0
    %108 = vmatprep.subr.mxu0 0.0
    %109 = vmatpush1.msra.mxu0 0.0
    %110 = vmatprep.subr.mxu0 0.0
    %111 = vmatpush1.msra.mxu0 0.0
    %112 = vmatprep.subr.mxu0 0.0
    %113 = vmatpush1.msra.mxu0 0.0
    %114 = vmatprep.subr.mxu0 0.0
    %115 = vmatpush1.msra.mxu0 0.0
    %116 = vmatprep.subr.mxu0 0.0
    %117 = vmatpush1.msra.mxu0 0.0
    %118 = vmatprep.subr.mxu0 0.0
    %119 = vmatpush1.msra.mxu0 0.0
    %120 = vmatprep.subr.mxu0 0.0
    %121 = vmatpush1.msra.mxu0 0.0
    %122 = vmatprep.subr.mxu0 0.0
    %123 = vmatpush1.msra.mxu0 0.0
    %124 = vmatprep.mubr.f32.mxu0 0.0
    %125 = vmatmul.mubr.f32.gmra.mrb[0].mxu0 %v55
    %v126 = vpop.f32.mrb[0].mxu0
    %v127 = vadd.f32 %v51, %v126
    %v128 = vpop.f32.mrb[0].mxu0
    %129 = vmatprep.mubr.f32.mxu0 0.0
    %130 = vmatmul.mubr.f32.gmra.mrb[0].mxu0 %v58
    %v131 = vpop.f32.mrb[0].mxu0
    %v132 = vadd.f32 %v51, %v131
    %v133 = vpop.f32.mrb[0].mxu0
    %134 = vdwg.mxu0
    %v135 = vld [vmem:[%s6 + $0x4] sm:$0x1]
    %vm136 = vcmask 261120
    %v137 = vsel %vm136, %v127, 0.0
    %138 = vadd.xlane.f32.xlu0 %v137
    %v139 = vpop.xlane.xlu0 %138
    %v140 = vsel %vm136, %v132, 0.0
    %141 = vadd.xlane.f32.xlu0 %v140
    %v142 = vpop.xlane.xlu0 %141
    %v143 = vrcp.pop 32.0
    %v144 = vmul.f32 %v139, %v143
    %v145 = vmul.f32 %v142, %v143
    %v146 = vsub.f32 %v127, %v144
    %v147 = vsub.f32 %v132, %v145
    %v148 = vmul.f32 %v146, %v146
    %v149 = vmul.f32 %v147, %v147
    %v150 = vsel %vm136, %v148, 0.0
    %151 = vadd.xlane.f32.xlu0 %v150
    %v152 = vpop.xlane.xlu0 %151
    %v153 = vsel %vm136, %v149, 0.0
    %154 = vadd.xlane.f32.xlu0 %v153
    %v155 = vpop.xlane.xlu0 %154
    %v156 = vmul.f32 %v152, %v143
    %v157 = vmul.f32 %v155, %v143
    %v158 = vadd.f32 %v156, 1e-05
    %v159 = vadd.f32 %v157, 1e-05
    %v160 = vrsqrt.pop %v158
    %v161 = vrsqrt.pop %v159
    %v162 = vmul.f32 %v146, %v160
    %v163 = vmul.f32 %v147, %v161
    %v164 = vlaneseq
    %v165 = vshrl.u32 %v164, 7
    %v166 = vsub.s32 0, %v165
    %v167 = vrot.slane %v135, %v166
    %169 = vrot.lane.b32.xlu0 %v167, 96
    %v170 = vpop.permute.xlu0 %169
    %v172 = vmul.f32 %v162, %v170
    %v173 = vmul.f32 %v163, %v170
    %174 = vrot.lane.b32.xlu0 %v167, 64
    %v175 = vpop.permute.xlu0 %174
    %v177 = vadd.f32 %v172, %v175
    %v178 = vadd.f32 %v173, %v175
    %v179 = vld [vmem:[%s4] sm:$0xff]
    %v180 = vld [vmem:[%s4 + $0x10] sm:$0xff]
    %v181 = vld [vmem:[%s4 + $0x20] sm:$0xff]
    %v182 = vld [vmem:[%s4 + $0x30] sm:$0xff]
    %v183 = vld [vmem:[%s6] sm:$0x1]
    %v184 = vlaneseq
    %v185 = vshrl.u32 %v184, 7
    %v186 = vsub.s32 0, %v185
    %v187 = vrot.slane %v183, %v186
    %v189 = vsel %vm136, %v177, 0
    %v192 = vsel %vm136, %v178, 0
    %194 = vmatprep.subr.mxu0 0.0
    %195 = vmatpush1.msra.mxu0 %v179
    %196 = vmatprep.subr.mxu0 0.0
    %197 = vmatpush1.msra.mxu0 %v180
    %198 = vmatprep.subr.mxu0 0.0
    %199 = vmatpush1.msra.mxu0 %v181
    %200 = vmatprep.subr.mxu0 0.0
    %201 = vmatpush1.msra.mxu0 %v182
    %202 = vmatprep.subr.mxu0 0.0
    %203 = vmatpush1.msra.mxu0 0.0
    %204 = vmatprep.subr.mxu0 0.0
    %205 = vmatpush1.msra.mxu0 0.0
    %206 = vmatprep.subr.mxu0 0.0
    %207 = vmatpush1.msra.mxu0 0.0
    %208 = vmatprep.subr.mxu0 0.0
    %209 = vmatpush1.msra.mxu0 0.0
    %210 = vmatprep.subr.mxu0 0.0
    %211 = vmatpush1.msra.mxu0 0.0
    %212 = vmatprep.subr.mxu0 0.0
    %213 = vmatpush1.msra.mxu0 0.0
    %214 = vmatprep.subr.mxu0 0.0
    %215 = vmatpush1.msra.mxu0 0.0
    %216 = vmatprep.subr.mxu0 0.0
    %217 = vmatpush1.msra.mxu0 0.0
    %218 = vmatprep.subr.mxu0 0.0
    %219 = vmatpush1.msra.mxu0 0.0
    %220 = vmatprep.subr.mxu0 0.0
    %221 = vmatpush1.msra.mxu0 0.0
    %222 = vmatprep.subr.mxu0 0.0
    %223 = vmatpush1.msra.mxu0 0.0
    %224 = vmatprep.subr.mxu0 0.0
    %225 = vmatpush1.msra.mxu0 0.0
    %226 = vmatprep.subr.mxu0 0.0
    %227 = vmatpush1.msra.mxu0 0.0
    %228 = vmatprep.subr.mxu0 0.0
    %229 = vmatpush1.msra.mxu0 0.0
    %230 = vmatprep.subr.mxu0 0.0
    %231 = vmatpush1.msra.mxu0 0.0
    %232 = vmatprep.subr.mxu0 0.0
    %233 = vmatpush1.msra.mxu0 0.0
    %234 = vmatprep.subr.mxu0 0.0
    %235 = vmatpush1.msra.mxu0 0.0
    %236 = vmatprep.subr.mxu0 0.0
    %237 = vmatpush1.msra.mxu0 0.0
    %238 = vmatprep.subr.mxu0 0.0
    %239 = vmatpush1.msra.mxu0 0.0
    %240 = vmatprep.subr.mxu0 0.0
    %241 = vmatpush1.msra.mxu0 0.0
    %242 = vmatprep.subr.mxu0 0.0
    %243 = vmatpush1.msra.mxu0 0.0
    %244 = vmatprep.subr.mxu0 0.0
    %245 = vmatpush1.msra.mxu0 0.0
    %246 = vmatprep.subr.mxu0 0.0
    %247 = vmatpush1.msra.mxu0 0.0
    %248 = vmatprep.subr.mxu0 0.0
    %249 = vmatpush1.msra.mxu0 0.0
    %250 = vmatprep.subr.mxu0 0.0
    %251 = vmatpush1.msra.mxu0 0.0
    %252 = vmatprep.subr.mxu0 0.0
    %253 = vmatpush1.msra.mxu0 0.0
    %254 = vmatprep.subr.mxu0 0.0
    %255 = vmatpush1.msra.mxu0 0.0
    %256 = vmatprep.subr.mxu0 0.0
    %257 = vmatpush1.msra.mxu0 0.0
    %258 = vmatprep.mubr.f32.mxu0 0.0
    %259 = vmatmul.mubr.f32.gmra.mrb[0].mxu0 %v189
    %v260 = vpop.f32.mrb[0].mxu0
    %v261 = vadd.f32 %v187, %v260
    %v262 = vpop.f32.mrb[0].mxu0
    %263 = vmatprep.mubr.f32.mxu0 0.0
    %264 = vmatmul.mubr.f32.gmra.mrb[0].mxu0 %v192
    %v265 = vpop.f32.mrb[0].mxu0
    %v266 = vadd.f32 %v187, %v265
    %v267 = vpop.f32.mrb[0].mxu0
    %268 = vdwg.mxu0
    %271 = vrot.lane.b32.xlu0 %v261, 96
    %v272 = vpop.permute.xlu0 %271
    %273 = vrot.lane.b32.xlu0 %v266, 96
    %v274 = vpop.permute.xlu0 %273
    %vm275 = vcmask 64512
    %v276 = vsel %vm275, %v261, 0
    %v278 = vsel %vm275, %v266, 0
    %v280 = vsel %vm275, %v272, 0
    %v282 = vsel %vm275, %v274, 0
    %284 = vmatprep.subr.mxu0 0.0
    %285 = vmatpush1.xpose.msra.mxu0 %v280
    %286 = vmatprep.subr.mxu0 0.0
    %287 = vmatpush1.xpose.msra.mxu0 %v282
    %288 = vmatprep.subr.mxu0 0.0
    %289 = vmatpush1.xpose.msra.mxu0 0.0
    %290 = vmatprep.subr.mxu0 0.0
    %291 = vmatpush1.xpose.msra.mxu0 0.0
    %292 = vmatprep.subr.mxu0 0.0
    %293 = vmatpush1.xpose.msra.mxu0 0.0
    %294 = vmatprep.subr.mxu0 0.0
    %295 = vmatpush1.xpose.msra.mxu0 0.0
    %296 = vmatprep.subr.mxu0 0.0
    %297 = vmatpush1.xpose.msra.mxu0 0.0
    %298 = vmatprep.subr.mxu0 0.0
    %299 = vmatpush1.xpose.msra.mxu0 0.0
    %300 = vmatprep.subr.mxu0 0.0
    %301 = vmatpush1.xpose.msra.mxu0 0.0
    %302 = vmatprep.subr.mxu0 0.0
    %303 = vmatpush1.xpose.msra.mxu0 0.0
    %304 = vmatprep.subr.mxu0 0.0
    %305 = vmatpush1.xpose.msra.mxu0 0.0
    %306 = vmatprep.subr.mxu0 0.0
    %307 = vmatpush1.xpose.msra.mxu0 0.0
    %308 = vmatprep.subr.mxu0 0.0
    %309 = vmatpush1.xpose.msra.mxu0 0.0
    %310 = vmatprep.subr.mxu0 0.0
    %311 = vmatpush1.xpose.msra.mxu0 0.0
    %312 = vmatprep.subr.mxu0 0.0
    %313 = vmatpush1.xpose.msra.mxu0 0.0
    %314 = vmatprep.subr.mxu0 0.0
    %315 = vmatpush1.xpose.msra.mxu0 0.0
    %316 = vmatprep.subr.mxu0 0.0
    %317 = vmatpush1.xpose.msra.mxu0 0.0
    %318 = vmatprep.subr.mxu0 0.0
    %319 = vmatpush1.xpose.msra.mxu0 0.0
    %320 = vmatprep.subr.mxu0 0.0
    %321 = vmatpush1.xpose.msra.mxu0 0.0
    %322 = vmatprep.subr.mxu0 0.0
    %323 = vmatpush1.xpose.msra.mxu0 0.0
    %324 = vmatprep.subr.mxu0 0.0
    %325 = vmatpush1.xpose.msra.mxu0 0.0
    %326 = vmatprep.subr.mxu0 0.0
    %327 = vmatpush1.xpose.msra.mxu0 0.0
    %328 = vmatprep.subr.mxu0 0.0
    %329 = vmatpush1.xpose.msra.mxu0 0.0
    %330 = vmatprep.subr.mxu0 0.0
    %331 = vmatpush1.xpose.msra.mxu0 0.0
    %332 = vmatprep.subr.mxu0 0.0
    %333 = vmatpush1.xpose.msra.mxu0 0.0
    %334 = vmatprep.subr.mxu0 0.0
    %335 = vmatpush1.xpose.msra.mxu0 0.0
    %336 = vmatprep.subr.mxu0 0.0
    %337 = vmatpush1.xpose.msra.mxu0 0.0
    %338 = vmatprep.subr.mxu0 0.0
    %339 = vmatpush1.xpose.msra.mxu0 0.0
    %340 = vmatprep.subr.mxu0 0.0
    %341 = vmatpush1.xpose.msra.mxu0 0.0
    %342 = vmatprep.subr.mxu0 0.0
    %343 = vmatpush1.xpose.msra.mxu0 0.0
    %344 = vmatprep.subr.mxu0 0.0
    %345 = vmatpush1.xpose.msra.mxu0 0.0
    %346 = vmatprep.subr.mxu0 0.0
    %347 = vmatpush1.xpose.msra.mxu0 0.0
    %348 = vmatprep.mubr.f32.mxu0 0.0
    %349 = vmatmul.mubr.f32.gmra.mrb[0].mxu0 %v276
    %v350 = vpop.f32.mrb[0].mxu0
    %v351 = vadd.f32 0.0, %v350
    %v352 = vpop.f32.mrb[0].mxu0
    %353 = vmatprep.mubr.f32.mxu0 0.0
    %354 = vmatmul.mubr.f32.gmra.mrb[0].mxu0 %v278
    %v355 = vpop.f32.mrb[0].mxu0
    %v356 = vadd.f32 0.0, %v355
    %v357 = vpop.f32.mrb[0].mxu0
    %358 = vdwg.mxu0
    %v359 = vmul.f32 %v351, 0.35355338
    %v360 = vmul.f32 %v356, 0.35355338
    %v361 = vadd.f32 %v359, %v32
    %v362 = vadd.f32 %v360, %v33
    %v363 = vsel %vm53, %v361, -inf
    %364 = vmax.xlane.f32.xlu0 %v363
    %v365 = vpop.xlane.xlu0 %364
    %v366 = vsel %vm53, %v362, -inf
    %367 = vmax.xlane.f32.xlu0 %v366
    %v368 = vpop.xlane.xlu0 %367
    %v369 = vsub.f32 %v361, %v365
    %v370 = vsub.f32 %v362, %v368
    %v371 = vmul.f32 %v369, 1.442695
    %v372 = vpow.pop %v371
    %v373 = vmul.f32 %v370, 1.442695
    %v374 = vpow.pop %v373
    %v375 = vsel %vm53, %v372, 0.0
    %376 = vadd.xlane.f32.xlu0 %v375
    %v377 = vpop.xlane.xlu0 %376
    %v378 = vsel %vm53, %v374, 0.0
    %379 = vadd.xlane.f32.xlu0 %v378
    %v380 = vpop.xlane.xlu0 %379
    %v381 = vrcp.pop %v377
    %v382 = vrcp.pop %v380
    %v383 = vmul.f32 %v372, %v381
    %v384 = vmul.f32 %v374, %v382
    %385 = vrot.lane.b32.xlu0 %v261, 64
    %v386 = vpop.permute.xlu0 %385
    %387 = vrot.lane.b32.xlu0 %v266, 64
    %v388 = vpop.permute.xlu0 %387
    %v392 = vsel %vm53, %v383, 0
    %v395 = vsel %vm53, %v384, 0
    %397 = vmatprep.subr.mxu0 0.0
    %398 = vmatpush1.msra.mxu0 %v386
    %399 = vmatprep.subr.mxu0 0.0
    %400 = vmatpush1.msra.mxu0 %v388
    %401 = vmatprep.subr.mxu0 0.0
    %402 = vmatpush1.msra.mxu0 0.0
    %403 = vmatprep.subr.mxu0 0.0
    %404 = vmatpush1.msra.mxu0 0.0
    %405 = vmatprep.subr.mxu0 0.0
    %406 = vmatpush1.msra.mxu0 0.0
    %407 = vmatprep.subr.mxu0 0.0
    %408 = vmatpush1.msra.mxu0 0.0
    %409 = vmatprep.subr.mxu0 0.0
    %410 = vmatpush1.msra.mxu0 0.0
    %411 = vmatprep.subr.mxu0 0.0
    %412 = vmatpush1.msra.mxu0 0.0
    %413 = vmatprep.subr.mxu0 0.0
    %414 = vmatpush1.msra.mxu0 0.0
    %415 = vmatprep.subr.mxu0 0.0
    %416 = vmatpush1.msra.mxu0 0.0
    %417 = vmatprep.subr.mxu0 0.0
    %418 = vmatpush1.msra.mxu0 0.0
    %419 = vmatprep.subr.mxu0 0.0
    %420 = vmatpush1.msra.mxu0 0.0
    %421 = vmatprep.subr.mxu0 0.0
    %422 = vmatpush1.msra.mxu0 0.0
    %423 = vmatprep.subr.mxu0 0.0
    %424 = vmatpush1.msra.mxu0 0.0
    %425 = vmatprep.subr.mxu0 0.0
    %426 = vmatpush1.msra.mxu0 0.0
    %427 = vmatprep.subr.mxu0 0.0
    %428 = vmatpush1.msra.mxu0 0.0
    %429 = vmatprep.subr.mxu0 0.0
    %430 = vmatpush1.msra.mxu0 0.0
    %431 = vmatprep.subr.mxu0 0.0
    %432 = vmatpush1.msra.mxu0 0.0
    %433 = vmatprep.subr.mxu0 0.0
    %434 = vmatpush1.msra.mxu0 0.0
    %435 = vmatprep.subr.mxu0 0.0
    %436 = vmatpush1.msra.mxu0 0.0
    %437 = vmatprep.subr.mxu0 0.0
    %438 = vmatpush1.msra.mxu0 0.0
    %439 = vmatprep.subr.mxu0 0.0
    %440 = vmatpush1.msra.mxu0 0.0
    %441 = vmatprep.subr.mxu0 0.0
    %442 = vmatpush1.msra.mxu0 0.0
    %443 = vmatprep.subr.mxu0 0.0
    %444 = vmatpush1.msra.mxu0 0.0
    %445 = vmatprep.subr.mxu0 0.0
    %446 = vmatpush1.msra.mxu0 0.0
    %447 = vmatprep.subr.mxu0 0.0
    %448 = vmatpush1.msra.mxu0 0.0
    %449 = vmatprep.subr.mxu0 0.0
    %450 = vmatpush1.msra.mxu0 0.0
    %451 = vmatprep.subr.mxu0 0.0
    %452 = vmatpush1.msra.mxu0 0.0
    %453 = vmatprep.subr.mxu0 0.0
    %454 = vmatpush1.msra.mxu0 0.0
    %455 = vmatprep.subr.mxu0 0.0
    %456 = vmatpush1.msra.mxu0 0.0
    %457 = vmatprep.subr.mxu0 0.0
    %458 = vmatpush1.msra.mxu0 0.0
    %459 = vmatprep.subr.mxu0 0.0
    %460 = vmatpush1.msra.mxu0 0.0
    %461 = vmatprep.mubr.f32.mxu0 0.0
    %462 = vmatmul.mubr.f32.gmra.mrb[0].mxu0 %v392
    %v463 = vpop.f32.mrb[0].mxu0
    %v464 = vadd.f32 0.0, %v463
    %v465 = vpop.f32.mrb[0].mxu0
    %466 = vmatprep.mubr.f32.mxu0 0.0
    %467 = vmatmul.mubr.f32.gmra.mrb[0].mxu0 %v395
    %v468 = vpop.f32.mrb[0].mxu0
    %v469 = vadd.f32 0.0, %v468
    %v470 = vpop.f32.mrb[0].mxu0
    %471 = vdwg.mxu0
    %472 = vrot.lane.b32.xlu0 %v261, 120
    %v473 = vpop.permute.xlu0 %472
    %474 = vrot.lane.b32.xlu0 %v266, 120
    %v475 = vpop.permute.xlu0 %474
    %476 = vrot.lane.b32.xlu0 %v261, 88
    %v477 = vpop.permute.xlu0 %476
    %478 = vrot.lane.b32.xlu0 %v266, 88
    %v479 = vpop.permute.xlu0 %478
    %v480 = vsel %vm275, %v473, 0
    %v482 = vsel %vm275, %v475, 0
    %v484 = vsel %vm275, %v477, 0
    %v486 = vsel %vm275, %v479, 0
    %488 = vmatprep.subr.mxu0 0.0
    %489 = vmatpush1.xpose.msra.mxu0 %v484
    %490 = vmatprep.subr.mxu0 0.0
    %491 = vmatpush1.xpose.msra.mxu0 %v486
    %492 = vmatprep.subr.mxu0 0.0
    %493 = vmatpush1.xpose.msra.mxu0 0.0
    %494 = vmatprep.subr.mxu0 0.0
    %495 = vmatpush1.xpose.msra.mxu0 0.0
    %496 = vmatprep.subr.mxu0 0.0
    %497 = vmatpush1.xpose.msra.mxu0 0.0
    %498 = vmatprep.subr.mxu0 0.0
    %499 = vmatpush1.xpose.msra.mxu0 0.0
    %500 = vmatprep.subr.mxu0 0.0
    %501 = vmatpush1.xpose.msra.mxu0 0.0
    %502 = vmatprep.subr.mxu0 0.0
    %503 = vmatpush1.xpose.msra.mxu0 0.0
    %504 = vmatprep.subr.mxu0 0.0
    %505 = vmatpush1.xpose.msra.mxu0 0.0
    %506 = vmatprep.subr.mxu0 0.0
    %507 = vmatpush1.xpose.msra.mxu0 0.0
    %508 = vmatprep.subr.mxu0 0.0
    %509 = vmatpush1.xpose.msra.mxu0 0.0
    %510 = vmatprep.subr.mxu0 0.0
    %511 = vmatpush1.xpose.msra.mxu0 0.0
    %512 = vmatprep.subr.mxu0 0.0
    %513 = vmatpush1.xpose.msra.mxu0 0.0
    %514 = vmatprep.subr.mxu0 0.0
    %515 = vmatpush1.xpose.msra.mxu0 0.0
    %516 = vmatprep.subr.mxu0 0.0
    %517 = vmatpush1.xpose.msra.mxu0 0.0
    %518 = vmatprep.subr.mxu0 0.0
    %519 = vmatpush1.xpose.msra.mxu0 0.0
    %520 = vmatprep.subr.mxu0 0.0
    %521 = vmatpush1.xpose.msra.mxu0 0.0
    %522 = vmatprep.subr.mxu0 0.0
    %523 = vmatpush1.xpose.msra.mxu0 0.0
    %524 = vmatprep.subr.mxu0 0.0
    %525 = vmatpush1.xpose.msra.mxu0 0.0
    %526 = vmatprep.subr.mxu0 0.0
    %527 = vmatpush1.xpose.msra.mxu0 0.0
    %528 = vmatprep.subr.mxu0 0.0
    %529 = vmatpush1.xpose.msra.mxu0 0.0
    %530 = vmatprep.subr.mxu0 0.0
    %531 = vmatpush1.xpose.msra.mxu0 0.0
    %532 = vmatprep.subr.mxu0 0.0
    %533 = vmatpush1.xpose.msra.mxu0 0.0
    %534 = vmatprep.subr.mxu0 0.0
    %535 = vmatpush1.xpose.msra.mxu0 0.0
    %536 = vmatprep.subr.mxu0 0.0
    %537 = vmatpush1.xpose.msra.mxu0 0.0
    %538 = vmatprep.subr.mxu0 0.0
    %539 = vmatpush1.xpose.msra.mxu0 0.0
    %540 = vmatprep.subr.mxu0 0.0
    %541 = vmatpush1.xpose.msra.mxu0 0.0
    %542 = vmatprep.subr.mxu0 0.0
    %543 = vmatpush1.xpose.msra.mxu0 0.0
    %544 = vmatprep.subr.mxu0 0.0
    %545 = vmatpush1.xpose.msra.mxu0 0.0
    %546 = vmatprep.subr.mxu0 0.0
    %547 = vmatpush1.xpose.msra.mxu0 0.0
    %548 = vmatprep.subr.mxu0 0.0
    %549 = vmatpush1.xpose.msra.mxu0 0.0
    %550 = vmatprep.subr.mxu0 0.0
    %551 = vmatpush1.xpose.msra.mxu0 0.0
    %552 = vmatprep.mubr.f32.mxu0 0.0
    %553 = vmatmul.mubr.f32.gmra.mrb[0].mxu0 %v480
    %v554 = vpop.f32.mrb[0].mxu0
    %v555 = vadd.f32 0.0, %v554
    %v556 = vpop.f32.mrb[0].mxu0
    %557 = vmatprep.mubr.f32.mxu0 0.0
    %558 = vmatmul.mubr.f32.gmra.mrb[0].mxu0 %v482
    %v559 = vpop.f32.mrb[0].mxu0
    %v560 = vadd.f32 0.0, %v559
    %v561 = vpop.f32.mrb[0].mxu0
    %562 = vdwg.mxu0
    %v563 = vmul.f32 %v555, 0.35355338
    %v564 = vmul.f32 %v560, 0.35355338
    %v565 = vadd.f32 %v563, %v32
    %v566 = vadd.f32 %v564, %v33
    %v567 = vsel %vm53, %v565, -inf
    %568 = vmax.xlane.f32.xlu0 %v567
    %v569 = vpop.xlane.xlu0 %568
    %v570 = vsel %vm53, %v566, -inf
    %571 = vmax.xlane.f32.xlu0 %v570
    %v572 = vpop.xlane.xlu0 %571
    %v573 = vsub.f32 %v565, %v569
    %v574 = vsub.f32 %v566, %v572
    %v575 = vmul.f32 %v573, 1.442695
    %v576 = vpow.pop %v575
    %v577 = vmul.f32 %v574, 1.442695
    %v578 = vpow.pop %v577
    %v579 = vsel %vm53, %v576, 0.0
    %580 = vadd.xlane.f32.xlu0 %v579
    %v581 = vpop.xlane.xlu0 %580
    %v582 = vsel %vm53, %v578, 0.0
    %583 = vadd.xlane.f32.xlu0 %v582
    %v584 = vpop.xlane.xlu0 %583
    %v585 = vrcp.pop %v581
    %v586 = vrcp.pop %v584
    %v587 = vmul.f32 %v576, %v585
    %v588 = vmul.f32 %v578, %v586
    %589 = vrot.lane.b32.xlu0 %v261, 56
    %v590 = vpop.permute.xlu0 %589
    %591 = vrot.lane.b32.xlu0 %v266, 56
    %v592 = vpop.permute.xlu0 %591
    %v596 = vsel %vm53, %v587, 0
    %v599 = vsel %vm53, %v588, 0
    %601 = vmatprep.subr.mxu0 0.0
    %602 = vmatpush1.msra.mxu0 %v590
    %603 = vmatprep.subr.mxu0 0.0
    %604 = vmatpush1.msra.mxu0 %v592
    %605 = vmatprep.subr.mxu0 0.0
    %606 = vmatpush1.msra.mxu0 0.0
    %607 = vmatprep.subr.mxu0 0.0
    %608 = vmatpush1.msra.mxu0 0.0
    %609 = vmatprep.subr.mxu0 0.0
    %610 = vmatpush1.msra.mxu0 0.0
    %611 = vmatprep.subr.mxu0 0.0
    %612 = vmatpush1.msra.mxu0 0.0
    %613 = vmatprep.subr.mxu0 0.0
    %614 = vmatpush1.msra.mxu0 0.0
    %615 = vmatprep.subr.mxu0 0.0
    %616 = vmatpush1.msra.mxu0 0.0
    %617 = vmatprep.subr.mxu0 0.0
    %618 = vmatpush1.msra.mxu0 0.0
    %619 = vmatprep.subr.mxu0 0.0
    %620 = vmatpush1.msra.mxu0 0.0
    %621 = vmatprep.subr.mxu0 0.0
    %622 = vmatpush1.msra.mxu0 0.0
    %623 = vmatprep.subr.mxu0 0.0
    %624 = vmatpush1.msra.mxu0 0.0
    %625 = vmatprep.subr.mxu0 0.0
    %626 = vmatpush1.msra.mxu0 0.0
    %627 = vmatprep.subr.mxu0 0.0
    %628 = vmatpush1.msra.mxu0 0.0
    %629 = vmatprep.subr.mxu0 0.0
    %630 = vmatpush1.msra.mxu0 0.0
    %631 = vmatprep.subr.mxu0 0.0
    %632 = vmatpush1.msra.mxu0 0.0
    %633 = vmatprep.subr.mxu0 0.0
    %634 = vmatpush1.msra.mxu0 0.0
    %635 = vmatprep.subr.mxu0 0.0
    %636 = vmatpush1.msra.mxu0 0.0
    %637 = vmatprep.subr.mxu0 0.0
    %638 = vmatpush1.msra.mxu0 0.0
    %639 = vmatprep.subr.mxu0 0.0
    %640 = vmatpush1.msra.mxu0 0.0
    %641 = vmatprep.subr.mxu0 0.0
    %642 = vmatpush1.msra.mxu0 0.0
    %643 = vmatprep.subr.mxu0 0.0
    %644 = vmatpush1.msra.mxu0 0.0
    %645 = vmatprep.subr.mxu0 0.0
    %646 = vmatpush1.msra.mxu0 0.0
    %647 = vmatprep.subr.mxu0 0.0
    %648 = vmatpush1.msra.mxu0 0.0
    %649 = vmatprep.subr.mxu0 0.0
    %650 = vmatpush1.msra.mxu0 0.0
    %651 = vmatprep.subr.mxu0 0.0
    %652 = vmatpush1.msra.mxu0 0.0
    %653 = vmatprep.subr.mxu0 0.0
    %654 = vmatpush1.msra.mxu0 0.0
    %655 = vmatprep.subr.mxu0 0.0
    %656 = vmatpush1.msra.mxu0 0.0
    %657 = vmatprep.subr.mxu0 0.0
    %658 = vmatpush1.msra.mxu0 0.0
    %659 = vmatprep.subr.mxu0 0.0
    %660 = vmatpush1.msra.mxu0 0.0
    %661 = vmatprep.subr.mxu0 0.0
    %662 = vmatpush1.msra.mxu0 0.0
    %663 = vmatprep.subr.mxu0 0.0
    %664 = vmatpush1.msra.mxu0 0.0
    %665 = vmatprep.mubr.f32.mxu0 0.0
    %666 = vmatmul.mubr.f32.gmra.mrb[0].mxu0 %v596
    %v667 = vpop.f32.mrb[0].mxu0
    %v668 = vadd.f32 0.0, %v667
    %v669 = vpop.f32.mrb[0].mxu0
    %670 = vmatprep.mubr.f32.mxu0 0.0
    %671 = vmatmul.mubr.f32.gmra.mrb[0].mxu0 %v599
    %v672 = vpop.f32.mrb[0].mxu0
    %v673 = vadd.f32 0.0, %v672
    %v674 = vpop.f32.mrb[0].mxu0
    %675 = vdwg.mxu0
    %676 = vrot.lane.b32.xlu0 %v261, 112
    %v677 = vpop.permute.xlu0 %676
    %678 = vrot.lane.b32.xlu0 %v266, 112
    %v679 = vpop.permute.xlu0 %678
    %680 = vrot.lane.b32.xlu0 %v261, 80
    %v681 = vpop.permute.xlu0 %680
    %682 = vrot.lane.b32.xlu0 %v266, 80
    %v683 = vpop.permute.xlu0 %682
    %v684 = vsel %vm275, %v677, 0
    %v686 = vsel %vm275, %v679, 0
    %v688 = vsel %vm275, %v681, 0
    %v690 = vsel %vm275, %v683, 0
    %692 = vmatprep.subr.mxu0 0.0
    %693 = vmatpush1.xpose.msra.mxu0 %v688
    %694 = vmatprep.subr.mxu0 0.0
    %695 = vmatpush1.xpose.msra.mxu0 %v690
    %696 = vmatprep.subr.mxu0 0.0
    %697 = vmatpush1.xpose.msra.mxu0 0.0
    %698 = vmatprep.subr.mxu0 0.0
    %699 = vmatpush1.xpose.msra.mxu0 0.0
    %700 = vmatprep.subr.mxu0 0.0
    %701 = vmatpush1.xpose.msra.mxu0 0.0
    %702 = vmatprep.subr.mxu0 0.0
    %703 = vmatpush1.xpose.msra.mxu0 0.0
    %704 = vmatprep.subr.mxu0 0.0
    %705 = vmatpush1.xpose.msra.mxu0 0.0
    %706 = vmatprep.subr.mxu0 0.0
    %707 = vmatpush1.xpose.msra.mxu0 0.0
    %708 = vmatprep.subr.mxu0 0.0
    %709 = vmatpush1.xpose.msra.mxu0 0.0
    %710 = vmatprep.subr.mxu0 0.0
    %711 = vmatpush1.xpose.msra.mxu0 0.0
    %712 = vmatprep.subr.mxu0 0.0
    %713 = vmatpush1.xpose.msra.mxu0 0.0
    %714 = vmatprep.subr.mxu0 0.0
    %715 = vmatpush1.xpose.msra.mxu0 0.0
    %716 = vmatprep.subr.mxu0 0.0
    %717 = vmatpush1.xpose.msra.mxu0 0.0
    %718 = vmatprep.subr.mxu0 0.0
    %719 = vmatpush1.xpose.msra.mxu0 0.0
    %720 = vmatprep.subr.mxu0 0.0
    %721 = vmatpush1.xpose.msra.mxu0 0.0
    %722 = vmatprep.subr.mxu0 0.0
    %723 = vmatpush1.xpose.msra.mxu0 0.0
    %724 = vmatprep.subr.mxu0 0.0
    %725 = vmatpush1.xpose.msra.mxu0 0.0
    %726 = vmatprep.subr.mxu0 0.0
    %727 = vmatpush1.xpose.msra.mxu0 0.0
    %728 = vmatprep.subr.mxu0 0.0
    %729 = vmatpush1.xpose.msra.mxu0 0.0
    %730 = vmatprep.subr.mxu0 0.0
    %731 = vmatpush1.xpose.msra.mxu0 0.0
    %732 = vmatprep.subr.mxu0 0.0
    %733 = vmatpush1.xpose.msra.mxu0 0.0
    %734 = vmatprep.subr.mxu0 0.0
    %735 = vmatpush1.xpose.msra.mxu0 0.0
    %736 = vmatprep.subr.mxu0 0.0
    %737 = vmatpush1.xpose.msra.mxu0 0.0
    %738 = vmatprep.subr.mxu0 0.0
    %739 = vmatpush1.xpose.msra.mxu0 0.0
    %740 = vmatprep.subr.mxu0 0.0
    %741 = vmatpush1.xpose.msra.mxu0 0.0
    %742 = vmatprep.subr.mxu0 0.0
    %743 = vmatpush1.xpose.msra.mxu0 0.0
    %744 = vmatprep.subr.mxu0 0.0
    %745 = vmatpush1.xpose.msra.mxu0 0.0
    %746 = vmatprep.subr.mxu0 0.0
    %747 = vmatpush1.xpose.msra.mxu0 0.0
    %748 = vmatprep.subr.mxu0 0.0
    %749 = vmatpush1.xpose.msra.mxu0 0.0
    %750 = vmatprep.subr.mxu0 0.0
    %751 = vmatpush1.xpose.msra.mxu0 0.0
    %752 = vmatprep.subr.mxu0 0.0
    %753 = vmatpush1.xpose.msra.mxu0 0.0
    %754 = vmatprep.subr.mxu0 0.0
    %755 = vmatpush1.xpose.msra.mxu0 0.0
    %756 = vmatprep.mubr.f32.mxu0 0.0
    %757 = vmatmul.mubr.f32.gmra.mrb[0].mxu0 %v684
    %v758 = vpop.f32.mrb[0].mxu0
    %v759 = vadd.f32 0.0, %v758
    %v760 = vpop.f32.mrb[0].mxu0
    %761 = vmatprep.mubr.f32.mxu0 0.0
    %762 = vmatmul.mubr.f32.gmra.mrb[0].mxu0 %v686
    %v763 = vpop.f32.mrb[0].mxu0
    %v764 = vadd.f32 0.0, %v763
    %v765 = vpop.f32.mrb[0].mxu0
    %766 = vdwg.mxu0
    %v767 = vmul.f32 %v759, 0.35355338
    %v768 = vmul.f32 %v764, 0.35355338
    %v769 = vadd.f32 %v767, %v32
    %v770 = vadd.f32 %v768, %v33
    %v771 = vsel %vm53, %v769, -inf
    %772 = vmax.xlane.f32.xlu0 %v771
    %v773 = vpop.xlane.xlu0 %772
    %v774 = vsel %vm53, %v770, -inf
    %775 = vmax.xlane.f32.xlu0 %v774
    %v776 = vpop.xlane.xlu0 %775
    %v777 = vsub.f32 %v769, %v773
    %v778 = vsub.f32 %v770, %v776
    %v779 = vmul.f32 %v777, 1.442695
    %v780 = vpow.pop %v779
    %v781 = vmul.f32 %v778, 1.442695
    %v782 = vpow.pop %v781
    %v783 = vsel %vm53, %v780, 0.0
    %784 = vadd.xlane.f32.xlu0 %v783
    %v785 = vpop.xlane.xlu0 %784
    %v786 = vsel %vm53, %v782, 0.0
    %787 = vadd.xlane.f32.xlu0 %v786
    %v788 = vpop.xlane.xlu0 %787
    %v789 = vrcp.pop %v785
    %v790 = vrcp.pop %v788
    %v791 = vmul.f32 %v780, %v789
    %v792 = vmul.f32 %v782, %v790
    %793 = vrot.lane.b32.xlu0 %v261, 48
    %v794 = vpop.permute.xlu0 %793
    %795 = vrot.lane.b32.xlu0 %v266, 48
    %v796 = vpop.permute.xlu0 %795
    %v800 = vsel %vm53, %v791, 0
    %v803 = vsel %vm53, %v792, 0
    %805 = vmatprep.subr.mxu0 0.0
    %806 = vmatpush1.msra.mxu0 %v794
    %807 = vmatprep.subr.mxu0 0.0
    %808 = vmatpush1.msra.mxu0 %v796
    %809 = vmatprep.subr.mxu0 0.0
    %810 = vmatpush1.msra.mxu0 0.0
    %811 = vmatprep.subr.mxu0 0.0
    %812 = vmatpush1.msra.mxu0 0.0
    %813 = vmatprep.subr.mxu0 0.0
    %814 = vmatpush1.msra.mxu0 0.0
    %815 = vmatprep.subr.mxu0 0.0
    %816 = vmatpush1.msra.mxu0 0.0
    %817 = vmatprep.subr.mxu0 0.0
    %818 = vmatpush1.msra.mxu0 0.0
    %819 = vmatprep.subr.mxu0 0.0
    %820 = vmatpush1.msra.mxu0 0.0
    %821 = vmatprep.subr.mxu0 0.0
    %822 = vmatpush1.msra.mxu0 0.0
    %823 = vmatprep.subr.mxu0 0.0
    %824 = vmatpush1.msra.mxu0 0.0
    %825 = vmatprep.subr.mxu0 0.0
    %826 = vmatpush1.msra.mxu0 0.0
    %827 = vmatprep.subr.mxu0 0.0
    %828 = vmatpush1.msra.mxu0 0.0
    %829 = vmatprep.subr.mxu0 0.0
    %830 = vmatpush1.msra.mxu0 0.0
    %831 = vmatprep.subr.mxu0 0.0
    %832 = vmatpush1.msra.mxu0 0.0
    %833 = vmatprep.subr.mxu0 0.0
    %834 = vmatpush1.msra.mxu0 0.0
    %835 = vmatprep.subr.mxu0 0.0
    %836 = vmatpush1.msra.mxu0 0.0
    %837 = vmatprep.subr.mxu0 0.0
    %838 = vmatpush1.msra.mxu0 0.0
    %839 = vmatprep.subr.mxu0 0.0
    %840 = vmatpush1.msra.mxu0 0.0
    %841 = vmatprep.subr.mxu0 0.0
    %842 = vmatpush1.msra.mxu0 0.0
    %843 = vmatprep.subr.mxu0 0.0
    %844 = vmatpush1.msra.mxu0 0.0
    %845 = vmatprep.subr.mxu0 0.0
    %846 = vmatpush1.msra.mxu0 0.0
    %847 = vmatprep.subr.mxu0 0.0
    %848 = vmatpush1.msra.mxu0 0.0
    %849 = vmatprep.subr.mxu0 0.0
    %850 = vmatpush1.msra.mxu0 0.0
    %851 = vmatprep.subr.mxu0 0.0
    %852 = vmatpush1.msra.mxu0 0.0
    %853 = vmatprep.subr.mxu0 0.0
    %854 = vmatpush1.msra.mxu0 0.0
    %855 = vmatprep.subr.mxu0 0.0
    %856 = vmatpush1.msra.mxu0 0.0
    %857 = vmatprep.subr.mxu0 0.0
    %858 = vmatpush1.msra.mxu0 0.0
    %859 = vmatprep.subr.mxu0 0.0
    %860 = vmatpush1.msra.mxu0 0.0
    %861 = vmatprep.subr.mxu0 0.0
    %862 = vmatpush1.msra.mxu0 0.0
    %863 = vmatprep.subr.mxu0 0.0
    %864 = vmatpush1.msra.mxu0 0.0
    %865 = vmatprep.subr.mxu0 0.0
    %866 = vmatpush1.msra.mxu0 0.0
    %867 = vmatprep.subr.mxu0 0.0
    %868 = vmatpush1.msra.mxu0 0.0
    %869 = vmatprep.mubr.f32.mxu0 0.0
    %870 = vmatmul.mubr.f32.gmra.mrb[0].mxu0 %v800
    %v871 = vpop.f32.mrb[0].mxu0
    %v872 = vadd.f32 0.0, %v871
    %v873 = vpop.f32.mrb[0].mxu0
    %874 = vmatprep.mubr.f32.mxu0 0.0
    %875 = vmatmul.mubr.f32.gmra.mrb[0].mxu0 %v803
    %v876 = vpop.f32.mrb[0].mxu0
    %v877 = vadd.f32 0.0, %v876
    %v878 = vpop.f32.mrb[0].mxu0
    %879 = vdwg.mxu0
    %880 = vrot.lane.b32.xlu0 %v261, 104
    %v881 = vpop.permute.xlu0 %880
    %882 = vrot.lane.b32.xlu0 %v266, 104
    %v883 = vpop.permute.xlu0 %882
    %884 = vrot.lane.b32.xlu0 %v261, 72
    %v885 = vpop.permute.xlu0 %884
    %886 = vrot.lane.b32.xlu0 %v266, 72
    %v887 = vpop.permute.xlu0 %886
    %v888 = vsel %vm275, %v881, 0
    %v890 = vsel %vm275, %v883, 0
    %v892 = vsel %vm275, %v885, 0
    %v894 = vsel %vm275, %v887, 0
    %896 = vmatprep.subr.mxu0 0.0
    %897 = vmatpush1.xpose.msra.mxu0 %v892
    %898 = vmatprep.subr.mxu0 0.0
    %899 = vmatpush1.xpose.msra.mxu0 %v894
    %900 = vmatprep.subr.mxu0 0.0
    %901 = vmatpush1.xpose.msra.mxu0 0.0
    %902 = vmatprep.subr.mxu0 0.0
    %903 = vmatpush1.xpose.msra.mxu0 0.0
    %904 = vmatprep.subr.mxu0 0.0
    %905 = vmatpush1.xpose.msra.mxu0 0.0
    %906 = vmatprep.subr.mxu0 0.0
    %907 = vmatpush1.xpose.msra.mxu0 0.0
    %908 = vmatprep.subr.mxu0 0.0
    %909 = vmatpush1.xpose.msra.mxu0 0.0
    %910 = vmatprep.subr.mxu0 0.0
    %911 = vmatpush1.xpose.msra.mxu0 0.0
    %912 = vmatprep.subr.mxu0 0.0
    %913 = vmatpush1.xpose.msra.mxu0 0.0
    %914 = vmatprep.subr.mxu0 0.0
    %915 = vmatpush1.xpose.msra.mxu0 0.0
    %916 = vmatprep.subr.mxu0 0.0
    %917 = vmatpush1.xpose.msra.mxu0 0.0
    %918 = vmatprep.subr.mxu0 0.0
    %919 = vmatpush1.xpose.msra.mxu0 0.0
    %920 = vmatprep.subr.mxu0 0.0
    %921 = vmatpush1.xpose.msra.mxu0 0.0
    %922 = vmatprep.subr.mxu0 0.0
    %923 = vmatpush1.xpose.msra.mxu0 0.0
    %924 = vmatprep.subr.mxu0 0.0
    %925 = vmatpush1.xpose.msra.mxu0 0.0
    %926 = vmatprep.subr.mxu0 0.0
    %927 = vmatpush1.xpose.msra.mxu0 0.0
    %928 = vmatprep.subr.mxu0 0.0
    %929 = vmatpush1.xpose.msra.mxu0 0.0
    %930 = vmatprep.subr.mxu0 0.0
    %931 = vmatpush1.xpose.msra.mxu0 0.0
    %932 = vmatprep.subr.mxu0 0.0
    %933 = vmatpush1.xpose.msra.mxu0 0.0
    %934 = vmatprep.subr.mxu0 0.0
    %935 = vmatpush1.xpose.msra.mxu0 0.0
    %936 = vmatprep.subr.mxu0 0.0
    %937 = vmatpush1.xpose.msra.mxu0 0.0
    %938 = vmatprep.subr.mxu0 0.0
    %939 = vmatpush1.xpose.msra.mxu0 0.0
    %940 = vmatprep.subr.mxu0 0.0
    %941 = vmatpush1.xpose.msra.mxu0 0.0
    %942 = vmatprep.subr.mxu0 0.0
    %943 = vmatpush1.xpose.msra.mxu0 0.0
    %944 = vmatprep.subr.mxu0 0.0
    %945 = vmatpush1.xpose.msra.mxu0 0.0
    %946 = vmatprep.subr.mxu0 0.0
    %947 = vmatpush1.xpose.msra.mxu0 0.0
    %948 = vmatprep.subr.mxu0 0.0
    %949 = vmatpush1.xpose.msra.mxu0 0.0
    %950 = vmatprep.subr.mxu0 0.0
    %951 = vmatpush1.xpose.msra.mxu0 0.0
    %952 = vmatprep.subr.mxu0 0.0
    %953 = vmatpush1.xpose.msra.mxu0 0.0
    %954 = vmatprep.subr.mxu0 0.0
    %955 = vmatpush1.xpose.msra.mxu0 0.0
    %956 = vmatprep.subr.mxu0 0.0
    %957 = vmatpush1.xpose.msra.mxu0 0.0
    %958 = vmatprep.subr.mxu0 0.0
    %959 = vmatpush1.xpose.msra.mxu0 0.0
    %960 = vmatprep.mubr.f32.mxu0 0.0
    %961 = vmatmul.mubr.f32.gmra.mrb[0].mxu0 %v888
    %v962 = vpop.f32.mrb[0].mxu0
    %v963 = vadd.f32 0.0, %v962
    %v964 = vpop.f32.mrb[0].mxu0
    %965 = vmatprep.mubr.f32.mxu0 0.0
    %966 = vmatmul.mubr.f32.gmra.mrb[0].mxu0 %v890
    %v967 = vpop.f32.mrb[0].mxu0
    %v968 = vadd.f32 0.0, %v967
    %v969 = vpop.f32.mrb[0].mxu0
    %970 = vdwg.mxu0
    %v971 = vmul.f32 %v963, 0.35355338
    %v972 = vmul.f32 %v968, 0.35355338
    %v973 = vadd.f32 %v971, %v32
    %v974 = vadd.f32 %v972, %v33
    %v975 = vsel %vm53, %v973, -inf
    %976 = vmax.xlane.f32.xlu0 %v975
    %v977 = vpop.xlane.xlu0 %976
    %v978 = vsel %vm53, %v974, -inf
    %979 = vmax.xlane.f32.xlu0 %v978
    %v980 = vpop.xlane.xlu0 %979
    %v981 = vsub.f32 %v973, %v977
    %v982 = vsub.f32 %v974, %v980
    %v983 = vmul.f32 %v981, 1.442695
    %v984 = vpow.pop %v983
    %v985 = vmul.f32 %v982, 1.442695
    %v986 = vpow.pop %v985
    %v987 = vsel %vm53, %v984, 0.0
    %988 = vadd.xlane.f32.xlu0 %v987
    %v989 = vpop.xlane.xlu0 %988
    %v990 = vsel %vm53, %v986, 0.0
    %991 = vadd.xlane.f32.xlu0 %v990
    %v992 = vpop.xlane.xlu0 %991
    %v993 = vrcp.pop %v989
    %v994 = vrcp.pop %v992
    %v995 = vmul.f32 %v984, %v993
    %v996 = vmul.f32 %v986, %v994
    %997 = vrot.lane.b32.xlu0 %v261, 40
    %v998 = vpop.permute.xlu0 %997
    %999 = vrot.lane.b32.xlu0 %v266, 40
    %v1000 = vpop.permute.xlu0 %999
    %v1004 = vsel %vm53, %v995, 0
    %v1007 = vsel %vm53, %v996, 0
    %1009 = vmatprep.subr.mxu0 0.0
    %1010 = vmatpush1.msra.mxu0 %v998
    %1011 = vmatprep.subr.mxu0 0.0
    %1012 = vmatpush1.msra.mxu0 %v1000
    %1013 = vmatprep.subr.mxu0 0.0
    %1014 = vmatpush1.msra.mxu0 0.0
    %1015 = vmatprep.subr.mxu0 0.0
    %1016 = vmatpush1.msra.mxu0 0.0
    %1017 = vmatprep.subr.mxu0 0.0
    %1018 = vmatpush1.msra.mxu0 0.0
    %1019 = vmatprep.subr.mxu0 0.0
    %1020 = vmatpush1.msra.mxu0 0.0
    %1021 = vmatprep.subr.mxu0 0.0
    %1022 = vmatpush1.msra.mxu0 0.0
    %1023 = vmatprep.subr.mxu0 0.0
    %1024 = vmatpush1.msra.mxu0 0.0
    %1025 = vmatprep.subr.mxu0 0.0
    %1026 = vmatpush1.msra.mxu0 0.0
    %1027 = vmatprep.subr.mxu0 0.0
    %1028 = vmatpush1.msra.mxu0 0.0
    %1029 = vmatprep.subr.mxu0 0.0
    %1030 = vmatpush1.msra.mxu0 0.0
    %1031 = vmatprep.subr.mxu0 0.0
    %1032 = vmatpush1.msra.mxu0 0.0
    %1033 = vmatprep.subr.mxu0 0.0
    %1034 = vmatpush1.msra.mxu0 0.0
    %1035 = vmatprep.subr.mxu0 0.0
    %1036 = vmatpush1.msra.mxu0 0.0
    %1037 = vmatprep.subr.mxu0 0.0
    %1038 = vmatpush1.msra.mxu0 0.0
    %1039 = vmatprep.subr.mxu0 0.0
    %1040 = vmatpush1.msra.mxu0 0.0
    %1041 = vmatprep.subr.mxu0 0.0
    %1042 = vmatpush1.msra.mxu0 0.0
    %1043 = vmatprep.subr.mxu0 0.0
    %1044 = vmatpush1.msra.mxu0 0.0
    %1045 = vmatprep.subr.mxu0 0.0
    %1046 = vmatpush1.msra.mxu0 0.0
    %1047 = vmatprep.subr.mxu0 0.0
    %1048 = vmatpush1.msra.mxu0 0.0
    %1049 = vmatprep.subr.mxu0 0.0
    %1050 = vmatpush1.msra.mxu0 0.0
    %1051 = vmatprep.subr.mxu0 0.0
    %1052 = vmatpush1.msra.mxu0 0.0
    %1053 = vmatprep.subr.mxu0 0.0
    %1054 = vmatpush1.msra.mxu0 0.0
    %1055 = vmatprep.subr.mxu0 0.0
    %1056 = vmatpush1.msra.mxu0 0.0
    %1057 = vmatprep.subr.mxu0 0.0
    %1058 = vmatpush1.msra.mxu0 0.0
    %1059 = vmatprep.subr.mxu0 0.0
    %1060 = vmatpush1.msra.mxu0 0.0
    %1061 = vmatprep.subr.mxu0 0.0
    %1062 = vmatpush1.msra.mxu0 0.0
    %1063 = vmatprep.subr.mxu0 0.0
    %1064 = vmatpush1.msra.mxu0 0.0
    %1065 = vmatprep.subr.mxu0 0.0
    %1066 = vmatpush1.msra.mxu0 0.0
    %1067 = vmatprep.subr.mxu0 0.0
    %1068 = vmatpush1.msra.mxu0 0.0
    %1069 = vmatprep.subr.mxu0 0.0
    %1070 = vmatpush1.msra.mxu0 0.0
    %1071 = vmatprep.subr.mxu0 0.0
    %1072 = vmatpush1.msra.mxu0 0.0
    %1073 = vmatprep.mubr.f32.mxu0 0.0
    %1074 = vmatmul.mubr.f32.gmra.mrb[0].mxu0 %v1004
    %v1075 = vpop.f32.mrb[0].mxu0
    %v1076 = vadd.f32 0.0, %v1075
    %v1077 = vpop.f32.mrb[0].mxu0
    %1078 = vmatprep.mubr.f32.mxu0 0.0
    %1079 = vmatmul.mubr.f32.gmra.mrb[0].mxu0 %v1007
    %v1080 = vpop.f32.mrb[0].mxu0
    %v1081 = vadd.f32 0.0, %v1080
    %v1082 = vpop.f32.mrb[0].mxu0
    %1083 = vdwg.mxu0
    %1086 = vrot.lane.b32.xlu0 %v668, 8
    %v1087 = vpop.permute.xlu0 %1086
    %1088 = vrot.lane.b32.xlu0 %v673, 8
    %v1089 = vpop.permute.xlu0 %1088
    %1094 = vrot.lane.b32.xlu0 %v872, 16
    %v1095 = vpop.permute.xlu0 %1094
    %1096 = vrot.lane.b32.xlu0 %v877, 16
    %v1097 = vpop.permute.xlu0 %1096
    %1102 = vrot.lane.b32.xlu0 %v1076, 24
    %v1103 = vpop.permute.xlu0 %1102
    %1104 = vrot.lane.b32.xlu0 %v1081, 24
    %v1105 = vpop.permute.xlu0 %1104
    %v1108 = vsel %vm275, %v464, %v1087
    %v1109 = vsel %vm275, %v469, %v1089
    %v1110 = vsel %vm53, %v1108, %v1095
    %v1111 = vsel %vm53, %v1109, %v1097
    %vm1112 = vcmask 195584
    %v1113 = vsel %vm1112, %v1110, %v1103
    %v1114 = vsel %vm1112, %v1111, %v1105
    %1119 = vrot.lane.b32.xlu0 %v179, 32
    %v1120 = vpop.permute.xlu0 %1119
    %1121 = vrot.lane.b32.xlu0 %v180, 32
    %v1122 = vpop.permute.xlu0 %1121
    %1123 = vrot.lane.b32.xlu0 %v181, 32
    %v1124 = vpop.permute.xlu0 %1123
    %1125 = vrot.lane.b32.xlu0 %v182, 32
    %v1126 = vpop.permute.xlu0 %1125
    %v1132 = vsel %vm136, %v1113, 0
    %v1135 = vsel %vm136, %v1114, 0
    %1137 = vmatprep.subr.mxu0 0.0
    %1138 = vmatpush1.msra.mxu0 %v1120
    %1139 = vmatprep.subr.mxu0 0.0
    %1140 = vmatpush1.msra.mxu0 %v1122
    %1141 = vmatprep.subr.mxu0 0.0
    %1142 = vmatpush1.msra.mxu0 %v1124
    %1143 = vmatprep.subr.mxu0 0.0
    %1144 = vmatpush1.msra.mxu0 %v1126
    %1145 = vmatprep.subr.mxu0 0.0
    %1146 = vmatpush1.msra.mxu0 0.0
    %1147 = vmatprep.subr.mxu0 0.0
    %1148 = vmatpush1.msra.mxu0 0.0
    %1149 = vmatprep.subr.mxu0 0.0
    %1150 = vmatpush1.msra.mxu0 0.0
    %1151 = vmatprep.subr.mxu0 0.0
    %1152 = vmatpush1.msra.mxu0 0.0
    %1153 = vmatprep.subr.mxu0 0.0
    %1154 = vmatpush1.msra.mxu0 0.0
    %1155 = vmatprep.subr.mxu0 0.0
    %1156 = vmatpush1.msra.mxu0 0.0
    %1157 = vmatprep.subr.mxu0 0.0
    %1158 = vmatpush1.msra.mxu0 0.0
    %1159 = vmatprep.subr.mxu0 0.0
    %1160 = vmatpush1.msra.mxu0 0.0
    %1161 = vmatprep.subr.mxu0 0.0
    %1162 = vmatpush1.msra.mxu0 0.0
    %1163 = vmatprep.subr.mxu0 0.0
    %1164 = vmatpush1.msra.mxu0 0.0
    %1165 = vmatprep.subr.mxu0 0.0
    %1166 = vmatpush1.msra.mxu0 0.0
    %1167 = vmatprep.subr.mxu0 0.0
    %1168 = vmatpush1.msra.mxu0 0.0
    %1169 = vmatprep.subr.mxu0 0.0
    %1170 = vmatpush1.msra.mxu0 0.0
    %1171 = vmatprep.subr.mxu0 0.0
    %1172 = vmatpush1.msra.mxu0 0.0
    %1173 = vmatprep.subr.mxu0 0.0
    %1174 = vmatpush1.msra.mxu0 0.0
    %1175 = vmatprep.subr.mxu0 0.0
    %1176 = vmatpush1.msra.mxu0 0.0
    %1177 = vmatprep.subr.mxu0 0.0
    %1178 = vmatpush1.msra.mxu0 0.0
    %1179 = vmatprep.subr.mxu0 0.0
    %1180 = vmatpush1.msra.mxu0 0.0
    %1181 = vmatprep.subr.mxu0 0.0
    %1182 = vmatpush1.msra.mxu0 0.0
    %1183 = vmatprep.subr.mxu0 0.0
    %1184 = vmatpush1.msra.mxu0 0.0
    %1185 = vmatprep.subr.mxu0 0.0
    %1186 = vmatpush1.msra.mxu0 0.0
    %1187 = vmatprep.subr.mxu0 0.0
    %1188 = vmatpush1.msra.mxu0 0.0
    %1189 = vmatprep.subr.mxu0 0.0
    %1190 = vmatpush1.msra.mxu0 0.0
    %1191 = vmatprep.subr.mxu0 0.0
    %1192 = vmatpush1.msra.mxu0 0.0
    %1193 = vmatprep.subr.mxu0 0.0
    %1194 = vmatpush1.msra.mxu0 0.0
    %1195 = vmatprep.subr.mxu0 0.0
    %1196 = vmatpush1.msra.mxu0 0.0
    %1197 = vmatprep.subr.mxu0 0.0
    %1198 = vmatpush1.msra.mxu0 0.0
    %1199 = vmatprep.subr.mxu0 0.0
    %1200 = vmatpush1.msra.mxu0 0.0
    %1201 = vmatprep.mubr.f32.mxu0 0.0
    %1202 = vmatmul.mubr.f32.gmra.mrb[0].mxu0 %v1132
    %v1203 = vpop.f32.mrb[0].mxu0
    %v1204 = vadd.f32 0.0, %v1203
    %v1205 = vpop.f32.mrb[0].mxu0
    %1206 = vmatprep.mubr.f32.mxu0 0.0
    %1207 = vmatmul.mubr.f32.gmra.mrb[0].mxu0 %v1135
    %v1208 = vpop.f32.mrb[0].mxu0
    %v1209 = vadd.f32 0.0, %v1208
    %v1210 = vpop.f32.mrb[0].mxu0
    %1211 = vdwg.mxu0
    %v1212 = vadd.f32 %v127, %v1204
    %v1213 = vadd.f32 %v132, %v1209
    %1215 = vrot.lane.b32.xlu0 %v187, 32
    %v1216 = vpop.permute.xlu0 %1215
    %v1218 = vadd.f32 %v1212, %v1216
    %v1219 = vadd.f32 %v1213, %v1216
    %v1220 = vld [vmem:[%s6 + $0x6] sm:$0x1]
    %v1221 = vsel %vm136, %v1218, 0.0
    %1222 = vadd.xlane.f32.xlu0 %v1221
    %v1223 = vpop.xlane.xlu0 %1222
    %v1224 = vsel %vm136, %v1219, 0.0
    %1225 = vadd.xlane.f32.xlu0 %v1224
    %v1226 = vpop.xlane.xlu0 %1225
    %v1227 = vmul.f32 %v1223, %v143
    %v1228 = vmul.f32 %v1226, %v143
    %v1229 = vsub.f32 %v1218, %v1227
    %v1230 = vsub.f32 %v1219, %v1228
    %v1231 = vmul.f32 %v1229, %v1229
    %v1232 = vmul.f32 %v1230, %v1230
    %v1233 = vsel %vm136, %v1231, 0.0
    %1234 = vadd.xlane.f32.xlu0 %v1233
    %v1235 = vpop.xlane.xlu0 %1234
    %v1236 = vsel %vm136, %v1232, 0.0
    %1237 = vadd.xlane.f32.xlu0 %v1236
    %v1238 = vpop.xlane.xlu0 %1237
    %v1239 = vmul.f32 %v1235, %v143
    %v1240 = vmul.f32 %v1238, %v143
    %v1241 = vadd.f32 %v1239, 1e-05
    %v1242 = vadd.f32 %v1240, 1e-05
    %v1243 = vrsqrt.pop %v1241
    %v1244 = vrsqrt.pop %v1242
    %v1245 = vmul.f32 %v1229, %v1243
    %v1246 = vmul.f32 %v1230, %v1244
    %1247 = vrot.lane.b32.xlu0 %v167, 32
    %v1248 = vpop.permute.xlu0 %1247
    %v1250 = vmul.f32 %v1245, %v1248
    %v1251 = vmul.f32 %v1246, %v1248
    %v1252 = vlaneseq
    %v1253 = vshrl.u32 %v1252, 7
    %v1254 = vsub.s32 0, %v1253
    %v1255 = vrot.slane %v1220, %v1254
    %v1256 = vadd.f32 %v1250, %v1255
    %v1257 = vadd.f32 %v1251, %v1255
    %v1258 = vld [vmem:[%s4 + $0x8] sm:$0xff]
    %v1259 = vld [vmem:[%s4 + $0x18] sm:$0xff]
    %v1260 = vld [vmem:[%s4 + $0x28] sm:$0xff]
    %v1261 = vld [vmem:[%s4 + $0x38] sm:$0xff]
    %v1262 = vld [vmem:[%s6 + $0x2] sm:$0x1]
    %v1263 = vlaneseq
    %v1264 = vshrl.u32 %v1263, 7
    %v1265 = vsub.s32 0, %v1264
    %v1266 = vrot.slane %v1262, %v1265
    %v1268 = vsel %vm136, %v1256, 0
    %v1271 = vsel %vm136, %v1257, 0
    %1273 = vmatprep.subr.mxu0 0.0
    %1274 = vmatpush1.msra.mxu0 %v1258
    %1275 = vmatprep.subr.mxu0 0.0
    %1276 = vmatpush1.msra.mxu0 %v1259
    %1277 = vmatprep.subr.mxu0 0.0
    %1278 = vmatpush1.msra.mxu0 %v1260
    %1279 = vmatprep.subr.mxu0 0.0
    %1280 = vmatpush1.msra.mxu0 %v1261
    %1281 = vmatprep.subr.mxu0 0.0
    %1282 = vmatpush1.msra.mxu0 0.0
    %1283 = vmatprep.subr.mxu0 0.0
    %1284 = vmatpush1.msra.mxu0 0.0
    %1285 = vmatprep.subr.mxu0 0.0
    %1286 = vmatpush1.msra.mxu0 0.0
    %1287 = vmatprep.subr.mxu0 0.0
    %1288 = vmatpush1.msra.mxu0 0.0
    %1289 = vmatprep.subr.mxu0 0.0
    %1290 = vmatpush1.msra.mxu0 0.0
    %1291 = vmatprep.subr.mxu0 0.0
    %1292 = vmatpush1.msra.mxu0 0.0
    %1293 = vmatprep.subr.mxu0 0.0
    %1294 = vmatpush1.msra.mxu0 0.0
    %1295 = vmatprep.subr.mxu0 0.0
    %1296 = vmatpush1.msra.mxu0 0.0
    %1297 = vmatprep.subr.mxu0 0.0
    %1298 = vmatpush1.msra.mxu0 0.0
    %1299 = vmatprep.subr.mxu0 0.0
    %1300 = vmatpush1.msra.mxu0 0.0
    %1301 = vmatprep.subr.mxu0 0.0
    %1302 = vmatpush1.msra.mxu0 0.0
    %1303 = vmatprep.subr.mxu0 0.0
    %1304 = vmatpush1.msra.mxu0 0.0
    %1305 = vmatprep.subr.mxu0 0.0
    %1306 = vmatpush1.msra.mxu0 0.0
    %1307 = vmatprep.subr.mxu0 0.0
    %1308 = vmatpush1.msra.mxu0 0.0
    %1309 = vmatprep.subr.mxu0 0.0
    %1310 = vmatpush1.msra.mxu0 0.0
    %1311 = vmatprep.subr.mxu0 0.0
    %1312 = vmatpush1.msra.mxu0 0.0
    %1313 = vmatprep.subr.mxu0 0.0
    %1314 = vmatpush1.msra.mxu0 0.0
    %1315 = vmatprep.subr.mxu0 0.0
    %1316 = vmatpush1.msra.mxu0 0.0
    %1317 = vmatprep.subr.mxu0 0.0
    %1318 = vmatpush1.msra.mxu0 0.0
    %1319 = vmatprep.subr.mxu0 0.0
    %1320 = vmatpush1.msra.mxu0 0.0
    %1321 = vmatprep.subr.mxu0 0.0
    %1322 = vmatpush1.msra.mxu0 0.0
    %1323 = vmatprep.subr.mxu0 0.0
    %1324 = vmatpush1.msra.mxu0 0.0
    %1325 = vmatprep.subr.mxu0 0.0
    %1326 = vmatpush1.msra.mxu0 0.0
    %1327 = vmatprep.subr.mxu0 0.0
    %1328 = vmatpush1.msra.mxu0 0.0
    %1329 = vmatprep.subr.mxu0 0.0
    %1330 = vmatpush1.msra.mxu0 0.0
    %1331 = vmatprep.subr.mxu0 0.0
    %1332 = vmatpush1.msra.mxu0 0.0
    %1333 = vmatprep.subr.mxu0 0.0
    %1334 = vmatpush1.msra.mxu0 0.0
    %1335 = vmatprep.subr.mxu0 0.0
    %1336 = vmatpush1.msra.mxu0 0.0
    %1337 = vmatprep.mubr.f32.mxu0 0.0
    %1338 = vmatmul.mubr.f32.gmra.mrb[0].mxu0 %v1268
    %v1339 = vpop.f32.mrb[0].mxu0
    %v1340 = vadd.f32 %v1266, %v1339
    %v1341 = vpop.f32.mrb[0].mxu0
    %1342 = vmatprep.mubr.f32.mxu0 0.0
    %1343 = vmatmul.mubr.f32.gmra.mrb[0].mxu0 %v1271
    %v1344 = vpop.f32.mrb[0].mxu0
    %v1345 = vadd.f32 %v1266, %v1344
    %v1346 = vpop.f32.mrb[0].mxu0
    %1347 = vdwg.mxu0
    %v1348 = vmul.f32 %v1340, 0.5
    %v1349 = vmul.f32 %v1345, 0.5
    %v1350 = vmul.f32 %v1340, 0.044715
    %v1351 = vmul.f32 %v1345, 0.044715
    %v1352 = vmul.f32 %v1350, %v1340
    %v1353 = vmul.f32 %v1351, %v1345
    %v1354 = vmul.f32 %v1352, %v1340
    %v1355 = vmul.f32 %v1353, %v1345
    %v1356 = vadd.f32 %v1340, %v1354
    %v1357 = vadd.f32 %v1345, %v1355
    %v1358 = vmul.f32 %v1356, 0.7978846
    %v1359 = vmul.f32 %v1357, 0.7978846
    %v1360 = vtanh.pop %v1358
    %v1361 = vtanh.pop %v1359
    %v1362 = vadd.f32 %v1360, 1.0
    %v1363 = vadd.f32 %v1361, 1.0
    %v1364 = vmul.f32 %v1348, %v1362
    %v1365 = vmul.f32 %v1349, %v1363
    %v1366 = vld [vmem:[%s5] sm:$0xff]
    %v1367 = vld [vmem:[%s5 + $0x8] sm:$0xff]
    %v1368 = vld [vmem:[%s5 + $0x10] sm:$0xff]
    %v1369 = vld [vmem:[%s5 + $0x18] sm:$0xff]
    %v1370 = vld [vmem:[%s5 + $0x20] sm:$0xff]
    %v1371 = vld [vmem:[%s5 + $0x28] sm:$0xff]
    %v1372 = vld [vmem:[%s5 + $0x30] sm:$0xff]
    %v1373 = vld [vmem:[%s5 + $0x38] sm:$0xff]
    %v1374 = vld [vmem:[%s5 + $0x40] sm:$0xff]
    %v1375 = vld [vmem:[%s5 + $0x48] sm:$0xff]
    %v1376 = vld [vmem:[%s5 + $0x50] sm:$0xff]
    %v1377 = vld [vmem:[%s5 + $0x58] sm:$0xff]
    %v1378 = vld [vmem:[%s5 + $0x60] sm:$0xff]
    %v1379 = vld [vmem:[%s5 + $0x68] sm:$0xff]
    %v1380 = vld [vmem:[%s5 + $0x70] sm:$0xff]
    %v1381 = vld [vmem:[%s5 + $0x78] sm:$0xff]
    %1382 = vmatprep.subr.mxu0 0.0
    %1383 = vmatpush1.msra.mxu0 %v1366
    %1384 = vmatprep.subr.mxu0 0.0
    %1385 = vmatpush1.msra.mxu0 %v1367
    %1386 = vmatprep.subr.mxu0 0.0
    %1387 = vmatpush1.msra.mxu0 %v1368
    %1388 = vmatprep.subr.mxu0 0.0
    %1389 = vmatpush1.msra.mxu0 %v1369
    %1390 = vmatprep.subr.mxu0 0.0
    %1391 = vmatpush1.msra.mxu0 %v1370
    %1392 = vmatprep.subr.mxu0 0.0
    %1393 = vmatpush1.msra.mxu0 %v1371
    %1394 = vmatprep.subr.mxu0 0.0
    %1395 = vmatpush1.msra.mxu0 %v1372
    %1396 = vmatprep.subr.mxu0 0.0
    %1397 = vmatpush1.msra.mxu0 %v1373
    %1398 = vmatprep.subr.mxu0 0.0
    %1399 = vmatpush1.msra.mxu0 %v1374
    %1400 = vmatprep.subr.mxu0 0.0
    %1401 = vmatpush1.msra.mxu0 %v1375
    %1402 = vmatprep.subr.mxu0 0.0
    %1403 = vmatpush1.msra.mxu0 %v1376
    %1404 = vmatprep.subr.mxu0 0.0
    %1405 = vmatpush1.msra.mxu0 %v1377
    %1406 = vmatprep.subr.mxu0 0.0
    %1407 = vmatpush1.msra.mxu0 %v1378
    %1408 = vmatprep.subr.mxu0 0.0
    %1409 = vmatpush1.msra.mxu0 %v1379
    %1410 = vmatprep.subr.mxu0 0.0
    %1411 = vmatpush1.msra.mxu0 %v1380
    %1412 = vmatprep.subr.mxu0 0.0
    %1413 = vmatpush1.msra.mxu0 %v1381
    %1414 = vmatprep.subr.mxu0 0.0
    %1415 = vmatpush1.msra.mxu0 0.0
    %1416 = vmatprep.subr.mxu0 0.0
    %1417 = vmatpush1.msra.mxu0 0.0
    %1418 = vmatprep.subr.mxu0 0.0
    %1419 = vmatpush1.msra.mxu0 0.0
    %1420 = vmatprep.subr.mxu0 0.0
    %1421 = vmatpush1.msra.mxu0 0.0
    %1422 = vmatprep.subr.mxu0 0.0
    %1423 = vmatpush1.msra.mxu0 0.0
    %1424 = vmatprep.subr.mxu0 0.0
    %1425 = vmatpush1.msra.mxu0 0.0
    %1426 = vmatprep.subr.mxu0 0.0
    %1427 = vmatpush1.msra.mxu0 0.0
    %1428 = vmatprep.subr.mxu0 0.0
    %1429 = vmatpush1.msra.mxu0 0.0
    %1430 = vmatprep.subr.mxu0 0.0
    %1431 = vmatpush1.msra.mxu0 0.0
    %1432 = vmatprep.subr.mxu0 0.0
    %1433 = vmatpush1.msra.mxu0 0.0
    %1434 = vmatprep.subr.mxu0 0.0
    %1435 = vmatpush1.msra.mxu0 0.0
    %1436 = vmatprep.subr.mxu0 0.0
    %1437 = vmatpush1.msra.mxu0 0.0
    %1438 = vmatprep.subr.mxu0 0.0
    %1439 = vmatpush1.msra.mxu0 0.0
    %1440 = vmatprep.subr.mxu0 0.0
    %1441 = vmatpush1.msra.mxu0 0.0
    %1442 = vmatprep.subr.mxu0 0.0
    %1443 = vmatpush1.msra.mxu0 0.0
    %1444 = vmatprep.subr.mxu0 0.0
    %1445 = vmatpush1.msra.mxu0 0.0
    %1446 = vmatprep.mubr.f32.mxu0 0.0
    %1447 = vmatmul.mubr.f32.gmra.mrb[0].mxu0 %v1364
    %v1448 = vpop.f32.mrb[0].mxu0
    %v1449 = vadd.f32 0.0, %v1448
    %v1450 = vpop.f32.mrb[0].mxu0
    %1451 = vmatprep.mubr.f32.mxu0 0.0
    %1452 = vmatmul.mubr.f32.gmra.mrb[0].mxu0 %v1365
    %v1453 = vpop.f32.mrb[0].mxu0
    %v1454 = vadd.f32 0.0, %v1453
    %v1455 = vpop.f32.mrb[0].mxu0
    %1456 = vdwg.mxu0
    %v1457 = vadd.f32 %v1218, %v1449
    %v1458 = vadd.f32 %v1219, %v1454
    %v1459 = vadd.f32 %v1457, %v167
    %v1460 = vadd.f32 %v1458, %v167
    %v1461 = vld [vmem:[%s6 + $0x5] sm:$0x1]
    %v1462 = vsel %vm136, %v1459, 0.0
    %1463 = vadd.xlane.f32.xlu0 %v1462
    %v1464 = vpop.xlane.xlu0 %1463
    %v1465 = vsel %vm136, %v1460, 0.0
    %1466 = vadd.xlane.f32.xlu0 %v1465
    %v1467 = vpop.xlane.xlu0 %1466
    %v1468 = vmul.f32 %v1464, %v143
    %v1469 = vmul.f32 %v1467, %v143
    %v1470 = vsub.f32 %v1459, %v1468
    %v1471 = vsub.f32 %v1460, %v1469
    %v1472 = vmul.f32 %v1470, %v1470
    %v1473 = vmul.f32 %v1471, %v1471
    %v1474 = vsel %vm136, %v1472, 0.0
    %1475 = vadd.xlane.f32.xlu0 %v1474
    %v1476 = vpop.xlane.xlu0 %1475
    %v1477 = vsel %vm136, %v1473, 0.0
    %1478 = vadd.xlane.f32.xlu0 %v1477
    %v1479 = vpop.xlane.xlu0 %1478
    %v1480 = vmul.f32 %v1476, %v143
    %v1481 = vmul.f32 %v1479, %v143
    %v1482 = vadd.f32 %v1480, 1e-05
    %v1483 = vadd.f32 %v1481, 1e-05
    %v1484 = vrsqrt.pop %v1482
    %v1485 = vrsqrt.pop %v1483
    %v1486 = vmul.f32 %v1470, %v1484
    %v1487 = vmul.f32 %v1471, %v1485
    %v1488 = vlaneseq
    %v1489 = vshrl.u32 %v1488, 7
    %v1490 = vsub.s32 0, %v1489
    %v1491 = vrot.slane %v1461, %v1490
    %1493 = vrot.lane.b32.xlu0 %v1491, 96
    %v1494 = vpop.permute.xlu0 %1493
    %v1496 = vmul.f32 %v1486, %v1494
    %v1497 = vmul.f32 %v1487, %v1494
    %1498 = vrot.lane.b32.xlu0 %v1491, 64
    %v1499 = vpop.permute.xlu0 %1498
    %v1501 = vadd.f32 %v1496, %v1499
    %v1502 = vadd.f32 %v1497, %v1499
    %s1503 = scalar_lea.vmem %s4, 64
    %v1504 = vld [vmem:[%s1503] sm:$0xff]
    %v1505 = vld [vmem:[%s1503 + $0x10] sm:$0xff]
    %v1506 = vld [vmem:[%s1503 + $0x20] sm:$0xff]
    %v1507 = vld [vmem:[%s1503 + $0x30] sm:$0xff]
    %v1508 = vld [vmem:[%s6 + $0x1] sm:$0x1]
    %v1509 = vlaneseq
    %v1510 = vshrl.u32 %v1509, 7
    %v1511 = vsub.s32 0, %v1510
    %v1512 = vrot.slane %v1508, %v1511
    %v1514 = vsel %vm136, %v1501, 0
    %v1517 = vsel %vm136, %v1502, 0
    %1519 = vmatprep.subr.mxu0 0.0
    %1520 = vmatpush1.msra.mxu0 %v1504
    %1521 = vmatprep.subr.mxu0 0.0
    %1522 = vmatpush1.msra.mxu0 %v1505
    %1523 = vmatprep.subr.mxu0 0.0
    %1524 = vmatpush1.msra.mxu0 %v1506
    %1525 = vmatprep.subr.mxu0 0.0
    %1526 = vmatpush1.msra.mxu0 %v1507
    %1527 = vmatprep.subr.mxu0 0.0
    %1528 = vmatpush1.msra.mxu0 0.0
    %1529 = vmatprep.subr.mxu0 0.0
    %1530 = vmatpush1.msra.mxu0 0.0
    %1531 = vmatprep.subr.mxu0 0.0
    %1532 = vmatpush1.msra.mxu0 0.0
    %1533 = vmatprep.subr.mxu0 0.0
    %1534 = vmatpush1.msra.mxu0 0.0
    %1535 = vmatprep.subr.mxu0 0.0
    %1536 = vmatpush1.msra.mxu0 0.0
    %1537 = vmatprep.subr.mxu0 0.0
    %1538 = vmatpush1.msra.mxu0 0.0
    %1539 = vmatprep.subr.mxu0 0.0
    %1540 = vmatpush1.msra.mxu0 0.0
    %1541 = vmatprep.subr.mxu0 0.0
    %1542 = vmatpush1.msra.mxu0 0.0
    %1543 = vmatprep.subr.mxu0 0.0
    %1544 = vmatpush1.msra.mxu0 0.0
    %1545 = vmatprep.subr.mxu0 0.0
    %1546 = vmatpush1.msra.mxu0 0.0
    %1547 = vmatprep.subr.mxu0 0.0
    %1548 = vmatpush1.msra.mxu0 0.0
    %1549 = vmatprep.subr.mxu0 0.0
    %1550 = vmatpush1.msra.mxu0 0.0
    %1551 = vmatprep.subr.mxu0 0.0
    %1552 = vmatpush1.msra.mxu0 0.0
    %1553 = vmatprep.subr.mxu0 0.0
    %1554 = vmatpush1.msra.mxu0 0.0
    %1555 = vmatprep.subr.mxu0 0.0
    %1556 = vmatpush1.msra.mxu0 0.0
    %1557 = vmatprep.subr.mxu0 0.0
    %1558 = vmatpush1.msra.mxu0 0.0
    %1559 = vmatprep.subr.mxu0 0.0
    %1560 = vmatpush1.msra.mxu0 0.0
    %1561 = vmatprep.subr.mxu0 0.0
    %1562 = vmatpush1.msra.mxu0 0.0
    %1563 = vmatprep.subr.mxu0 0.0
    %1564 = vmatpush1.msra.mxu0 0.0
    %1565 = vmatprep.subr.mxu0 0.0
    %1566 = vmatpush1.msra.mxu0 0.0
    %1567 = vmatprep.subr.mxu0 0.0
    %1568 = vmatpush1.msra.mxu0 0.0
    %1569 = vmatprep.subr.mxu0 0.0
    %1570 = vmatpush1.msra.mxu0 0.0
    %1571 = vmatprep.subr.mxu0 0.0
    %1572 = vmatpush1.msra.mxu0 0.0
    %1573 = vmatprep.subr.mxu0 0.0
    %1574 = vmatpush1.msra.mxu0 0.0
    %1575 = vmatprep.subr.mxu0 0.0
    %1576 = vmatpush1.msra.mxu0 0.0
    %1577 = vmatprep.subr.mxu0 0.0
    %1578 = vmatpush1.msra.mxu0 0.0
    %1579 = vmatprep.subr.mxu0 0.0
    %1580 = vmatpush1.msra.mxu0 0.0
    %1581 = vmatprep.subr.mxu0 0.0
    %1582 = vmatpush1.msra.mxu0 0.0
    %1583 = vmatprep.mubr.f32.mxu0 0.0
    %1584 = vmatmul.mubr.f32.gmra.mrb[0].mxu0 %v1514
    %v1585 = vpop.f32.mrb[0].mxu0
    %v1586 = vadd.f32 %v1512, %v1585
    %v1587 = vpop.f32.mrb[0].mxu0
    %1588 = vmatprep.mubr.f32.mxu0 0.0
    %1589 = vmatmul.mubr.f32.gmra.mrb[0].mxu0 %v1517
    %v1590 = vpop.f32.mrb[0].mxu0
    %v1591 = vadd.f32 %v1512, %v1590
    %v1592 = vpop.f32.mrb[0].mxu0
    %1593 = vdwg.mxu0
    %1596 = vrot.lane.b32.xlu0 %v1586, 96
    %v1597 = vpop.permute.xlu0 %1596
    %1598 = vrot.lane.b32.xlu0 %v1591, 96
    %v1599 = vpop.permute.xlu0 %1598
    %v1600 = vsel %vm275, %v1586, 0
    %v1602 = vsel %vm275, %v1591, 0
    %v1604 = vsel %vm275, %v1597, 0
    %v1606 = vsel %vm275, %v1599, 0
    %1608 = vmatprep.subr.mxu0 0.0
    %1609 = vmatpush1.xpose.msra.mxu0 %v1604
    %1610 = vmatprep.subr.mxu0 0.0
    %1611 = vmatpush1.xpose.msra.mxu0 %v1606
    %1612 = vmatprep.subr.mxu0 0.0
    %1613 = vmatpush1.xpose.msra.mxu0 0.0
    %1614 = vmatprep.subr.mxu0 0.0
    %1615 = vmatpush1.xpose.msra.mxu0 0.0
    %1616 = vmatprep.subr.mxu0 0.0
    %1617 = vmatpush1.xpose.msra.mxu0 0.0
    %1618 = vmatprep.subr.mxu0 0.0
    %1619 = vmatpush1.xpose.msra.mxu0 0.0
    %1620 = vmatprep.subr.mxu0 0.0
    %1621 = vmatpush1.xpose.msra.mxu0 0.0
    %1622 = vmatprep.subr.mxu0 0.0
    %1623 = vmatpush1.xpose.msra.mxu0 0.0
    %1624 = vmatprep.subr.mxu0 0.0
    %1625 = vmatpush1.xpose.msra.mxu0 0.0
    %1626 = vmatprep.subr.mxu0 0.0
    %1627 = vmatpush1.xpose.msra.mxu0 0.0
    %1628 = vmatprep.subr.mxu0 0.0
    %1629 = vmatpush1.xpose.msra.mxu0 0.0
    %1630 = vmatprep.subr.mxu0 0.0
    %1631 = vmatpush1.xpose.msra.mxu0 0.0
    %1632 = vmatprep.subr.mxu0 0.0
    %1633 = vmatpush1.xpose.msra.mxu0 0.0
    %1634 = vmatprep.subr.mxu0 0.0
    %1635 = vmatpush1.xpose.msra.mxu0 0.0
    %1636 = vmatprep.subr.mxu0 0.0
    %1637 = vmatpush1.xpose.msra.mxu0 0.0
    %1638 = vmatprep.subr.mxu0 0.0
    %1639 = vmatpush1.xpose.msra.mxu0 0.0
    %1640 = vmatprep.subr.mxu0 0.0
    %1641 = vmatpush1.xpose.msra.mxu0 0.0
    %1642 = vmatprep.subr.mxu0 0.0
    %1643 = vmatpush1.xpose.msra.mxu0 0.0
    %1644 = vmatprep.subr.mxu0 0.0
    %1645 = vmatpush1.xpose.msra.mxu0 0.0
    %1646 = vmatprep.subr.mxu0 0.0
    %1647 = vmatpush1.xpose.msra.mxu0 0.0
    %1648 = vmatprep.subr.mxu0 0.0
    %1649 = vmatpush1.xpose.msra.mxu0 0.0
    %1650 = vmatprep.subr.mxu0 0.0
    %1651 = vmatpush1.xpose.msra.mxu0 0.0
    %1652 = vmatprep.subr.mxu0 0.0
    %1653 = vmatpush1.xpose.msra.mxu0 0.0
    %1654 = vmatprep.subr.mxu0 0.0
    %1655 = vmatpush1.xpose.msra.mxu0 0.0
    %1656 = vmatprep.subr.mxu0 0.0
    %1657 = vmatpush1.xpose.msra.mxu0 0.0
    %1658 = vmatprep.subr.mxu0 0.0
    %1659 = vmatpush1.xpose.msra.mxu0 0.0
    %1660 = vmatprep.subr.mxu0 0.0
    %1661 = vmatpush1.xpose.msra.mxu0 0.0
    %1662 = vmatprep.subr.mxu0 0.0
    %1663 = vmatpush1.xpose.msra.mxu0 0.0
    %1664 = vmatprep.subr.mxu0 0.0
    %1665 = vmatpush1.xpose.msra.mxu0 0.0
    %1666 = vmatprep.subr.mxu0 0.0
    %1667 = vmatpush1.xpose.msra.mxu0 0.0
    %1668 = vmatprep.subr.mxu0 0.0
    %1669 = vmatpush1.xpose.msra.mxu0 0.0
    %1670 = vmatprep.subr.mxu0 0.0
    %1671 = vmatpush1.xpose.msra.mxu0 0.0
    %1672 = vmatprep.mubr.f32.mxu0 0.0
    %1673 = vmatmul.mubr.f32.gmra.mrb[0].mxu0 %v1600
    %v1674 = vpop.f32.mrb[0].mxu0
    %v1675 = vadd.f32 0.0, %v1674
    %v1676 = vpop.f32.mrb[0].mxu0
    %1677 = vmatprep.mubr.f32.mxu0 0.0
    %1678 = vmatmul.mubr.f32.gmra.mrb[0].mxu0 %v1602
    %v1679 = vpop.f32.mrb[0].mxu0
    %v1680 = vadd.f32 0.0, %v1679
    %v1681 = vpop.f32.mrb[0].mxu0
    %1682 = vdwg.mxu0
    %v1683 = vmul.f32 %v1675, 0.35355338
    %v1684 = vmul.f32 %v1680, 0.35355338
    %v1685 = vadd.f32 %v1683, %v32
    %v1686 = vadd.f32 %v1684, %v33
    %v1687 = vsel %vm53, %v1685, -inf
    %1688 = vmax.xlane.f32.xlu0 %v1687
    %v1689 = vpop.xlane.xlu0 %1688
    %v1690 = vsel %vm53, %v1686, -inf
    %1691 = vmax.xlane.f32.xlu0 %v1690
    %v1692 = vpop.xlane.xlu0 %1691
    %v1693 = vsub.f32 %v1685, %v1689
    %v1694 = vsub.f32 %v1686, %v1692
    %v1695 = vmul.f32 %v1693, 1.442695
    %v1696 = vpow.pop %v1695
    %v1697 = vmul.f32 %v1694, 1.442695
    %v1698 = vpow.pop %v1697
    %v1699 = vsel %vm53, %v1696, 0.0
    %1700 = vadd.xlane.f32.xlu0 %v1699
    %v1701 = vpop.xlane.xlu0 %1700
    %v1702 = vsel %vm53, %v1698, 0.0
    %1703 = vadd.xlane.f32.xlu0 %v1702
    %v1704 = vpop.xlane.xlu0 %1703
    %v1705 = vrcp.pop %v1701
    %v1706 = vrcp.pop %v1704
    %v1707 = vmul.f32 %v1696, %v1705
    %v1708 = vmul.f32 %v1698, %v1706
    %1709 = vrot.lane.b32.xlu0 %v1586, 64
    %v1710 = vpop.permute.xlu0 %1709
    %1711 = vrot.lane.b32.xlu0 %v1591, 64
    %v1712 = vpop.permute.xlu0 %1711
    %v1716 = vsel %vm53, %v1707, 0
    %v1719 = vsel %vm53, %v1708, 0
    %1721 = vmatprep.subr.mxu0 0.0
    %1722 = vmatpush1.msra.mxu0 %v1710
    %1723 = vmatprep.subr.mxu0 0.0
    %1724 = vmatpush1.msra.mxu0 %v1712
    %1725 = vmatprep.subr.mxu0 0.0
    %1726 = vmatpush1.msra.mxu0 0.0
    %1727 = vmatprep.subr.mxu0 0.0
    %1728 = vmatpush1.msra.mxu0 0.0
    %1729 = vmatprep.subr.mxu0 0.0
    %1730 = vmatpush1.msra.mxu0 0.0
    %1731 = vmatprep.subr.mxu0 0.0
    %1732 = vmatpush1.msra.mxu0 0.0
    %1733 = vmatprep.subr.mxu0 0.0
    %1734 = vmatpush1.msra.mxu0 0.0
    %1735 = vmatprep.subr.mxu0 0.0
    %1736 = vmatpush1.msra.mxu0 0.0
    %1737 = vmatprep.subr.mxu0 0.0
    %1738 = vmatpush1.msra.mxu0 0.0
    %1739 = vmatprep.subr.mxu0 0.0
    %1740 = vmatpush1.msra.mxu0 0.0
    %1741 = vmatprep.subr.mxu0 0.0
    %1742 = vmatpush1.msra.mxu0 0.0
    %1743 = vmatprep.subr.mxu0 0.0
    %1744 = vmatpush1.msra.mxu0 0.0
    %1745 = vmatprep.subr.mxu0 0.0
    %1746 = vmatpush1.msra.mxu0 0.0
    %1747 = vmatprep.subr.mxu0 0.0
    %1748 = vmatpush1.msra.mxu0 0.0
    %1749 = vmatprep.subr.mxu0 0.0
    %1750 = vmatpush1.msra.mxu0 0.0
    %1751 = vmatprep.subr.mxu0 0.0
    %1752 = vmatpush1.msra.mxu0 0.0
    %1753 = vmatprep.subr.mxu0 0.0
    %1754 = vmatpush1.msra.mxu0 0.0
    %1755 = vmatprep.subr.mxu0 0.0
    %1756 = vmatpush1.msra.mxu0 0.0
    %1757 = vmatprep.subr.mxu0 0.0
    %1758 = vmatpush1.msra.mxu0 0.0
    %1759 = vmatprep.subr.mxu0 0.0
    %1760 = vmatpush1.msra.mxu0 0.0
    %1761 = vmatprep.subr.mxu0 0.0
    %1762 = vmatpush1.msra.mxu0 0.0
    %1763 = vmatprep.subr.mxu0 0.0
    %1764 = vmatpush1.msra.mxu0 0.0
    %1765 = vmatprep.subr.mxu0 0.0
    %1766 = vmatpush1.msra.mxu0 0.0
    %1767 = vmatprep.subr.mxu0 0.0
    %1768 = vmatpush1.msra.mxu0 0.0
    %1769 = vmatprep.subr.mxu0 0.0
    %1770 = vmatpush1.msra.mxu0 0.0
    %1771 = vmatprep.subr.mxu0 0.0
    %1772 = vmatpush1.msra.mxu0 0.0
    %1773 = vmatprep.subr.mxu0 0.0
    %1774 = vmatpush1.msra.mxu0 0.0
    %1775 = vmatprep.subr.mxu0 0.0
    %1776 = vmatpush1.msra.mxu0 0.0
    %1777 = vmatprep.subr.mxu0 0.0
    %1778 = vmatpush1.msra.mxu0 0.0
    %1779 = vmatprep.subr.mxu0 0.0
    %1780 = vmatpush1.msra.mxu0 0.0
    %1781 = vmatprep.subr.mxu0 0.0
    %1782 = vmatpush1.msra.mxu0 0.0
    %1783 = vmatprep.subr.mxu0 0.0
    %1784 = vmatpush1.msra.mxu0 0.0
    %1785 = vmatprep.mubr.f32.mxu0 0.0
    %1786 = vmatmul.mubr.f32.gmra.mrb[0].mxu0 %v1716
    %v1787 = vpop.f32.mrb[0].mxu0
    %v1788 = vadd.f32 0.0, %v1787
    %v1789 = vpop.f32.mrb[0].mxu0
    %1790 = vmatprep.mubr.f32.mxu0 0.0
    %1791 = vmatmul.mubr.f32.gmra.mrb[0].mxu0 %v1719
    %v1792 = vpop.f32.mrb[0].mxu0
    %v1793 = vadd.f32 0.0, %v1792
    %v1794 = vpop.f32.mrb[0].mxu0
    %1795 = vdwg.mxu0
    %1796 = vrot.lane.b32.xlu0 %v1586, 120
    %v1797 = vpop.permute.xlu0 %1796
    %1798 = vrot.lane.b32.xlu0 %v1591, 120
    %v1799 = vpop.permute.xlu0 %1798
    %1800 = vrot.lane.b32.xlu0 %v1586, 88
    %v1801 = vpop.permute.xlu0 %1800
    %1802 = vrot.lane.b32.xlu0 %v1591, 88
    %v1803 = vpop.permute.xlu0 %1802
    %v1804 = vsel %vm275, %v1797, 0
    %v1806 = vsel %vm275, %v1799, 0
    %v1808 = vsel %vm275, %v1801, 0
    %v1810 = vsel %vm275, %v1803, 0
    %1812 = vmatprep.subr.mxu0 0.0
    %1813 = vmatpush1.xpose.msra.mxu0 %v1808
    %1814 = vmatprep.subr.mxu0 0.0
    %1815 = vmatpush1.xpose.msra.mxu0 %v1810
    %1816 = vmatprep.subr.mxu0 0.0
    %1817 = vmatpush1.xpose.msra.mxu0 0.0
    %1818 = vmatprep.subr.mxu0 0.0
    %1819 = vmatpush1.xpose.msra.mxu0 0.0
    %1820 = vmatprep.subr.mxu0 0.0
    %1821 = vmatpush1.xpose.msra.mxu0 0.0
    %1822 = vmatprep.subr.mxu0 0.0
    %1823 = vmatpush1.xpose.msra.mxu0 0.0
    %1824 = vmatprep.subr.mxu0 0.0
    %1825 = vmatpush1.xpose.msra.mxu0 0.0
    %1826 = vmatprep.subr.mxu0 0.0
    %1827 = vmatpush1.xpose.msra.mxu0 0.0
    %1828 = vmatprep.subr.mxu0 0.0
    %1829 = vmatpush1.xpose.msra.mxu0 0.0
    %1830 = vmatprep.subr.mxu0 0.0
    %1831 = vmatpush1.xpose.msra.mxu0 0.0
    %1832 = vmatprep.subr.mxu0 0.0
    %1833 = vmatpush1.xpose.msra.mxu0 0.0
    %1834 = vmatprep.subr.mxu0 0.0
    %1835 = vmatpush1.xpose.msra.mxu0 0.0
    %1836 = vmatprep.subr.mxu0 0.0
    %1837 = vmatpush1.xpose.msra.mxu0 0.0
    %1838 = vmatprep.subr.mxu0 0.0
    %1839 = vmatpush1.xpose.msra.mxu0 0.0
    %1840 = vmatprep.subr.mxu0 0.0
    %1841 = vmatpush1.xpose.msra.mxu0 0.0
    %1842 = vmatprep.subr.mxu0 0.0
    %1843 = vmatpush1.xpose.msra.mxu0 0.0
    %1844 = vmatprep.subr.mxu0 0.0
    %1845 = vmatpush1.xpose.msra.mxu0 0.0
    %1846 = vmatprep.subr.mxu0 0.0
    %1847 = vmatpush1.xpose.msra.mxu0 0.0
    %1848 = vmatprep.subr.mxu0 0.0
    %1849 = vmatpush1.xpose.msra.mxu0 0.0
    %1850 = vmatprep.subr.mxu0 0.0
    %1851 = vmatpush1.xpose.msra.mxu0 0.0
    %1852 = vmatprep.subr.mxu0 0.0
    %1853 = vmatpush1.xpose.msra.mxu0 0.0
    %1854 = vmatprep.subr.mxu0 0.0
    %1855 = vmatpush1.xpose.msra.mxu0 0.0
    %1856 = vmatprep.subr.mxu0 0.0
    %1857 = vmatpush1.xpose.msra.mxu0 0.0
    %1858 = vmatprep.subr.mxu0 0.0
    %1859 = vmatpush1.xpose.msra.mxu0 0.0
    %1860 = vmatprep.subr.mxu0 0.0
    %1861 = vmatpush1.xpose.msra.mxu0 0.0
    %1862 = vmatprep.subr.mxu0 0.0
    %1863 = vmatpush1.xpose.msra.mxu0 0.0
    %1864 = vmatprep.subr.mxu0 0.0
    %1865 = vmatpush1.xpose.msra.mxu0 0.0
    %1866 = vmatprep.subr.mxu0 0.0
    %1867 = vmatpush1.xpose.msra.mxu0 0.0
    %1868 = vmatprep.subr.mxu0 0.0
    %1869 = vmatpush1.xpose.msra.mxu0 0.0
    %1870 = vmatprep.subr.mxu0 0.0
    %1871 = vmatpush1.xpose.msra.mxu0 0.0
    %1872 = vmatprep.subr.mxu0 0.0
    %1873 = vmatpush1.xpose.msra.mxu0 0.0
    %1874 = vmatprep.subr.mxu0 0.0
    %1875 = vmatpush1.xpose.msra.mxu0 0.0
    %1876 = vmatprep.mubr.f32.mxu0 0.0
    %1877 = vmatmul.mubr.f32.gmra.mrb[0].mxu0 %v1804
    %v1878 = vpop.f32.mrb[0].mxu0
    %v1879 = vadd.f32 0.0, %v1878
    %v1880 = vpop.f32.mrb[0].mxu0
    %1881 = vmatprep.mubr.f32.mxu0 0.0
    %1882 = vmatmul.mubr.f32.gmra.mrb[0].mxu0 %v1806
    %v1883 = vpop.f32.mrb[0].mxu0
    %v1884 = vadd.f32 0.0, %v1883
    %v1885 = vpop.f32.mrb[0].mxu0
    %1886 = vdwg.mxu0
    %v1887 = vmul.f32 %v1879, 0.35355338
    %v1888 = vmul.f32 %v1884, 0.35355338
    %v1889 = vadd.f32 %v1887, %v32
    %v1890 = vadd.f32 %v1888, %v33
    %v1891 = vsel %vm53, %v1889, -inf
    %1892 = vmax.xlane.f32.xlu0 %v1891
    %v1893 = vpop.xlane.xlu0 %1892
    %v1894 = vsel %vm53, %v1890, -inf
    %1895 = vmax.xlane.f32.xlu0 %v1894
    %v1896 = vpop.xlane.xlu0 %1895
    %v1897 = vsub.f32 %v1889, %v1893
    %v1898 = vsub.f32 %v1890, %v1896
    %v1899 = vmul.f32 %v1897, 1.442695
    %v1900 = vpow.pop %v1899
    %v1901 = vmul.f32 %v1898, 1.442695
    %v1902 = vpow.pop %v1901
    %v1903 = vsel %vm53, %v1900, 0.0
    %1904 = vadd.xlane.f32.xlu0 %v1903
    %v1905 = vpop.xlane.xlu0 %1904
    %v1906 = vsel %vm53, %v1902, 0.0
    %1907 = vadd.xlane.f32.xlu0 %v1906
    %v1908 = vpop.xlane.xlu0 %1907
    %v1909 = vrcp.pop %v1905
    %v1910 = vrcp.pop %v1908
    %v1911 = vmul.f32 %v1900, %v1909
    %v1912 = vmul.f32 %v1902, %v1910
    %1913 = vrot.lane.b32.xlu0 %v1586, 56
    %v1914 = vpop.permute.xlu0 %1913
    %1915 = vrot.lane.b32.xlu0 %v1591, 56
    %v1916 = vpop.permute.xlu0 %1915
    %v1920 = vsel %vm53, %v1911, 0
    %v1923 = vsel %vm53, %v1912, 0
    %1925 = vmatprep.subr.mxu0 0.0
    %1926 = vmatpush1.msra.mxu0 %v1914
    %1927 = vmatprep.subr.mxu0 0.0
    %1928 = vmatpush1.msra.mxu0 %v1916
    %1929 = vmatprep.subr.mxu0 0.0
    %1930 = vmatpush1.msra.mxu0 0.0
    %1931 = vmatprep.subr.mxu0 0.0
    %1932 = vmatpush1.msra.mxu0 0.0
    %1933 = vmatprep.subr.mxu0 0.0
    %1934 = vmatpush1.msra.mxu0 0.0
    %1935 = vmatprep.subr.mxu0 0.0
    %1936 = vmatpush1.msra.mxu0 0.0
    %1937 = vmatprep.subr.mxu0 0.0
    %1938 = vmatpush1.msra.mxu0 0.0
    %1939 = vmatprep.subr.mxu0 0.0
    %1940 = vmatpush1.msra.mxu0 0.0
    %1941 = vmatprep.subr.mxu0 0.0
    %1942 = vmatpush1.msra.mxu0 0.0
    %1943 = vmatprep.subr.mxu0 0.0
    %1944 = vmatpush1.msra.mxu0 0.0
    %1945 = vmatprep.subr.mxu0 0.0
    %1946 = vmatpush1.msra.mxu0 0.0
    %1947 = vmatprep.subr.mxu0 0.0
    %1948 = vmatpush1.msra.mxu0 0.0
    %1949 = vmatprep.subr.mxu0 0.0
    %1950 = vmatpush1.msra.mxu0 0.0
    %1951 = vmatprep.subr.mxu0 0.0
    %1952 = vmatpush1.msra.mxu0 0.0
    %1953 = vmatprep.subr.mxu0 0.0
    %1954 = vmatpush1.msra.mxu0 0.0
    %1955 = vmatprep.subr.mxu0 0.0
    %1956 = vmatpush1.msra.mxu0 0.0
    %1957 = vmatprep.subr.mxu0 0.0
    %1958 = vmatpush1.msra.mxu0 0.0
    %1959 = vmatprep.subr.mxu0 0.0
    %1960 = vmatpush1.msra.mxu0 0.0
    %1961 = vmatprep.subr.mxu0 0.0
    %1962 = vmatpush1.msra.mxu0 0.0
    %1963 = vmatprep.subr.mxu0 0.0
    %1964 = vmatpush1.msra.mxu0 0.0
    %1965 = vmatprep.subr.mxu0 0.0
    %1966 = vmatpush1.msra.mxu0 0.0
    %1967 = vmatprep.subr.mxu0 0.0
    %1968 = vmatpush1.msra.mxu0 0.0
    %1969 = vmatprep.subr.mxu0 0.0
    %1970 = vmatpush1.msra.mxu0 0.0
    %1971 = vmatprep.subr.mxu0 0.0
    %1972 = vmatpush1.msra.mxu0 0.0
    %1973 = vmatprep.subr.mxu0 0.0
    %1974 = vmatpush1.msra.mxu0 0.0
    %1975 = vmatprep.subr.mxu0 0.0
    %1976 = vmatpush1.msra.mxu0 0.0
    %1977 = vmatprep.subr.mxu0 0.0
    %1978 = vmatpush1.msra.mxu0 0.0
    %1979 = vmatprep.subr.mxu0 0.0
    %1980 = vmatpush1.msra.mxu0 0.0
    %1981 = vmatprep.subr.mxu0 0.0
    %1982 = vmatpush1.msra.mxu0 0.0
    %1983 = vmatprep.subr.mxu0 0.0
    %1984 = vmatpush1.msra.mxu0 0.0
    %1985 = vmatprep.subr.mxu0 0.0
    %1986 = vmatpush1.msra.mxu0 0.0
    %1987 = vmatprep.subr.mxu0 0.0
    %1988 = vmatpush1.msra.mxu0 0.0
    %1989 = vmatprep.mubr.f32.mxu0 0.0
    %1990 = vmatmul.mubr.f32.gmra.mrb[0].mxu0 %v1920
    %v1991 = vpop.f32.mrb[0].mxu0
    %v1992 = vadd.f32 0.0, %v1991
    %v1993 = vpop.f32.mrb[0].mxu0
    %1994 = vmatprep.mubr.f32.mxu0 0.0
    %1995 = vmatmul.mubr.f32.gmra.mrb[0].mxu0 %v1923
    %v1996 = vpop.f32.mrb[0].mxu0
    %v1997 = vadd.f32 0.0, %v1996
    %v1998 = vpop.f32.mrb[0].mxu0
    %1999 = vdwg.mxu0
    %2000 = vrot.lane.b32.xlu0 %v1586, 112
    %v2001 = vpop.permute.xlu0 %2000
    %2002 = vrot.lane.b32.xlu0 %v1591, 112
    %v2003 = vpop.permute.xlu0 %2002
    %2004 = vrot.lane.b32.xlu0 %v1586, 80
    %v2005 = vpop.permute.xlu0 %2004
    %2006 = vrot.lane.b32.xlu0 %v1591, 80
    %v2007 = vpop.permute.xlu0 %2006
    %v2008 = vsel %vm275, %v2001, 0
    %v2010 = vsel %vm275, %v2003, 0
    %v2012 = vsel %vm275, %v2005, 0
    %v2014 = vsel %vm275, %v2007, 0
    %2016 = vmatprep.subr.mxu0 0.0
    %2017 = vmatpush1.xpose.msra.mxu0 %v2012
    %2018 = vmatprep.subr.mxu0 0.0
    %2019 = vmatpush1.xpose.msra.mxu0 %v2014
    %2020 = vmatprep.subr.mxu0 0.0
    %2021 = vmatpush1.xpose.msra.mxu0 0.0
    %2022 = vmatprep.subr.mxu0 0.0
    %2023 = vmatpush1.xpose.msra.mxu0 0.0
    %2024 = vmatprep.subr.mxu0 0.0
    %2025 = vmatpush1.xpose.msra.mxu0 0.0
    %2026 = vmatprep.subr.mxu0 0.0
    %2027 = vmatpush1.xpose.msra.mxu0 0.0
    %2028 = vmatprep.subr.mxu0 0.0
    %2029 = vmatpush1.xpose.msra.mxu0 0.0
    %2030 = vmatprep.subr.mxu0 0.0
    %2031 = vmatpush1.xpose.msra.mxu0 0.0
    %2032 = vmatprep.subr.mxu0 0.0
    %2033 = vmatpush1.xpose.msra.mxu0 0.0
    %2034 = vmatprep.subr.mxu0 0.0
    %2035 = vmatpush1.xpose.msra.mxu0 0.0
    %2036 = vmatprep.subr.mxu0 0.0
    %2037 = vmatpush1.xpose.msra.mxu0 0.0
    %2038 = vmatprep.subr.mxu0 0.0
    %2039 = vmatpush1.xpose.msra.mxu0 0.0
    %2040 = vmatprep.subr.mxu0 0.0
    %2041 = vmatpush1.xpose.msra.mxu0 0.0
    %2042 = vmatprep.subr.mxu0 0.0
    %2043 = vmatpush1.xpose.msra.mxu0 0.0
    %2044 = vmatprep.subr.mxu0 0.0
    %2045 = vmatpush1.xpose.msra.mxu0 0.0
    %2046 = vmatprep.subr.mxu0 0.0
    %2047 = vmatpush1.xpose.msra.mxu0 0.0
    %2048 = vmatprep.subr.mxu0 0.0
    %2049 = vmatpush1.xpose.msra.mxu0 0.0
    %2050 = vmatprep.subr.mxu0 0.0
    %2051 = vmatpush1.xpose.msra.mxu0 0.0
    %2052 = vmatprep.subr.mxu0 0.0
    %2053 = vmatpush1.xpose.msra.mxu0 0.0
    %2054 = vmatprep.subr.mxu0 0.0
    %2055 = vmatpush1.xpose.msra.mxu0 0.0
    %2056 = vmatprep.subr.mxu0 0.0
    %2057 = vmatpush1.xpose.msra.mxu0 0.0
    %2058 = vmatprep.subr.mxu0 0.0
    %2059 = vmatpush1.xpose.msra.mxu0 0.0
    %2060 = vmatprep.subr.mxu0 0.0
    %2061 = vmatpush1.xpose.msra.mxu0 0.0
    %2062 = vmatprep.subr.mxu0 0.0
    %2063 = vmatpush1.xpose.msra.mxu0 0.0
    %2064 = vmatprep.subr.mxu0 0.0
    %2065 = vmatpush1.xpose.msra.mxu0 0.0
    %2066 = vmatprep.subr.mxu0 0.0
    %2067 = vmatpush1.xpose.msra.mxu0 0.0
    %2068 = vmatprep.subr.mxu0 0.0
    %2069 = vmatpush1.xpose.msra.mxu0 0.0
    %2070 = vmatprep.subr.mxu0 0.0
    %2071 = vmatpush1.xpose.msra.mxu0 0.0
    %2072 = vmatprep.subr.mxu0 0.0
    %2073 = vmatpush1.xpose.msra.mxu0 0.0
    %2074 = vmatprep.subr.mxu0 0.0
    %2075 = vmatpush1.xpose.msra.mxu0 0.0
    %2076 = vmatprep.subr.mxu0 0.0
    %2077 = vmatpush1.xpose.msra.mxu0 0.0
    %2078 = vmatprep.subr.mxu0 0.0
    %2079 = vmatpush1.xpose.msra.mxu0 0.0
    %2080 = vmatprep.mubr.f32.mxu0 0.0
    %2081 = vmatmul.mubr.f32.gmra.mrb[0].mxu0 %v2008
    %v2082 = vpop.f32.mrb[0].mxu0
    %v2083 = vadd.f32 0.0, %v2082
    %v2084 = vpop.f32.mrb[0].mxu0
    %2085 = vmatprep.mubr.f32.mxu0 0.0
    %2086 = vmatmul.mubr.f32.gmra.mrb[0].mxu0 %v2010
    %v2087 = vpop.f32.mrb[0].mxu0
    %v2088 = vadd.f32 0.0, %v2087
    %v2089 = vpop.f32.mrb[0].mxu0
    %2090 = vdwg.mxu0
    %v2091 = vmul.f32 %v2083, 0.35355338
    %v2092 = vmul.f32 %v2088, 0.35355338
    %v2093 = vadd.f32 %v2091, %v32
    %v2094 = vadd.f32 %v2092, %v33
    %v2095 = vsel %vm53, %v2093, -inf
    %2096 = vmax.xlane.f32.xlu0 %v2095
    %v2097 = vpop.xlane.xlu0 %2096
    %v2098 = vsel %vm53, %v2094, -inf
    %2099 = vmax.xlane.f32.xlu0 %v2098
    %v2100 = vpop.xlane.xlu0 %2099
    %v2101 = vsub.f32 %v2093, %v2097
    %v2102 = vsub.f32 %v2094, %v2100
    %v2103 = vmul.f32 %v2101, 1.442695
    %v2104 = vpow.pop %v2103
    %v2105 = vmul.f32 %v2102, 1.442695
    %v2106 = vpow.pop %v2105
    %v2107 = vsel %vm53, %v2104, 0.0
    %2108 = vadd.xlane.f32.xlu0 %v2107
    %v2109 = vpop.xlane.xlu0 %2108
    %v2110 = vsel %vm53, %v2106, 0.0
    %2111 = vadd.xlane.f32.xlu0 %v2110
    %v2112 = vpop.xlane.xlu0 %2111
    %v2113 = vrcp.pop %v2109
    %v2114 = vrcp.pop %v2112
    %v2115 = vmul.f32 %v2104, %v2113
    %v2116 = vmul.f32 %v2106, %v2114
    %2117 = vrot.lane.b32.xlu0 %v1586, 48
    %v2118 = vpop.permute.xlu0 %2117
    %2119 = vrot.lane.b32.xlu0 %v1591, 48
    %v2120 = vpop.permute.xlu0 %2119
    %v2124 = vsel %vm53, %v2115, 0
    %v2127 = vsel %vm53, %v2116, 0
    %2129 = vmatprep.subr.mxu0 0.0
    %2130 = vmatpush1.msra.mxu0 %v2118
    %2131 = vmatprep.subr.mxu0 0.0
    %2132 = vmatpush1.msra.mxu0 %v2120
    %2133 = vmatprep.subr.mxu0 0.0
    %2134 = vmatpush1.msra.mxu0 0.0
    %2135 = vmatprep.subr.mxu0 0.0
    %2136 = vmatpush1.msra.mxu0 0.0
    %2137 = vmatprep.subr.mxu0 0.0
    %2138 = vmatpush1.msra.mxu0 0.0
    %2139 = vmatprep.subr.mxu0 0.0
    %2140 = vmatpush1.msra.mxu0 0.0
    %2141 = vmatprep.subr.mxu0 0.0
    %2142 = vmatpush1.msra.mxu0 0.0
    %2143 = vmatprep.subr.mxu0 0.0
    %2144 = vmatpush1.msra.mxu0 0.0
    %2145 = vmatprep.subr.mxu0 0.0
    %2146 = vmatpush1.msra.mxu0 0.0
    %2147 = vmatprep.subr.mxu0 0.0
    %2148 = vmatpush1.msra.mxu0 0.0
    %2149 = vmatprep.subr.mxu0 0.0
    %2150 = vmatpush1.msra.mxu0 0.0
    %2151 = vmatprep.subr.mxu0 0.0
    %2152 = vmatpush1.msra.mxu0 0.0
    %2153 = vmatprep.subr.mxu0 0.0
    %2154 = vmatpush1.msra.mxu0 0.0
    %2155 = vmatprep.subr.mxu0 0.0
    %2156 = vmatpush1.msra.mxu0 0.0
    %2157 = vmatprep.subr.mxu0 0.0
    %2158 = vmatpush1.msra.mxu0 0.0
    %2159 = vmatprep.subr.mxu0 0.0
    %2160 = vmatpush1.msra.mxu0 0.0
    %2161 = vmatprep.subr.mxu0 0.0
    %2162 = vmatpush1.msra.mxu0 0.0
    %2163 = vmatprep.subr.mxu0 0.0
    %2164 = vmatpush1.msra.mxu0 0.0
    %2165 = vmatprep.subr.mxu0 0.0
    %2166 = vmatpush1.msra.mxu0 0.0
    %2167 = vmatprep.subr.mxu0 0.0
    %2168 = vmatpush1.msra.mxu0 0.0
    %2169 = vmatprep.subr.mxu0 0.0
    %2170 = vmatpush1.msra.mxu0 0.0
    %2171 = vmatprep.subr.mxu0 0.0
    %2172 = vmatpush1.msra.mxu0 0.0
    %2173 = vmatprep.subr.mxu0 0.0
    %2174 = vmatpush1.msra.mxu0 0.0
    %2175 = vmatprep.subr.mxu0 0.0
    %2176 = vmatpush1.msra.mxu0 0.0
    %2177 = vmatprep.subr.mxu0 0.0
    %2178 = vmatpush1.msra.mxu0 0.0
    %2179 = vmatprep.subr.mxu0 0.0
    %2180 = vmatpush1.msra.mxu0 0.0
    %2181 = vmatprep.subr.mxu0 0.0
    %2182 = vmatpush1.msra.mxu0 0.0
    %2183 = vmatprep.subr.mxu0 0.0
    %2184 = vmatpush1.msra.mxu0 0.0
    %2185 = vmatprep.subr.mxu0 0.0
    %2186 = vmatpush1.msra.mxu0 0.0
    %2187 = vmatprep.subr.mxu0 0.0
    %2188 = vmatpush1.msra.mxu0 0.0
    %2189 = vmatprep.subr.mxu0 0.0
    %2190 = vmatpush1.msra.mxu0 0.0
    %2191 = vmatprep.subr.mxu0 0.0
    %2192 = vmatpush1.msra.mxu0 0.0
    %2193 = vmatprep.mubr.f32.mxu0 0.0
    %2194 = vmatmul.mubr.f32.gmra.mrb[0].mxu0 %v2124
    %v2195 = vpop.f32.mrb[0].mxu0
    %v2196 = vadd.f32 0.0, %v2195
    %v2197 = vpop.f32.mrb[0].mxu0
    %2198 = vmatprep.mubr.f32.mxu0 0.0
    %2199 = vmatmul.mubr.f32.gmra.mrb[0].mxu0 %v2127
    %v2200 = vpop.f32.mrb[0].mxu0
    %v2201 = vadd.f32 0.0, %v2200
    %v2202 = vpop.f32.mrb[0].mxu0
    %2203 = vdwg.mxu0
    %2204 = vrot.lane.b32.xlu0 %v1586, 104
    %v2205 = vpop.permute.xlu0 %2204
    %2206 = vrot.lane.b32.xlu0 %v1591, 104
    %v2207 = vpop.permute.xlu0 %2206
    %2208 = vrot.lane.b32.xlu0 %v1586, 72
    %v2209 = vpop.permute.xlu0 %2208
    %2210 = vrot.lane.b32.xlu0 %v1591, 72
    %v2211 = vpop.permute.xlu0 %2210
    %v2212 = vsel %vm275, %v2205, 0
    %v2214 = vsel %vm275, %v2207, 0
    %v2216 = vsel %vm275, %v2209, 0
    %v2218 = vsel %vm275, %v2211, 0
    %2220 = vmatprep.subr.mxu0 0.0
    %2221 = vmatpush1.xpose.msra.mxu0 %v2216
    %2222 = vmatprep.subr.mxu0 0.0
    %2223 = vmatpush1.xpose.msra.mxu0 %v2218
    %2224 = vmatprep.subr.mxu0 0.0
    %2225 = vmatpush1.xpose.msra.mxu0 0.0
    %2226 = vmatprep.subr.mxu0 0.0
    %2227 = vmatpush1.xpose.msra.mxu0 0.0
    %2228 = vmatprep.subr.mxu0 0.0
    %2229 = vmatpush1.xpose.msra.mxu0 0.0
    %2230 = vmatprep.subr.mxu0 0.0
    %2231 = vmatpush1.xpose.msra.mxu0 0.0
    %2232 = vmatprep.subr.mxu0 0.0
    %2233 = vmatpush1.xpose.msra.mxu0 0.0
    %2234 = vmatprep.subr.mxu0 0.0
    %2235 = vmatpush1.xpose.msra.mxu0 0.0
    %2236 = vmatprep.subr.mxu0 0.0
    %2237 = vmatpush1.xpose.msra.mxu0 0.0
    %2238 = vmatprep.subr.mxu0 0.0
    %2239 = vmatpush1.xpose.msra.mxu0 0.0
    %2240 = vmatprep.subr.mxu0 0.0
    %2241 = vmatpush1.xpose.msra.mxu0 0.0
    %2242 = vmatprep.subr.mxu0 0.0
    %2243 = vmatpush1.xpose.msra.mxu0 0.0
    %2244 = vmatprep.subr.mxu0 0.0
    %2245 = vmatpush1.xpose.msra.mxu0 0.0
    %2246 = vmatprep.subr.mxu0 0.0
    %2247 = vmatpush1.xpose.msra.mxu0 0.0
    %2248 = vmatprep.subr.mxu0 0.0
    %2249 = vmatpush1.xpose.msra.mxu0 0.0
    %2250 = vmatprep.subr.mxu0 0.0
    %2251 = vmatpush1.xpose.msra.mxu0 0.0
    %2252 = vmatprep.subr.mxu0 0.0
    %2253 = vmatpush1.xpose.msra.mxu0 0.0
    %2254 = vmatprep.subr.mxu0 0.0
    %2255 = vmatpush1.xpose.msra.mxu0 0.0
    %2256 = vmatprep.subr.mxu0 0.0
    %2257 = vmatpush1.xpose.msra.mxu0 0.0
    %2258 = vmatprep.subr.mxu0 0.0
    %2259 = vmatpush1.xpose.msra.mxu0 0.0
    %2260 = vmatprep.subr.mxu0 0.0
    %2261 = vmatpush1.xpose.msra.mxu0 0.0
    %2262 = vmatprep.subr.mxu0 0.0
    %2263 = vmatpush1.xpose.msra.mxu0 0.0
    %2264 = vmatprep.subr.mxu0 0.0
    %2265 = vmatpush1.xpose.msra.mxu0 0.0
    %2266 = vmatprep.subr.mxu0 0.0
    %2267 = vmatpush1.xpose.msra.mxu0 0.0
    %2268 = vmatprep.subr.mxu0 0.0
    %2269 = vmatpush1.xpose.msra.mxu0 0.0
    %2270 = vmatprep.subr.mxu0 0.0
    %2271 = vmatpush1.xpose.msra.mxu0 0.0
    %2272 = vmatprep.subr.mxu0 0.0
    %2273 = vmatpush1.xpose.msra.mxu0 0.0
    %2274 = vmatprep.subr.mxu0 0.0
    %2275 = vmatpush1.xpose.msra.mxu0 0.0
    %2276 = vmatprep.subr.mxu0 0.0
    %2277 = vmatpush1.xpose.msra.mxu0 0.0
    %2278 = vmatprep.subr.mxu0 0.0
    %2279 = vmatpush1.xpose.msra.mxu0 0.0
    %2280 = vmatprep.subr.mxu0 0.0
    %2281 = vmatpush1.xpose.msra.mxu0 0.0
    %2282 = vmatprep.subr.mxu0 0.0
    %2283 = vmatpush1.xpose.msra.mxu0 0.0
    %2284 = vmatprep.mubr.f32.mxu0 0.0
    %2285 = vmatmul.mubr.f32.gmra.mrb[0].mxu0 %v2212
    %v2286 = vpop.f32.mrb[0].mxu0
    %v2287 = vadd.f32 0.0, %v2286
    %v2288 = vpop.f32.mrb[0].mxu0
    %2289 = vmatprep.mubr.f32.mxu0 0.0
    %2290 = vmatmul.mubr.f32.gmra.mrb[0].mxu0 %v2214
    %v2291 = vpop.f32.mrb[0].mxu0
    %v2292 = vadd.f32 0.0, %v2291
    %v2293 = vpop.f32.mrb[0].mxu0
    %2294 = vdwg.mxu0
    %v2295 = vmul.f32 %v2287, 0.35355338
    %v2296 = vmul.f32 %v2292, 0.35355338
    %v2297 = vadd.f32 %v2295, %v32
    %v2298 = vadd.f32 %v2296, %v33
    %v2299 = vsel %vm53, %v2297, -inf
    %2300 = vmax.xlane.f32.xlu0 %v2299
    %v2301 = vpop.xlane.xlu0 %2300
    %v2302 = vsel %vm53, %v2298, -inf
    %2303 = vmax.xlane.f32.xlu0 %v2302
    %v2304 = vpop.xlane.xlu0 %2303
    %v2305 = vsub.f32 %v2297, %v2301
    %v2306 = vsub.f32 %v2298, %v2304
    %v2307 = vmul.f32 %v2305, 1.442695
    %v2308 = vpow.pop %v2307
    %v2309 = vmul.f32 %v2306, 1.442695
    %v2310 = vpow.pop %v2309
    %v2311 = vsel %vm53, %v2308, 0.0
    %2312 = vadd.xlane.f32.xlu0 %v2311
    %v2313 = vpop.xlane.xlu0 %2312
    %v2314 = vsel %vm53, %v2310, 0.0
    %2315 = vadd.xlane.f32.xlu0 %v2314
    %v2316 = vpop.xlane.xlu0 %2315
    %v2317 = vrcp.pop %v2313
    %v2318 = vrcp.pop %v2316
    %v2319 = vmul.f32 %v2308, %v2317
    %v2320 = vmul.f32 %v2310, %v2318
    %2321 = vrot.lane.b32.xlu0 %v1586, 40
    %v2322 = vpop.permute.xlu0 %2321
    %2323 = vrot.lane.b32.xlu0 %v1591, 40
    %v2324 = vpop.permute.xlu0 %2323
    %v2328 = vsel %vm53, %v2319, 0
    %v2331 = vsel %vm53, %v2320, 0
    %2333 = vmatprep.subr.mxu0 0.0
    %2334 = vmatpush1.msra.mxu0 %v2322
    %2335 = vmatprep.subr.mxu0 0.0
    %2336 = vmatpush1.msra.mxu0 %v2324
    %2337 = vmatprep.subr.mxu0 0.0
    %2338 = vmatpush1.msra.mxu0 0.0
    %2339 = vmatprep.subr.mxu0 0.0
    %2340 = vmatpush1.msra.mxu0 0.0
    %2341 = vmatprep.subr.mxu0 0.0
    %2342 = vmatpush1.msra.mxu0 0.0
    %2343 = vmatprep.subr.mxu0 0.0
    %2344 = vmatpush1.msra.mxu0 0.0
    %2345 = vmatprep.subr.mxu0 0.0
    %2346 = vmatpush1.msra.mxu0 0.0
    %2347 = vmatprep.subr.mxu0 0.0
    %2348 = vmatpush1.msra.mxu0 0.0
    %2349 = vmatprep.subr.mxu0 0.0
    %2350 = vmatpush1.msra.mxu0 0.0
    %2351 = vmatprep.subr.mxu0 0.0
    %2352 = vmatpush1.msra.mxu0 0.0
    %2353 = vmatprep.subr.mxu0 0.0
    %2354 = vmatpush1.msra.mxu0 0.0
    %2355 = vmatprep.subr.mxu0 0.0
    %2356 = vmatpush1.msra.mxu0 0.0
    %2357 = vmatprep.subr.mxu0 0.0
    %2358 = vmatpush1.msra.mxu0 0.0
    %2359 = vmatprep.subr.mxu0 0.0
    %2360 = vmatpush1.msra.mxu0 0.0
    %2361 = vmatprep.subr.mxu0 0.0
    %2362 = vmatpush1.msra.mxu0 0.0
    %2363 = vmatprep.subr.mxu0 0.0
    %2364 = vmatpush1.msra.mxu0 0.0
    %2365 = vmatprep.subr.mxu0 0.0
    %2366 = vmatpush1.msra.mxu0 0.0
    %2367 = vmatprep.subr.mxu0 0.0
    %2368 = vmatpush1.msra.mxu0 0.0
    %2369 = vmatprep.subr.mxu0 0.0
    %2370 = vmatpush1.msra.mxu0 0.0
    %2371 = vmatprep.subr.mxu0 0.0
    %2372 = vmatpush1.msra.mxu0 0.0
    %2373 = vmatprep.subr.mxu0 0.0
    %2374 = vmatpush1.msra.mxu0 0.0
    %2375 = vmatprep.subr.mxu0 0.0
    %2376 = vmatpush1.msra.mxu0 0.0
    %2377 = vmatprep.subr.mxu0 0.0
    %2378 = vmatpush1.msra.mxu0 0.0
    %2379 = vmatprep.subr.mxu0 0.0
    %2380 = vmatpush1.msra.mxu0 0.0
    %2381 = vmatprep.subr.mxu0 0.0
    %2382 = vmatpush1.msra.mxu0 0.0
    %2383 = vmatprep.subr.mxu0 0.0
    %2384 = vmatpush1.msra.mxu0 0.0
    %2385 = vmatprep.subr.mxu0 0.0
    %2386 = vmatpush1.msra.mxu0 0.0
    %2387 = vmatprep.subr.mxu0 0.0
    %2388 = vmatpush1.msra.mxu0 0.0
    %2389 = vmatprep.subr.mxu0 0.0
    %2390 = vmatpush1.msra.mxu0 0.0
    %2391 = vmatprep.subr.mxu0 0.0
    %2392 = vmatpush1.msra.mxu0 0.0
    %2393 = vmatprep.subr.mxu0 0.0
    %2394 = vmatpush1.msra.mxu0 0.0
    %2395 = vmatprep.subr.mxu0 0.0
    %2396 = vmatpush1.msra.mxu0 0.0
    %2397 = vmatprep.mubr.f32.mxu0 0.0
    %2398 = vmatmul.mubr.f32.gmra.mrb[0].mxu0 %v2328
    %v2399 = vpop.f32.mrb[0].mxu0
    %v2400 = vadd.f32 0.0, %v2399
    %v2401 = vpop.f32.mrb[0].mxu0
    %2402 = vmatprep.mubr.f32.mxu0 0.0
    %2403 = vmatmul.mubr.f32.gmra.mrb[0].mxu0 %v2331
    %v2404 = vpop.f32.mrb[0].mxu0
    %v2405 = vadd.f32 0.0, %v2404
    %v2406 = vpop.f32.mrb[0].mxu0
    %2407 = vdwg.mxu0
    %2410 = vrot.lane.b32.xlu0 %v1992, 8
    %v2411 = vpop.permute.xlu0 %2410
    %2412 = vrot.lane.b32.xlu0 %v1997, 8
    %v2413 = vpop.permute.xlu0 %2412
    %2418 = vrot.lane.b32.xlu0 %v2196, 16
    %v2419 = vpop.permute.xlu0 %2418
    %2420 = vrot.lane.b32.xlu0 %v2201, 16
    %v2421 = vpop.permute.xlu0 %2420
    %2426 = vrot.lane.b32.xlu0 %v2400, 24
    %v2427 = vpop.permute.xlu0 %2426
    %2428 = vrot.lane.b32.xlu0 %v2405, 24
    %v2429 = vpop.permute.xlu0 %2428
    %v2432 = vsel %vm275, %v1788, %v2411
    %v2433 = vsel %vm275, %v1793, %v2413
    %v2434 = vsel %vm53, %v2432, %v2419
    %v2435 = vsel %vm53, %v2433, %v2421
    %v2436 = vsel %vm1112, %v2434, %v2427
    %v2437 = vsel %vm1112, %v2435, %v2429
    %2442 = vrot.lane.b32.xlu0 %v1504, 32
    %v2443 = vpop.permute.xlu0 %2442
    %2444 = vrot.lane.b32.xlu0 %v1505, 32
    %v2445 = vpop.permute.xlu0 %2444
    %2446 = vrot.lane.b32.xlu0 %v1506, 32
    %v2447 = vpop.permute.xlu0 %2446
    %2448 = vrot.lane.b32.xlu0 %v1507, 32
    %v2449 = vpop.permute.xlu0 %2448
    %v2455 = vsel %vm136, %v2436, 0
    %v2458 = vsel %vm136, %v2437, 0
    %2460 = vmatprep.subr.mxu0 0.0
    %2461 = vmatpush1.msra.mxu0 %v2443
    %2462 = vmatprep.subr.mxu0 0.0
    %2463 = vmatpush1.msra.mxu0 %v2445
    %2464 = vmatprep.subr.mxu0 0.0
    %2465 = vmatpush1.msra.mxu0 %v2447
    %2466 = vmatprep.subr.mxu0 0.0
    %2467 = vmatpush1.msra.mxu0 %v2449
    %2468 = vmatprep.subr.mxu0 0.0
    %2469 = vmatpush1.msra.mxu0 0.0
    %2470 = vmatprep.subr.mxu0 0.0
    %2471 = vmatpush1.msra.mxu0 0.0
    %2472 = vmatprep.subr.mxu0 0.0
    %2473 = vmatpush1.msra.mxu0 0.0
    %2474 = vmatprep.subr.mxu0 0.0
    %2475 = vmatpush1.msra.mxu0 0.0
    %2476 = vmatprep.subr.mxu0 0.0
    %2477 = vmatpush1.msra.mxu0 0.0
    %2478 = vmatprep.subr.mxu0 0.0
    %2479 = vmatpush1.msra.mxu0 0.0
    %2480 = vmatprep.subr.mxu0 0.0
    %2481 = vmatpush1.msra.mxu0 0.0
    %2482 = vmatprep.subr.mxu0 0.0
    %2483 = vmatpush1.msra.mxu0 0.0
    %2484 = vmatprep.subr.mxu0 0.0
    %2485 = vmatpush1.msra.mxu0 0.0
    %2486 = vmatprep.subr.mxu0 0.0
    %2487 = vmatpush1.msra.mxu0 0.0
    %2488 = vmatprep.subr.mxu0 0.0
    %2489 = vmatpush1.msra.mxu0 0.0
    %2490 = vmatprep.subr.mxu0 0.0
    %2491 = vmatpush1.msra.mxu0 0.0
    %2492 = vmatprep.subr.mxu0 0.0
    %2493 = vmatpush1.msra.mxu0 0.0
    %2494 = vmatprep.subr.mxu0 0.0
    %2495 = vmatpush1.msra.mxu0 0.0
    %2496 = vmatprep.subr.mxu0 0.0
    %2497 = vmatpush1.msra.mxu0 0.0
    %2498 = vmatprep.subr.mxu0 0.0
    %2499 = vmatpush1.msra.mxu0 0.0
    %2500 = vmatprep.subr.mxu0 0.0
    %2501 = vmatpush1.msra.mxu0 0.0
    %2502 = vmatprep.subr.mxu0 0.0
    %2503 = vmatpush1.msra.mxu0 0.0
    %2504 = vmatprep.subr.mxu0 0.0
    %2505 = vmatpush1.msra.mxu0 0.0
    %2506 = vmatprep.subr.mxu0 0.0
    %2507 = vmatpush1.msra.mxu0 0.0
    %2508 = vmatprep.subr.mxu0 0.0
    %2509 = vmatpush1.msra.mxu0 0.0
    %2510 = vmatprep.subr.mxu0 0.0
    %2511 = vmatpush1.msra.mxu0 0.0
    %2512 = vmatprep.subr.mxu0 0.0
    %2513 = vmatpush1.msra.mxu0 0.0
    %2514 = vmatprep.subr.mxu0 0.0
    %2515 = vmatpush1.msra.mxu0 0.0
    %2516 = vmatprep.subr.mxu0 0.0
    %2517 = vmatpush1.msra.mxu0 0.0
    %2518 = vmatprep.subr.mxu0 0.0
    %2519 = vmatpush1.msra.mxu0 0.0
    %2520 = vmatprep.subr.mxu0 0.0
    %2521 = vmatpush1.msra.mxu0 0.0
    %2522 = vmatprep.subr.mxu0 0.0
    %2523 = vmatpush1.msra.mxu0 0.0
    %2524 = vmatprep.mubr.f32.mxu0 0.0
    %2525 = vmatmul.mubr.f32.gmra.mrb[0].mxu0 %v2455
    %v2526 = vpop.f32.mrb[0].mxu0
    %v2527 = vadd.f32 0.0, %v2526
    %v2528 = vpop.f32.mrb[0].mxu0
    %2529 = vmatprep.mubr.f32.mxu0 0.0
    %2530 = vmatmul.mubr.f32.gmra.mrb[0].mxu0 %v2458
    %v2531 = vpop.f32.mrb[0].mxu0
    %v2532 = vadd.f32 0.0, %v2531
    %v2533 = vpop.f32.mrb[0].mxu0
    %2534 = vdwg.mxu0
    %v2535 = vadd.f32 %v1459, %v2527
    %v2536 = vadd.f32 %v1460, %v2532
    %2538 = vrot.lane.b32.xlu0 %v1512, 32
    %v2539 = vpop.permute.xlu0 %2538
    %v2541 = vadd.f32 %v2535, %v2539
    %v2542 = vadd.f32 %v2536, %v2539
    %v2543 = vld [vmem:[%s6 + $0x7] sm:$0x1]
    %v2544 = vsel %vm136, %v2541, 0.0
    %2545 = vadd.xlane.f32.xlu0 %v2544
    %v2546 = vpop.xlane.xlu0 %2545
    %v2547 = vsel %vm136, %v2542, 0.0
    %2548 = vadd.xlane.f32.xlu0 %v2547
    %v2549 = vpop.xlane.xlu0 %2548
    %v2550 = vmul.f32 %v2546, %v143
    %v2551 = vmul.f32 %v2549, %v143
    %v2552 = vsub.f32 %v2541, %v2550
    %v2553 = vsub.f32 %v2542, %v2551
    %v2554 = vmul.f32 %v2552, %v2552
    %v2555 = vmul.f32 %v2553, %v2553
    %v2556 = vsel %vm136, %v2554, 0.0
    %2557 = vadd.xlane.f32.xlu0 %v2556
    %v2558 = vpop.xlane.xlu0 %2557
    %v2559 = vsel %vm136, %v2555, 0.0
    %2560 = vadd.xlane.f32.xlu0 %v2559
    %v2561 = vpop.xlane.xlu0 %2560
    %v2562 = vmul.f32 %v2558, %v143
    %v2563 = vmul.f32 %v2561, %v143
    %v2564 = vadd.f32 %v2562, 1e-05
    %v2565 = vadd.f32 %v2563, 1e-05
    %v2566 = vrsqrt.pop %v2564
    %v2567 = vrsqrt.pop %v2565
    %v2568 = vmul.f32 %v2552, %v2566
    %v2569 = vmul.f32 %v2553, %v2567
    %2570 = vrot.lane.b32.xlu0 %v1491, 32
    %v2571 = vpop.permute.xlu0 %2570
    %v2573 = vmul.f32 %v2568, %v2571
    %v2574 = vmul.f32 %v2569, %v2571
    %v2575 = vlaneseq
    %v2576 = vshrl.u32 %v2575, 7
    %v2577 = vsub.s32 0, %v2576
    %v2578 = vrot.slane %v2543, %v2577
    %v2579 = vadd.f32 %v2573, %v2578
    %v2580 = vadd.f32 %v2574, %v2578
    %v2581 = vld [vmem:[%s1503 + $0x8] sm:$0xff]
    %v2582 = vld [vmem:[%s1503 + $0x18] sm:$0xff]
    %v2583 = vld [vmem:[%s1503 + $0x28] sm:$0xff]
    %v2584 = vld [vmem:[%s1503 + $0x38] sm:$0xff]
    %v2585 = vld [vmem:[%s6 + $0x3] sm:$0x1]
    %v2586 = vlaneseq
    %v2587 = vshrl.u32 %v2586, 7
    %v2588 = vsub.s32 0, %v2587
    %v2589 = vrot.slane %v2585, %v2588
    %v2591 = vsel %vm136, %v2579, 0
    %v2594 = vsel %vm136, %v2580, 0
    %2596 = vmatprep.subr.mxu0 0.0
    %2597 = vmatpush1.msra.mxu0 %v2581
    %2598 = vmatprep.subr.mxu0 0.0
    %2599 = vmatpush1.msra.mxu0 %v2582
    %2600 = vmatprep.subr.mxu0 0.0
    %2601 = vmatpush1.msra.mxu0 %v2583
    %2602 = vmatprep.subr.mxu0 0.0
    %2603 = vmatpush1.msra.mxu0 %v2584
    %2604 = vmatprep.subr.mxu0 0.0
    %2605 = vmatpush1.msra.mxu0 0.0
    %2606 = vmatprep.subr.mxu0 0.0
    %2607 = vmatpush1.msra.mxu0 0.0
    %2608 = vmatprep.subr.mxu0 0.0
    %2609 = vmatpush1.msra.mxu0 0.0
    %2610 = vmatprep.subr.mxu0 0.0
    %2611 = vmatpush1.msra.mxu0 0.0
    %2612 = vmatprep.subr.mxu0 0.0
    %2613 = vmatpush1.msra.mxu0 0.0
    %2614 = vmatprep.subr.mxu0 0.0
    %2615 = vmatpush1.msra.mxu0 0.0
    %2616 = vmatprep.subr.mxu0 0.0
    %2617 = vmatpush1.msra.mxu0 0.0
    %2618 = vmatprep.subr.mxu0 0.0
    %2619 = vmatpush1.msra.mxu0 0.0
    %2620 = vmatprep.subr.mxu0 0.0
    %2621 = vmatpush1.msra.mxu0 0.0
    %2622 = vmatprep.subr.mxu0 0.0
    %2623 = vmatpush1.msra.mxu0 0.0
    %2624 = vmatprep.subr.mxu0 0.0
    %2625 = vmatpush1.msra.mxu0 0.0
    %2626 = vmatprep.subr.mxu0 0.0
    %2627 = vmatpush1.msra.mxu0 0.0
    %2628 = vmatprep.subr.mxu0 0.0
    %2629 = vmatpush1.msra.mxu0 0.0
    %2630 = vmatprep.subr.mxu0 0.0
    %2631 = vmatpush1.msra.mxu0 0.0
    %2632 = vmatprep.subr.mxu0 0.0
    %2633 = vmatpush1.msra.mxu0 0.0
    %2634 = vmatprep.subr.mxu0 0.0
    %2635 = vmatpush1.msra.mxu0 0.0
    %2636 = vmatprep.subr.mxu0 0.0
    %2637 = vmatpush1.msra.mxu0 0.0
    %2638 = vmatprep.subr.mxu0 0.0
    %2639 = vmatpush1.msra.mxu0 0.0
    %2640 = vmatprep.subr.mxu0 0.0
    %2641 = vmatpush1.msra.mxu0 0.0
    %2642 = vmatprep.subr.mxu0 0.0
    %2643 = vmatpush1.msra.mxu0 0.0
    %2644 = vmatprep.subr.mxu0 0.0
    %2645 = vmatpush1.msra.mxu0 0.0
    %2646 = vmatprep.subr.mxu0 0.0
    %2647 = vmatpush1.msra.mxu0 0.0
    %2648 = vmatprep.subr.mxu0 0.0
    %2649 = vmatpush1.msra.mxu0 0.0
    %2650 = vmatprep.subr.mxu0 0.0
    %2651 = vmatpush1.msra.mxu0 0.0
    %2652 = vmatprep.subr.mxu0 0.0
    %2653 = vmatpush1.msra.mxu0 0.0
    %2654 = vmatprep.subr.mxu0 0.0
    %2655 = vmatpush1.msra.mxu0 0.0
    %2656 = vmatprep.subr.mxu0 0.0
    %2657 = vmatpush1.msra.mxu0 0.0
    %2658 = vmatprep.subr.mxu0 0.0
    %2659 = vmatpush1.msra.mxu0 0.0
    %2660 = vmatprep.mubr.f32.mxu0 0.0
    %2661 = vmatmul.mubr.f32.gmra.mrb[0].mxu0 %v2591
    %v2662 = vpop.f32.mrb[0].mxu0
    %v2663 = vadd.f32 %v2589, %v2662
    %v2664 = vpop.f32.mrb[0].mxu0
    %2665 = vmatprep.mubr.f32.mxu0 0.0
    %2666 = vmatmul.mubr.f32.gmra.mrb[0].mxu0 %v2594
    %v2667 = vpop.f32.mrb[0].mxu0
    %v2668 = vadd.f32 %v2589, %v2667
    %v2669 = vpop.f32.mrb[0].mxu0
    %2670 = vdwg.mxu0
    %v2671 = vmul.f32 %v2663, 0.5
    %v2672 = vmul.f32 %v2668, 0.5
    %v2673 = vmul.f32 %v2663, 0.044715
    %v2674 = vmul.f32 %v2668, 0.044715
    %v2675 = vmul.f32 %v2673, %v2663
    %v2676 = vmul.f32 %v2674, %v2668
    %v2677 = vmul.f32 %v2675, %v2663
    %v2678 = vmul.f32 %v2676, %v2668
    %v2679 = vadd.f32 %v2663, %v2677
    %v2680 = vadd.f32 %v2668, %v2678
    %v2681 = vmul.f32 %v2679, 0.7978846
    %v2682 = vmul.f32 %v2680, 0.7978846
    %v2683 = vtanh.pop %v2681
    %v2684 = vtanh.pop %v2682
    %v2685 = vadd.f32 %v2683, 1.0
    %v2686 = vadd.f32 %v2684, 1.0
    %v2687 = vmul.f32 %v2671, %v2685
    %v2688 = vmul.f32 %v2672, %v2686
    %s2689 = scalar_lea.vmem %s5, 128
    %v2690 = vld [vmem:[%s2689] sm:$0xff]
    %v2691 = vld [vmem:[%s2689 + $0x8] sm:$0xff]
    %v2692 = vld [vmem:[%s2689 + $0x10] sm:$0xff]
    %v2693 = vld [vmem:[%s2689 + $0x18] sm:$0xff]
    %v2694 = vld [vmem:[%s2689 + $0x20] sm:$0xff]
    %v2695 = vld [vmem:[%s2689 + $0x28] sm:$0xff]
    %v2696 = vld [vmem:[%s2689 + $0x30] sm:$0xff]
    %v2697 = vld [vmem:[%s2689 + $0x38] sm:$0xff]
    %v2698 = vld [vmem:[%s2689 + $0x40] sm:$0xff]
    %v2699 = vld [vmem:[%s2689 + $0x48] sm:$0xff]
    %v2700 = vld [vmem:[%s2689 + $0x50] sm:$0xff]
    %v2701 = vld [vmem:[%s2689 + $0x58] sm:$0xff]
    %v2702 = vld [vmem:[%s2689 + $0x60] sm:$0xff]
    %v2703 = vld [vmem:[%s2689 + $0x68] sm:$0xff]
    %v2704 = vld [vmem:[%s2689 + $0x70] sm:$0xff]
    %v2705 = vld [vmem:[%s2689 + $0x78] sm:$0xff]
    %2706 = vmatprep.subr.mxu0 0.0
    %2707 = vmatpush1.msra.mxu0 %v2690
    %2708 = vmatprep.subr.mxu0 0.0
    %2709 = vmatpush1.msra.mxu0 %v2691
    %2710 = vmatprep.subr.mxu0 0.0
    %2711 = vmatpush1.msra.mxu0 %v2692
    %2712 = vmatprep.subr.mxu0 0.0
    %2713 = vmatpush1.msra.mxu0 %v2693
    %2714 = vmatprep.subr.mxu0 0.0
    %2715 = vmatpush1.msra.mxu0 %v2694
    %2716 = vmatprep.subr.mxu0 0.0
    %2717 = vmatpush1.msra.mxu0 %v2695
    %2718 = vmatprep.subr.mxu0 0.0
    %2719 = vmatpush1.msra.mxu0 %v2696
    %2720 = vmatprep.subr.mxu0 0.0
    %2721 = vmatpush1.msra.mxu0 %v2697
    %2722 = vmatprep.subr.mxu0 0.0
    %2723 = vmatpush1.msra.mxu0 %v2698
    %2724 = vmatprep.subr.mxu0 0.0
    %2725 = vmatpush1.msra.mxu0 %v2699
    %2726 = vmatprep.subr.mxu0 0.0
    %2727 = vmatpush1.msra.mxu0 %v2700
    %2728 = vmatprep.subr.mxu0 0.0
    %2729 = vmatpush1.msra.mxu0 %v2701
    %2730 = vmatprep.subr.mxu0 0.0
    %2731 = vmatpush1.msra.mxu0 %v2702
    %2732 = vmatprep.subr.mxu0 0.0
    %2733 = vmatpush1.msra.mxu0 %v2703
    %2734 = vmatprep.subr.mxu0 0.0
    %2735 = vmatpush1.msra.mxu0 %v2704
    %2736 = vmatprep.subr.mxu0 0.0
    %2737 = vmatpush1.msra.mxu0 %v2705
    %2738 = vmatprep.subr.mxu0 0.0
    %2739 = vmatpush1.msra.mxu0 0.0
    %2740 = vmatprep.subr.mxu0 0.0
    %2741 = vmatpush1.msra.mxu0 0.0
    %2742 = vmatprep.subr.mxu0 0.0
    %2743 = vmatpush1.msra.mxu0 0.0
    %2744 = vmatprep.subr.mxu0 0.0
    %2745 = vmatpush1.msra.mxu0 0.0
    %2746 = vmatprep.subr.mxu0 0.0
    %2747 = vmatpush1.msra.mxu0 0.0
    %2748 = vmatprep.subr.mxu0 0.0
    %2749 = vmatpush1.msra.mxu0 0.0
    %2750 = vmatprep.subr.mxu0 0.0
    %2751 = vmatpush1.msra.mxu0 0.0
    %2752 = vmatprep.subr.mxu0 0.0
    %2753 = vmatpush1.msra.mxu0 0.0
    %2754 = vmatprep.subr.mxu0 0.0
    %2755 = vmatpush1.msra.mxu0 0.0
    %2756 = vmatprep.subr.mxu0 0.0
    %2757 = vmatpush1.msra.mxu0 0.0
    %2758 = vmatprep.subr.mxu0 0.0
    %2759 = vmatpush1.msra.mxu0 0.0
    %2760 = vmatprep.subr.mxu0 0.0
    %2761 = vmatpush1.msra.mxu0 0.0
    %2762 = vmatprep.subr.mxu0 0.0
    %2763 = vmatpush1.msra.mxu0 0.0
    %2764 = vmatprep.subr.mxu0 0.0
    %2765 = vmatpush1.msra.mxu0 0.0
    %2766 = vmatprep.subr.mxu0 0.0
    %2767 = vmatpush1.msra.mxu0 0.0
    %2768 = vmatprep.subr.mxu0 0.0
    %2769 = vmatpush1.msra.mxu0 0.0
    %2770 = vmatprep.mubr.f32.mxu0 0.0
    %2771 = vmatmul.mubr.f32.gmra.mrb[0].mxu0 %v2687
    %v2772 = vpop.f32.mrb[0].mxu0
    %v2773 = vadd.f32 0.0, %v2772
    %v2774 = vpop.f32.mrb[0].mxu0
    %2775 = vmatprep.mubr.f32.mxu0 0.0
    %2776 = vmatmul.mubr.f32.gmra.mrb[0].mxu0 %v2688
    %v2777 = vpop.f32.mrb[0].mxu0
    %v2778 = vadd.f32 0.0, %v2777
    %v2779 = vpop.f32.mrb[0].mxu0
    %2780 = vdwg.mxu0
    %v2781 = vadd.f32 %v2541, %v2773
    %v2782 = vadd.f32 %v2542, %v2778
    %v2783 = vadd.f32 %v2781, %v1491
    %v2784 = vadd.f32 %v2782, %v1491
    %v2785 = vsel %vm136, %v2783, 0.0
    %2786 = vadd.xlane.f32.xlu0 %v2785
    %v2787 = vpop.xlane.xlu0 %2786
    %v2788 = vsel %vm136, %v2784, 0.0
    %2789 = vadd.xlane.f32.xlu0 %v2788
    %v2790 = vpop.xlane.xlu0 %2789
    %v2791 = vmul.f32 %v2787, %v143
    %v2792 = vmul.f32 %v2790, %v143
    %v2793 = vsub.f32 %v2783, %v2791
    %v2794 = vsub.f32 %v2784, %v2792
    %v2795 = vmul.f32 %v2793, %v2793
    %v2796 = vmul.f32 %v2794, %v2794
    %v2797 = vsel %vm136, %v2795, 0.0
    %2798 = vadd.xlane.f32.xlu0 %v2797
    %v2799 = vpop.xlane.xlu0 %2798
    %v2800 = vsel %vm136, %v2796, 0.0
    %2801 = vadd.xlane.f32.xlu0 %v2800
    %v2802 = vpop.xlane.xlu0 %2801
    %v2803 = vmul.f32 %v2799, %v143
    %v2804 = vmul.f32 %v2802, %v143
    %v2805 = vadd.f32 %v2803, 1e-05
    %v2806 = vadd.f32 %v2804, 1e-05
    %v2807 = vrsqrt.pop %v2805
    %v2808 = vrsqrt.pop %v2806
    %v2809 = vmul.f32 %v2793, %v2807
    %v2810 = vmul.f32 %v2794, %v2808
    %2811 = vrot.lane.b32.xlu0 %v39, 64
    %v2812 = vpop.permute.xlu0 %2811
    %v2814 = vmul.f32 %v2809, %v2812
    %v2815 = vmul.f32 %v2810, %v2812
    %2816 = vrot.lane.b32.xlu0 %v39, 32
    %v2817 = vpop.permute.xlu0 %2816
    %v2819 = vadd.f32 %v2814, %v2817
    %v2820 = vadd.f32 %v2815, %v2817
    %v2821 = vld [vmem:[%s3] sm:$0xff]
    %v2822 = vld [vmem:[%s3 + $0x8] sm:$0xff]
    %v2823 = vld [vmem:[%s3 + $0x10] sm:$0xff]
    %v2824 = vld [vmem:[%s3 + $0x18] sm:$0xff]
    %v2825 = vld [vmem:[%s7 + $0x1] sm:$0x1]
    %v2827 = vlaneseq
    %v2828 = vshrl.u32 %v2827, 7
    %v2829 = vsub.s32 0, %v2828
    %v2830 = vrot.slane %v2825, %v2829
    %v2833 = vsel %vm136, %v2819, 0
    %v2836 = vsel %vm136, %v2820, 0
    %2838 = vmatprep.subr.mxu0 0.0
    %2839 = vmatpush1.msra.mxu0 %v2821
    %2840 = vmatprep.subr.mxu0 0.0
    %2841 = vmatpush1.msra.mxu0 %v2822
    %2842 = vmatprep.subr.mxu0 0.0
    %2843 = vmatpush1.msra.mxu0 %v2823
    %2844 = vmatprep.subr.mxu0 0.0
    %2845 = vmatpush1.msra.mxu0 %v2824
    %2846 = vmatprep.subr.mxu0 0.0
    %2847 = vmatpush1.msra.mxu0 0.0
    %2848 = vmatprep.subr.mxu0 0.0
    %2849 = vmatpush1.msra.mxu0 0.0
    %2850 = vmatprep.subr.mxu0 0.0
    %2851 = vmatpush1.msra.mxu0 0.0
    %2852 = vmatprep.subr.mxu0 0.0
    %2853 = vmatpush1.msra.mxu0 0.0
    %2854 = vmatprep.subr.mxu0 0.0
    %2855 = vmatpush1.msra.mxu0 0.0
    %2856 = vmatprep.subr.mxu0 0.0
    %2857 = vmatpush1.msra.mxu0 0.0
    %2858 = vmatprep.subr.mxu0 0.0
    %2859 = vmatpush1.msra.mxu0 0.0
    %2860 = vmatprep.subr.mxu0 0.0
    %2861 = vmatpush1.msra.mxu0 0.0
    %2862 = vmatprep.subr.mxu0 0.0
    %2863 = vmatpush1.msra.mxu0 0.0
    %2864 = vmatprep.subr.mxu0 0.0
    %2865 = vmatpush1.msra.mxu0 0.0
    %2866 = vmatprep.subr.mxu0 0.0
    %2867 = vmatpush1.msra.mxu0 0.0
    %2868 = vmatprep.subr.mxu0 0.0
    %2869 = vmatpush1.msra.mxu0 0.0
    %2870 = vmatprep.subr.mxu0 0.0
    %2871 = vmatpush1.msra.mxu0 0.0
    %2872 = vmatprep.subr.mxu0 0.0
    %2873 = vmatpush1.msra.mxu0 0.0
    %2874 = vmatprep.subr.mxu0 0.0
    %2875 = vmatpush1.msra.mxu0 0.0
    %2876 = vmatprep.subr.mxu0 0.0
    %2877 = vmatpush1.msra.mxu0 0.0
    %2878 = vmatprep.subr.mxu0 0.0
    %2879 = vmatpush1.msra.mxu0 0.0
    %2880 = vmatprep.subr.mxu0 0.0
    %2881 = vmatpush1.msra.mxu0 0.0
    %2882 = vmatprep.subr.mxu0 0.0
    %2883 = vmatpush1.msra.mxu0 0.0
    %2884 = vmatprep.subr.mxu0 0.0
    %2885 = vmatpush1.msra.mxu0 0.0
    %2886 = vmatprep.subr.mxu0 0.0
    %2887 = vmatpush1.msra.mxu0 0.0
    %2888 = vmatprep.subr.mxu0 0.0
    %2889 = vmatpush1.msra.mxu0 0.0
    %2890 = vmatprep.subr.mxu0 0.0
    %2891 = vmatpush1.msra.mxu0 0.0
    %2892 = vmatprep.subr.mxu0 0.0
    %2893 = vmatpush1.msra.mxu0 0.0
    %2894 = vmatprep.subr.mxu0 0.0
    %2895 = vmatpush1.msra.mxu0 0.0
    %2896 = vmatprep.subr.mxu0 0.0
    %2897 = vmatpush1.msra.mxu0 0.0
    %2898 = vmatprep.subr.mxu0 0.0
    %2899 = vmatpush1.msra.mxu0 0.0
    %2900 = vmatprep.subr.mxu0 0.0
    %2901 = vmatpush1.msra.mxu0 0.0
    %2902 = vmatprep.mubr.f32.mxu0 0.0
    %2903 = vmatmul.mubr.f32.gmra.mrb[0].mxu0 %v2833
    %v2904 = vpop.f32.mrb[0].mxu0
    %v2905 = vadd.f32 %v2830, %v2904
    %v2906 = vpop.f32.mrb[0].mxu0
    %2907 = vmatprep.mubr.f32.mxu0 0.0
    %2908 = vmatmul.mubr.f32.gmra.mrb[0].mxu0 %v2836
    %v2909 = vpop.f32.mrb[0].mxu0
    %v2910 = vadd.f32 %v2830, %v2909
    %v2911 = vpop.f32.mrb[0].mxu0
    %2912 = vdwg.mxu0
    %2913 = vst.msk [vmem:[#allocation2] sm:$0xff] %vm1112, %v2905
    %2914 = vst.msk [vmem:[#allocation2 + $0x8] sm:$0xff] %vm1112, %v2910
    // Predicated region
    $region34: #{tpu_custom_call.1} parent=1 // pred_check
      _
    $region35: #{tpu_custom_call.1} parent=1 // pred_check_branch
      %2916 = sbr.rel (0) target = $region37
    $region36: #{tpu_custom_call.1} parent=1 // pred_region
      %s2918 = ssub.s32 256, 256
      %2919 = vsyncadd [#allocation3], %s2918
      %s2920 = sshll.u32 [#allocation2], 4
      %s2921 = int_to_ptr.vmem [resolvable:$true] %s2920
      %2926 = dma.vmem_to_hbm [thread:$0]  %s2921, 256, %s8, [#allocation3], 128, 128, 8
    $region37: #{tpu_custom_call.1} parent=1 // pred_fallthru
      _
    // Predicated region
    $region38: #{tpu_custom_call.1} parent=1 // pred_check
      _
    $region39: #{tpu_custom_call.1} parent=1 // pred_check_branch
      %2928 = sbr.rel (0) target = $region41
    $region40: #{tpu_custom_call.1} parent=1 // pred_region
      %2929 = dma.done [#allocation3], 256
    $region41: #{tpu_custom_call.1} parent=1 // pred_fallthru
      _
    %2930 = vsyncpa [#allocation3], 1

</llo_original>
